<compile_context>
chip_gen: v7x
topology: tpu7x:2x2x1
jax: 0.10.0
libtpu: 0.0.40
codegen_flags: <defaults>
</compile_context>

<pallas_src>
import numpy as np

import jax
import jax.numpy as jnp
from jax.experimental import pallas as pl
from jax.experimental.pallas import tpu as pltpu  # noqa: F401  (TPU backend)


# ----------------------------------------------------------------------------
# Model dimensions
# ----------------------------------------------------------------------------
B = 2
IMG = 16
IN_CH = 4
LAT = 8
C1, C2 = 8, 16                 # encoder channels
H1 = IMG // 2                  # 8
H2 = IMG // 4                  # 4
FLAT = C2 * H2 * H2            # 256
LAT_FLAT = 4 * LAT             # 32
LAT2 = 2 * LAT_FLAT            # 64  (mu | log_var fused head width)

# Internal activation layout everywhere: 2-D matrices
#   rows  = (batch, image_row)         -> b*H rows
#   lanes = (image_col, channel)       -> W*C lanes  (always 64 here)


# ----------------------------------------------------------------------------
# Fused Pallas kernel: whole forward pass, single invocation, everything in VMEM
# ----------------------------------------------------------------------------
def _vae_fused_kernel(x_ref, noise_ref, swp_ref,
                      s1_ref, w1_ref, b1_ref,
                      s2_ref, w2_ref, b2_ref,
                      sf_ref, wml_ref, bml_ref,
                      p0_ref, w0_ref, b0_ref,
                      s3_ref, w3_ref, b3_ref,
                      s4_ref, w4_ref, b4_ref,
                      out_ref, mulv_ref):
    f32 = jnp.float32
    bf16 = jnp.bfloat16

    def conv_stage(a, s_ref, w_ref, b_ref, act):
        # 3x3 conv (stride / padding / upsample already folded into s_ref / w_ref):
        #   out = act( sum_{di=0..2} (S_di @ a) @ Wc_di + bias )
        a16 = a.astype(bf16)
        acc = None
        for t in range(3):
            rows = jnp.dot(s_ref[t], a16, preferred_element_type=f32)
            part = jnp.dot(rows.astype(bf16), w_ref[t], preferred_element_type=f32)
            acc = part if acc is None else acc + part
        y = acc + b_ref[...]
        if act == "relu":
            y = jnp.maximum(y, 0.0)
        else:  # sigmoid
            y = jax.nn.sigmoid(y)
        return y

    # ----- encoder -----
    x = x_ref[...]                                              # (B*16, 64)
    a1 = conv_stage(x, s1_ref, w1_ref, b1_ref, "relu")          # (B*8, 64)
    a2 = conv_stage(a1, s2_ref, w2_ref, b2_ref, "relu")         # (B*4, 64)

    # Fused latent heads mu|log_var (flatten folded into 4 row-selected GEMMs).
    a2_16 = a2.astype(bf16)
    mlv = None
    for h in range(H2):
        sel = jnp.dot(sf_ref[h], a2_16, preferred_element_type=f32)        # (B, 64)
        part = jnp.dot(sel.astype(bf16), wml_ref[h], preferred_element_type=f32)
        mlv = part if mlv is None else mlv + part
    mlv = mlv + bml_ref[...]                                    # (B, 64) = [mu | log_var]
    mulv_ref[...] = mlv

    # Reparameterization epilogue: z = mu + exp(0.5 * log_var) * noise.
    # Bring log_var to the front lanes with an exact f32 0/1 permutation matmul
    # (avoids any in-kernel lane slicing / rolling).  noise is zero-padded on
    # the upper 32 lanes, and the decoder-linear weights have zero rows there,
    # so the upper lanes of z64 never influence the result.
    lv_front = jnp.dot(mlv, swp_ref[...], preferred_element_type=f32)       # (B, 64)
    sigma = jnp.exp(0.5 * lv_front)
    z64 = mlv + sigma * noise_ref[...]                          # (B, 64); lanes>=32 don't-care

    # ----- decoder -----
    # Linear(32 -> 256) + ReLU, scattered directly into the (B*4, 64) layout.
    z16 = z64.astype(bf16)
    d = None
    for h in range(H2):
        zz = jnp.dot(z16, w0_ref[h], preferred_element_type=f32)           # (B, 64)
        part = jnp.dot(p0_ref[h], zz.astype(bf16), preferred_element_type=f32)  # (B*4, 64)
        d = part if d is None else d + part
    d = jnp.maximum(d + b0_ref[...], 0.0)                       # (B*4, 64)

    # upsample x2 + conv(16->8) + ReLU   (upsample folded into S/Wc)
    a3 = conv_stage(d, s3_ref, w3_ref, b3_ref, "relu")          # (B*8, 64)
    # upsample x2 + conv(8->4) + Sigmoid
    out_ref[...] = conv_stage(a3, s4_ref, w4_ref, b4_ref, "sigmoid")       # (B*16, 64)


# ----------------------------------------------------------------------------
# Parameter preparation: fold im2col / padding / stride / upsample into weights
# (runs once, outside the jitted forward)
# ----------------------------------------------------------------------------
def _row_selectors(b, h_src, oh, stride=None, upsample=False):
    # S_di[(n,oh), (n,row)] = 1 where row is the vertical tap di for output row oh.
    s = np.zeros((3, b * oh, b * h_src), np.float32)
    for n in range(b):
        for o in range(oh):
            for di in range(3):
                if upsample:
                    i = o + di - 1
                    if 0 <= i < 2 * h_src:
                        s[di, n * oh + o, n * h_src + i // 2] = 1.0
                else:
                    i = stride * o + di - 1
                    if 0 <= i < h_src:
                        s[di, n * oh + o, n * h_src + i] = 1.0
    return s


def _col_selectors(w_src, ow, stride=None, upsample=False):
    # Sel[dj, w_src, ow] = 1 if horizontal tap dj of output col ow reads source col w_src.
    sel = np.zeros((3, w_src, ow), np.float32)
    for o in range(ow):
        for dj in range(3):
            if upsample:
                j = o + dj - 1
                if 0 <= j < 2 * w_src:
                    sel[dj, j // 2, o] += 1.0
            else:
                j = stride * o + dj - 1
                if 0 <= j < w_src:
                    sel[dj, j, o] += 1.0
    return sel


def _conv_weight_pack(w_raw, cin, cout, w_src, ow, stride=None, upsample=False):
    # w_raw: (9*cin, cout) in (kh, kw, cin) patch order  ->  (3, w_src*cin, ow*cout)
    w4 = w_raw.reshape(3, 3, cin, cout)
    sel = jnp.asarray(_col_selectors(w_src, ow, stride=stride, upsample=upsample))
    wc = jnp.einsum("jwo,djck->dwcok", sel, w4)        # (3, w_src, cin, ow, cout)
    return wc.reshape(3, w_src * cin, ow * cout)


def prepare_params(p, b=B):
    bf = jnp.bfloat16
    f32 = jnp.float32
    a = {}
    # encoder conv1: 16x16x4 -> 8x8x8, stride 2, pad 1
    a["s1"] = jnp.asarray(_row_selectors(b, IMG, H1, stride=2), bf)
    a["w1"] = _conv_weight_pack(p["enc_w1"], IN_CH, C1, IMG, H1, stride=2).astype(bf)
    a["b1"] = jnp.tile(p["enc_b1"], H1).reshape(1, H1 * C1).astype(f32)
    # encoder conv2: 8x8x8 -> 4x4x16, stride 2, pad 1
    a["s2"] = jnp.asarray(_row_selectors(b, H1, H2, stride=2), bf)
    a["w2"] = _conv_weight_pack(p["enc_w2"], C1, C2, H1, H2, stride=2).astype(bf)
    a["b2"] = jnp.tile(p["enc_b2"], H2).reshape(1, H2 * C2).astype(f32)
    # fused latent heads (mu | log_var), flatten folded into per-row blocks
    sf = np.zeros((H2, b, b * H2), np.float32)
    for h in range(H2):
        for n in range(b):
            sf[h, n, n * H2 + h] = 1.0
    a["sf"] = jnp.asarray(sf, bf)
    wml = jnp.concatenate([p["w_mu"], p["w_lv"]], axis=1)           # (256, 64)
    a["wml"] = wml.reshape(H2, H2 * C2, LAT2).astype(bf)            # (4, 64, 64)
    a["bml"] = jnp.concatenate([p["b_mu"], p["b_lv"]]).reshape(1, LAT2).astype(f32)
    # 0/1 lane-swap permutation: output lane k reads input lane (k+32) % 64
    swp = np.zeros((LAT2, LAT2), np.float32)
    for j in range(LAT2):
        swp[j, (j + LAT_FLAT) % LAT2] = 1.0
    a["swp"] = jnp.asarray(swp, f32)
    # decoder linear 32 -> 256, scattered into the (b*4, 64) layout; rows 32..63
    # are zero so the don't-care upper lanes of z64 never contribute.
    p0 = np.zeros((H2, b * H2, b), np.float32)
    for h in range(H2):
        for n in range(b):
            p0[h, n * H2 + h, n] = 1.0
    a["p0"] = jnp.asarray(p0, bf)
    w0 = p["dec_w0"].reshape(LAT_FLAT, H2, H2 * C2).transpose(1, 0, 2)   # (4, 32, 64)
    a["w0"] = jnp.pad(w0, ((0, 0), (0, LAT_FLAT), (0, 0))).astype(bf)    # (4, 64, 64)
    a["b0"] = jnp.tile(p["dec_b0"].reshape(H2, H2 * C2), (b, 1)).astype(f32)
    # decoder conv1: (upsample x2 folded) 4x4x16 -> 8x8x8
    a["s3"] = jnp.asarray(_row_selectors(b, H2, H1, upsample=True), bf)
    a["w3"] = _conv_weight_pack(p["dec_w1"], C2, C1, H2, H1, upsample=True).astype(bf)
    a["b3"] = jnp.tile(p["dec_b1"], H1).reshape(1, H1 * C1).astype(f32)
    # decoder conv2: (upsample x2 folded) 8x8x8 -> 16x16x4
    a["s4"] = jnp.asarray(_row_selectors(b, H1, IMG, upsample=True), bf)
    a["w4"] = _conv_weight_pack(p["dec_w2"], C1, IN_CH, H1, IMG, upsample=True).astype(bf)
    a["b4"] = jnp.tile(p["dec_b2"], IMG).reshape(1, IMG * IN_CH).astype(f32)
    return a


# ----------------------------------------------------------------------------
# Raw parameters (deterministic synthetic init)
# ----------------------------------------------------------------------------
def init_params(key):
    def nrm(k, shape, scale):
        return scale * jax.random.normal(k, shape, dtype=jnp.float32)

    ks = jax.random.split(key, 16)
    p = {}
    # conv weights in im2col layout: (k*k*c_in, c_out), patch order (kh, kw, c_in)
    p["enc_w1"] = nrm(ks[0], (9 * IN_CH, C1), 0.1)
    p["enc_b1"] = nrm(ks[1], (C1,), 0.01)
    p["enc_w2"] = nrm(ks[2], (9 * C1, C2), 0.1)
    p["enc_b2"] = nrm(ks[3], (C2,), 0.01)
    p["w_mu"] = nrm(ks[4], (FLAT, LAT_FLAT), 0.05)
    p["b_mu"] = nrm(ks[5], (LAT_FLAT,), 0.01)
    p["w_lv"] = nrm(ks[6], (FLAT, LAT_FLAT), 0.05)
    p["b_lv"] = nrm(ks[7], (LAT_FLAT,), 0.01)
    p["dec_w0"] = nrm(ks[8], (LAT_FLAT, FLAT), 0.05)
    p["dec_b0"] = nrm(ks[9], (FLAT,), 0.01)
    p["dec_w1"] = nrm(ks[10], (9 * C2, C1), 0.1)
    p["dec_b1"] = nrm(ks[11], (C1,), 0.01)
    p["dec_w2"] = nrm(ks[12], (9 * C1, IN_CH), 0.1)
    p["dec_b2"] = nrm(ks[13], (IN_CH,), 0.01)
    return p


# ----------------------------------------------------------------------------
# Forward: one pallas_call (+ cheap boundary layout transforms)
# ----------------------------------------------------------------------------
def vae_forward(kargs, x_nchw, noise):
    b = x_nchw.shape[0]
    # NCHW -> internal (b*H, W*C) layout
    x2d = jnp.transpose(x_nchw, (0, 2, 3, 1)).astype(jnp.float32)
    x2d = x2d.reshape(b * IMG, IMG * IN_CH)
    noise2d = noise.reshape(b, LAT_FLAT).astype(jnp.float32)
    noise2d = jnp.pad(noise2d, ((0, 0), (0, LAT_FLAT)))          # (b, 64), upper half zero

    # No grid / no BlockSpecs: single invocation, every operand is a whole-array
    # VMEM-resident block (total footprint << 1 MiB on all TPU generations).
    out2d, mulv = pl.pallas_call(
        _vae_fused_kernel,
        out_shape=(
            jax.ShapeDtypeStruct((b * IMG, IMG * IN_CH), jnp.float32),
            jax.ShapeDtypeStruct((b, LAT2), jnp.float32),
        ),
    )(x2d, noise2d, kargs["swp"],
      kargs["s1"], kargs["w1"], kargs["b1"],
      kargs["s2"], kargs["w2"], kargs["b2"],
      kargs["sf"], kargs["wml"], kargs["bml"],
      kargs["p0"], kargs["w0"], kargs["b0"],
      kargs["s3"], kargs["w3"], kargs["b3"],
      kargs["s4"], kargs["w4"], kargs["b4"])

    recon = jnp.transpose(out2d.reshape(b, IMG, IMG, IN_CH), (0, 3, 1, 2))  # NCHW
    mu = mulv[:, :LAT_FLAT].reshape(b, 4, LAT)
    log_var = mulv[:, LAT_FLAT:].reshape(b, 4, LAT)
    return recon, mu, log_var


if __name__ == "__main__":
    key = jax.random.PRNGKey(0)
    k_par, k_x, k_n = jax.random.split(key, 3)

    params = init_params(k_par)
    kargs = prepare_params(params)      # one-time weight repackaging (outside jit)

    x = jax.random.normal(k_x, (B, IN_CH, IMG, IMG), dtype=jnp.float32)
    noise = jax.random.normal(k_n, (B, 4, LAT), dtype=jnp.float32)

    recon, mu, log_var = jax.jit(vae_forward)(kargs, x, noise)
    jax.block_until_ready(recon)

    assert recon.shape == (B, IN_CH, IMG, IMG)
    assert mu.shape == (B, 4, LAT) and log_var.shape == (B, 4, LAT)
    assert bool(jnp.all(jnp.isfinite(recon)))
    assert bool(jnp.all(jnp.isfinite(mu))) and bool(jnp.all(jnp.isfinite(log_var)))
    print("KERNEL_OK")
</pallas_src>

<mosaic_0001>
module attributes {stable_mosaic.version = 11 : i64} {
  func.func @_vae_fused_kernel(%arg0: memref<32x64xf32, #tpu.memory_space<vmem>>, %arg1: memref<2x64xf32, #tpu.memory_space<vmem>>, %arg2: memref<64x64xf32, #tpu.memory_space<vmem>>, %arg3: memref<3x16x32xbf16, #tpu.memory_space<vmem>>, %arg4: memref<3x64x64xbf16, #tpu.memory_space<vmem>>, %arg5: memref<1x64xf32, #tpu.memory_space<vmem>>, %arg6: memref<3x8x16xbf16, #tpu.memory_space<vmem>>, %arg7: memref<3x64x64xbf16, #tpu.memory_space<vmem>>, %arg8: memref<1x64xf32, #tpu.memory_space<vmem>>, %arg9: memref<4x2x8xbf16, #tpu.memory_space<vmem>>, %arg10: memref<4x64x64xbf16, #tpu.memory_space<vmem>>, %arg11: memref<1x64xf32, #tpu.memory_space<vmem>>, %arg12: memref<4x8x2xbf16, #tpu.memory_space<vmem>>, %arg13: memref<4x64x64xbf16, #tpu.memory_space<vmem>>, %arg14: memref<8x64xf32, #tpu.memory_space<vmem>>, %arg15: memref<3x16x8xbf16, #tpu.memory_space<vmem>>, %arg16: memref<3x64x64xbf16, #tpu.memory_space<vmem>>, %arg17: memref<1x64xf32, #tpu.memory_space<vmem>>, %arg18: memref<3x32x16xbf16, #tpu.memory_space<vmem>>, %arg19: memref<3x64x64xbf16, #tpu.memory_space<vmem>>, %arg20: memref<1x64xf32, #tpu.memory_space<vmem>>, %arg21: memref<32x64xf32, #tpu.memory_space<vmem>>, %arg22: memref<2x64xf32, #tpu.memory_space<vmem>>) attributes {dimension_semantics = [], scalar_prefetch = 0 : i64, scratch_operands = 0 : i64, tpu.core_type = #tpu.core_type<tc>} {
    %c0 = arith.constant 0 : index
    %c0_0 = arith.constant 0 : index
    %0 = vector.load %arg0[%c0, %c0_0] : memref<32x64xf32, #tpu.memory_space<vmem>>, vector<32x64xf32>
    %1 = arith.truncf %0 : vector<32x64xf32> to vector<32x64xbf16>
    %c0_1 = arith.constant 0 : index
    %c0_2 = arith.constant 0 : index
    %c0_3 = arith.constant 0 : index
    %2 = vector.load %arg3[%c0_1, %c0_2, %c0_3] : memref<3x16x32xbf16, #tpu.memory_space<vmem>>, vector<1x16x32xbf16>
    %3 = vector.shape_cast %2 : vector<1x16x32xbf16> to vector<16x32xbf16>
    %cst = arith.constant dense<0.000000e+00> : vector<16x64xf32>
    %4 = tpu.matmul %3, %1, %cst {dimension_numbers = #tpu.dot_dimension_numbers<[1], [0], [0], [1], [0, 0, 1, 1], [], []>} : vector<16x32xbf16>, vector<32x64xbf16>, vector<16x64xf32> -> vector<16x64xf32>
    %5 = arith.truncf %4 : vector<16x64xf32> to vector<16x64xbf16>
    %c0_4 = arith.constant 0 : index
    %c0_5 = arith.constant 0 : index
    %c0_6 = arith.constant 0 : index
    %6 = vector.load %arg4[%c0_4, %c0_5, %c0_6] : memref<3x64x64xbf16, #tpu.memory_space<vmem>>, vector<1x64x64xbf16>
    %7 = vector.shape_cast %6 : vector<1x64x64xbf16> to vector<64x64xbf16>
    %cst_7 = arith.constant dense<0.000000e+00> : vector<16x64xf32>
    %8 = tpu.matmul %5, %7, %cst_7 {dimension_numbers = #tpu.dot_dimension_numbers<[1], [0], [0], [1], [0, 0, 1, 1], [], []>} : vector<16x64xbf16>, vector<64x64xbf16>, vector<16x64xf32> -> vector<16x64xf32>
    %c1 = arith.constant 1 : index
    %c0_8 = arith.constant 0 : index
    %c0_9 = arith.constant 0 : index
    %9 = vector.load %arg3[%c1, %c0_8, %c0_9] : memref<3x16x32xbf16, #tpu.memory_space<vmem>>, vector<1x16x32xbf16>
    %10 = vector.shape_cast %9 : vector<1x16x32xbf16> to vector<16x32xbf16>
    %cst_10 = arith.constant dense<0.000000e+00> : vector<16x64xf32>
    %11 = tpu.matmul %10, %1, %cst_10 {dimension_numbers = #tpu.dot_dimension_numbers<[1], [0], [0], [1], [0, 0, 1, 1], [], []>} : vector<16x32xbf16>, vector<32x64xbf16>, vector<16x64xf32> -> vector<16x64xf32>
    %12 = arith.truncf %11 : vector<16x64xf32> to vector<16x64xbf16>
    %c1_11 = arith.constant 1 : index
    %c0_12 = arith.constant 0 : index
    %c0_13 = arith.constant 0 : index
    %13 = vector.load %arg4[%c1_11, %c0_12, %c0_13] : memref<3x64x64xbf16, #tpu.memory_space<vmem>>, vector<1x64x64xbf16>
    %14 = vector.shape_cast %13 : vector<1x64x64xbf16> to vector<64x64xbf16>
    %cst_14 = arith.constant dense<0.000000e+00> : vector<16x64xf32>
    %15 = tpu.matmul %12, %14, %cst_14 {dimension_numbers = #tpu.dot_dimension_numbers<[1], [0], [0], [1], [0, 0, 1, 1], [], []>} : vector<16x64xbf16>, vector<64x64xbf16>, vector<16x64xf32> -> vector<16x64xf32>
    %16 = arith.addf %8, %15 : vector<16x64xf32>
    %c2 = arith.constant 2 : index
    %c0_15 = arith.constant 0 : index
    %c0_16 = arith.constant 0 : index
    %17 = vector.load %arg3[%c2, %c0_15, %c0_16] : memref<3x16x32xbf16, #tpu.memory_space<vmem>>, vector<1x16x32xbf16>
    %18 = vector.shape_cast %17 : vector<1x16x32xbf16> to vector<16x32xbf16>
    %cst_17 = arith.constant dense<0.000000e+00> : vector<16x64xf32>
    %19 = tpu.matmul %18, %1, %cst_17 {dimension_numbers = #tpu.dot_dimension_numbers<[1], [0], [0], [1], [0, 0, 1, 1], [], []>} : vector<16x32xbf16>, vector<32x64xbf16>, vector<16x64xf32> -> vector<16x64xf32>
    %20 = arith.truncf %19 : vector<16x64xf32> to vector<16x64xbf16>
    %c2_18 = arith.constant 2 : index
    %c0_19 = arith.constant 0 : index
    %c0_20 = arith.constant 0 : index
    %21 = vector.load %arg4[%c2_18, %c0_19, %c0_20] : memref<3x64x64xbf16, #tpu.memory_space<vmem>>, vector<1x64x64xbf16>
    %22 = vector.shape_cast %21 : vector<1x64x64xbf16> to vector<64x64xbf16>
    %cst_21 = arith.constant dense<0.000000e+00> : vector<16x64xf32>
    %23 = tpu.matmul %20, %22, %cst_21 {dimension_numbers = #tpu.dot_dimension_numbers<[1], [0], [0], [1], [0, 0, 1, 1], [], []>} : vector<16x64xbf16>, vector<64x64xbf16>, vector<16x64xf32> -> vector<16x64xf32>
    %24 = arith.addf %16, %23 : vector<16x64xf32>
    %c0_22 = arith.constant 0 : index
    %c0_23 = arith.constant 0 : index
    %25 = vector.load %arg5[%c0_22, %c0_23] : memref<1x64xf32, #tpu.memory_space<vmem>>, vector<1x64xf32>
    %26 = vector.broadcast %25 : vector<1x64xf32> to vector<16x64xf32>
    %27 = arith.addf %24, %26 : vector<16x64xf32>
    %cst_24 = arith.constant 0.000000e+00 : f32
    %28 = vector.broadcast %cst_24 : f32 to vector<16x64xf32>
    %29 = arith.maximumf %27, %28 : vector<16x64xf32>
    %30 = arith.truncf %29 : vector<16x64xf32> to vector<16x64xbf16>
    %c0_25 = arith.constant 0 : index
    %c0_26 = arith.constant 0 : index
    %c0_27 = arith.constant 0 : index
    %31 = vector.load %arg6[%c0_25, %c0_26, %c0_27] : memref<3x8x16xbf16, #tpu.memory_space<vmem>>, vector<1x8x16xbf16>
    %32 = vector.shape_cast %31 : vector<1x8x16xbf16> to vector<8x16xbf16>
    %cst_28 = arith.constant dense<0.000000e+00> : vector<8x64xf32>
    %33 = tpu.matmul %32, %30, %cst_28 {dimension_numbers = #tpu.dot_dimension_numbers<[1], [0], [0], [1], [0, 0, 1, 1], [], []>} : vector<8x16xbf16>, vector<16x64xbf16>, vector<8x64xf32> -> vector<8x64xf32>
    %34 = arith.truncf %33 : vector<8x64xf32> to vector<8x64xbf16>
    %c0_29 = arith.constant 0 : index
    %c0_30 = arith.constant 0 : index
    %c0_31 = arith.constant 0 : index
    %35 = vector.load %arg7[%c0_29, %c0_30, %c0_31] : memref<3x64x64xbf16, #tpu.memory_space<vmem>>, vector<1x64x64xbf16>
    %36 = vector.shape_cast %35 : vector<1x64x64xbf16> to vector<64x64xbf16>
    %cst_32 = arith.constant dense<0.000000e+00> : vector<8x64xf32>
    %37 = tpu.matmul %34, %36, %cst_32 {dimension_numbers = #tpu.dot_dimension_numbers<[1], [0], [0], [1], [0, 0, 1, 1], [], []>} : vector<8x64xbf16>, vector<64x64xbf16>, vector<8x64xf32> -> vector<8x64xf32>
    %c1_33 = arith.constant 1 : index
    %c0_34 = arith.constant 0 : index
    %c0_35 = arith.constant 0 : index
    %38 = vector.load %arg6[%c1_33, %c0_34, %c0_35] : memref<3x8x16xbf16, #tpu.memory_space<vmem>>, vector<1x8x16xbf16>
    %39 = vector.shape_cast %38 : vector<1x8x16xbf16> to vector<8x16xbf16>
    %cst_36 = arith.constant dense<0.000000e+00> : vector<8x64xf32>
    %40 = tpu.matmul %39, %30, %cst_36 {dimension_numbers = #tpu.dot_dimension_numbers<[1], [0], [0], [1], [0, 0, 1, 1], [], []>} : vector<8x16xbf16>, vector<16x64xbf16>, vector<8x64xf32> -> vector<8x64xf32>
    %41 = arith.truncf %40 : vector<8x64xf32> to vector<8x64xbf16>
    %c1_37 = arith.constant 1 : index
    %c0_38 = arith.constant 0 : index
    %c0_39 = arith.constant 0 : index
    %42 = vector.load %arg7[%c1_37, %c0_38, %c0_39] : memref<3x64x64xbf16, #tpu.memory_space<vmem>>, vector<1x64x64xbf16>
    %43 = vector.shape_cast %42 : vector<1x64x64xbf16> to vector<64x64xbf16>
    %cst_40 = arith.constant dense<0.000000e+00> : vector<8x64xf32>
    %44 = tpu.matmul %41, %43, %cst_40 {dimension_numbers = #tpu.dot_dimension_numbers<[1], [0], [0], [1], [0, 0, 1, 1], [], []>} : vector<8x64xbf16>, vector<64x64xbf16>, vector<8x64xf32> -> vector<8x64xf32>
    %45 = arith.addf %37, %44 : vector<8x64xf32>
    %c2_41 = arith.constant 2 : index
    %c0_42 = arith.constant 0 : index
    %c0_43 = arith.constant 0 : index
    %46 = vector.load %arg6[%c2_41, %c0_42, %c0_43] : memref<3x8x16xbf16, #tpu.memory_space<vmem>>, vector<1x8x16xbf16>
    %47 = vector.shape_cast %46 : vector<1x8x16xbf16> to vector<8x16xbf16>
    %cst_44 = arith.constant dense<0.000000e+00> : vector<8x64xf32>
    %48 = tpu.matmul %47, %30, %cst_44 {dimension_numbers = #tpu.dot_dimension_numbers<[1], [0], [0], [1], [0, 0, 1, 1], [], []>} : vector<8x16xbf16>, vector<16x64xbf16>, vector<8x64xf32> -> vector<8x64xf32>
    %49 = arith.truncf %48 : vector<8x64xf32> to vector<8x64xbf16>
    %c2_45 = arith.constant 2 : index
    %c0_46 = arith.constant 0 : index
    %c0_47 = arith.constant 0 : index
    %50 = vector.load %arg7[%c2_45, %c0_46, %c0_47] : memref<3x64x64xbf16, #tpu.memory_space<vmem>>, vector<1x64x64xbf16>
    %51 = vector.shape_cast %50 : vector<1x64x64xbf16> to vector<64x64xbf16>
    %cst_48 = arith.constant dense<0.000000e+00> : vector<8x64xf32>
    %52 = tpu.matmul %49, %51, %cst_48 {dimension_numbers = #tpu.dot_dimension_numbers<[1], [0], [0], [1], [0, 0, 1, 1], [], []>} : vector<8x64xbf16>, vector<64x64xbf16>, vector<8x64xf32> -> vector<8x64xf32>
    %53 = arith.addf %45, %52 : vector<8x64xf32>
    %c0_49 = arith.constant 0 : index
    %c0_50 = arith.constant 0 : index
    %54 = vector.load %arg8[%c0_49, %c0_50] : memref<1x64xf32, #tpu.memory_space<vmem>>, vector<1x64xf32>
    %55 = vector.broadcast %54 : vector<1x64xf32> to vector<8x64xf32>
    %56 = arith.addf %53, %55 : vector<8x64xf32>
    %cst_51 = arith.constant 0.000000e+00 : f32
    %57 = vector.broadcast %cst_51 : f32 to vector<8x64xf32>
    %58 = arith.maximumf %56, %57 : vector<8x64xf32>
    %59 = arith.truncf %58 : vector<8x64xf32> to vector<8x64xbf16>
    %c0_52 = arith.constant 0 : index
    %c0_53 = arith.constant 0 : index
    %c0_54 = arith.constant 0 : index
    %60 = vector.load %arg9[%c0_52, %c0_53, %c0_54] : memref<4x2x8xbf16, #tpu.memory_space<vmem>>, vector<1x2x8xbf16>
    %61 = vector.shape_cast %60 : vector<1x2x8xbf16> to vector<2x8xbf16>
    %cst_55 = arith.constant dense<0.000000e+00> : vector<2x64xf32>
    %62 = tpu.matmul %61, %59, %cst_55 {dimension_numbers = #tpu.dot_dimension_numbers<[1], [0], [0], [1], [0, 0, 1, 1], [], []>} : vector<2x8xbf16>, vector<8x64xbf16>, vector<2x64xf32> -> vector<2x64xf32>
    %63 = arith.truncf %62 : vector<2x64xf32> to vector<2x64xbf16>
    %c0_56 = arith.constant 0 : index
    %c0_57 = arith.constant 0 : index
    %c0_58 = arith.constant 0 : index
    %64 = vector.load %arg10[%c0_56, %c0_57, %c0_58] : memref<4x64x64xbf16, #tpu.memory_space<vmem>>, vector<1x64x64xbf16>
    %65 = vector.shape_cast %64 : vector<1x64x64xbf16> to vector<64x64xbf16>
    %cst_59 = arith.constant dense<0.000000e+00> : vector<2x64xf32>
    %66 = tpu.matmul %63, %65, %cst_59 {dimension_numbers = #tpu.dot_dimension_numbers<[1], [0], [0], [1], [0, 0, 1, 1], [], []>} : vector<2x64xbf16>, vector<64x64xbf16>, vector<2x64xf32> -> vector<2x64xf32>
    %c1_60 = arith.constant 1 : index
    %c0_61 = arith.constant 0 : index
    %c0_62 = arith.constant 0 : index
    %67 = vector.load %arg9[%c1_60, %c0_61, %c0_62] : memref<4x2x8xbf16, #tpu.memory_space<vmem>>, vector<1x2x8xbf16>
    %68 = vector.shape_cast %67 : vector<1x2x8xbf16> to vector<2x8xbf16>
    %cst_63 = arith.constant dense<0.000000e+00> : vector<2x64xf32>
    %69 = tpu.matmul %68, %59, %cst_63 {dimension_numbers = #tpu.dot_dimension_numbers<[1], [0], [0], [1], [0, 0, 1, 1], [], []>} : vector<2x8xbf16>, vector<8x64xbf16>, vector<2x64xf32> -> vector<2x64xf32>
    %70 = arith.truncf %69 : vector<2x64xf32> to vector<2x64xbf16>
    %c1_64 = arith.constant 1 : index
    %c0_65 = arith.constant 0 : index
    %c0_66 = arith.constant 0 : index
    %71 = vector.load %arg10[%c1_64, %c0_65, %c0_66] : memref<4x64x64xbf16, #tpu.memory_space<vmem>>, vector<1x64x64xbf16>
    %72 = vector.shape_cast %71 : vector<1x64x64xbf16> to vector<64x64xbf16>
    %cst_67 = arith.constant dense<0.000000e+00> : vector<2x64xf32>
    %73 = tpu.matmul %70, %72, %cst_67 {dimension_numbers = #tpu.dot_dimension_numbers<[1], [0], [0], [1], [0, 0, 1, 1], [], []>} : vector<2x64xbf16>, vector<64x64xbf16>, vector<2x64xf32> -> vector<2x64xf32>
    %74 = arith.addf %66, %73 : vector<2x64xf32>
    %c2_68 = arith.constant 2 : index
    %c0_69 = arith.constant 0 : index
    %c0_70 = arith.constant 0 : index
    %75 = vector.load %arg9[%c2_68, %c0_69, %c0_70] : memref<4x2x8xbf16, #tpu.memory_space<vmem>>, vector<1x2x8xbf16>
    %76 = vector.shape_cast %75 : vector<1x2x8xbf16> to vector<2x8xbf16>
    %cst_71 = arith.constant dense<0.000000e+00> : vector<2x64xf32>
    %77 = tpu.matmul %76, %59, %cst_71 {dimension_numbers = #tpu.dot_dimension_numbers<[1], [0], [0], [1], [0, 0, 1, 1], [], []>} : vector<2x8xbf16>, vector<8x64xbf16>, vector<2x64xf32> -> vector<2x64xf32>
    %78 = arith.truncf %77 : vector<2x64xf32> to vector<2x64xbf16>
    %c2_72 = arith.constant 2 : index
    %c0_73 = arith.constant 0 : index
    %c0_74 = arith.constant 0 : index
    %79 = vector.load %arg10[%c2_72, %c0_73, %c0_74] : memref<4x64x64xbf16, #tpu.memory_space<vmem>>, vector<1x64x64xbf16>
    %80 = vector.shape_cast %79 : vector<1x64x64xbf16> to vector<64x64xbf16>
    %cst_75 = arith.constant dense<0.000000e+00> : vector<2x64xf32>
    %81 = tpu.matmul %78, %80, %cst_75 {dimension_numbers = #tpu.dot_dimension_numbers<[1], [0], [0], [1], [0, 0, 1, 1], [], []>} : vector<2x64xbf16>, vector<64x64xbf16>, vector<2x64xf32> -> vector<2x64xf32>
    %82 = arith.addf %74, %81 : vector<2x64xf32>
    %c3 = arith.constant 3 : index
    %c0_76 = arith.constant 0 : index
    %c0_77 = arith.constant 0 : index
    %83 = vector.load %arg9[%c3, %c0_76, %c0_77] : memref<4x2x8xbf16, #tpu.memory_space<vmem>>, vector<1x2x8xbf16>
    %84 = vector.shape_cast %83 : vector<1x2x8xbf16> to vector<2x8xbf16>
    %cst_78 = arith.constant dense<0.000000e+00> : vector<2x64xf32>
    %85 = tpu.matmul %84, %59, %cst_78 {dimension_numbers = #tpu.dot_dimension_numbers<[1], [0], [0], [1], [0, 0, 1, 1], [], []>} : vector<2x8xbf16>, vector<8x64xbf16>, vector<2x64xf32> -> vector<2x64xf32>
    %86 = arith.truncf %85 : vector<2x64xf32> to vector<2x64xbf16>
    %c3_79 = arith.constant 3 : index
    %c0_80 = arith.constant 0 : index
    %c0_81 = arith.constant 0 : index
    %87 = vector.load %arg10[%c3_79, %c0_80, %c0_81] : memref<4x64x64xbf16, #tpu.memory_space<vmem>>, vector<1x64x64xbf16>
    %88 = vector.shape_cast %87 : vector<1x64x64xbf16> to vector<64x64xbf16>
    %cst_82 = arith.constant dense<0.000000e+00> : vector<2x64xf32>
    %89 = tpu.matmul %86, %88, %cst_82 {dimension_numbers = #tpu.dot_dimension_numbers<[1], [0], [0], [1], [0, 0, 1, 1], [], []>} : vector<2x64xbf16>, vector<64x64xbf16>, vector<2x64xf32> -> vector<2x64xf32>
    %90 = arith.addf %82, %89 : vector<2x64xf32>
    %c0_83 = arith.constant 0 : index
    %c0_84 = arith.constant 0 : index
    %91 = vector.load %arg11[%c0_83, %c0_84] : memref<1x64xf32, #tpu.memory_space<vmem>>, vector<1x64xf32>
    %92 = vector.broadcast %91 : vector<1x64xf32> to vector<2x64xf32>
    %93 = arith.addf %90, %92 : vector<2x64xf32>
    %c0_85 = arith.constant 0 : index
    %c0_86 = arith.constant 0 : index
    %94 = vector.load %arg22[%c0_85, %c0_86] : memref<2x64xf32, #tpu.memory_space<vmem>>, vector<2x64xf32>
    tpu.vector_store %arg22[%c0_85, %c0_86], %93 {strides = array<i32>} : memref<2x64xf32, #tpu.memory_space<vmem>>, vector<2x64xf32>,
    %c0_87 = arith.constant 0 : index
    %c0_88 = arith.constant 0 : index
    %95 = vector.load %arg2[%c0_87, %c0_88] : memref<64x64xf32, #tpu.memory_space<vmem>>, vector<64x64xf32>
    %cst_89 = arith.constant dense<0.000000e+00> : vector<2x64xf32>
    %96 = tpu.matmul %93, %95, %cst_89 {dimension_numbers = #tpu.dot_dimension_numbers<[1], [0], [0], [1], [0, 0, 1, 1], [], []>} : vector<2x64xf32>, vector<64x64xf32>, vector<2x64xf32> -> vector<2x64xf32>
    %cst_90 = arith.constant 5.000000e-01 : f32
    %97 = vector.broadcast %cst_90 : f32 to vector<2x64xf32>
    %98 = arith.mulf %97, %96 : vector<2x64xf32>
    %99 = math.exp %98 : vector<2x64xf32>
    %c0_91 = arith.constant 0 : index
    %c0_92 = arith.constant 0 : index
    %100 = vector.load %arg1[%c0_91, %c0_92] : memref<2x64xf32, #tpu.memory_space<vmem>>, vector<2x64xf32>
    %101 = arith.mulf %99, %100 : vector<2x64xf32>
    %102 = arith.addf %93, %101 : vector<2x64xf32>
    %103 = arith.truncf %102 : vector<2x64xf32> to vector<2x64xbf16>
    %c0_93 = arith.constant 0 : index
    %c0_94 = arith.constant 0 : index
    %c0_95 = arith.constant 0 : index
    %104 = vector.load %arg13[%c0_93, %c0_94, %c0_95] : memref<4x64x64xbf16, #tpu.memory_space<vmem>>, vector<1x64x64xbf16>
    %105 = vector.shape_cast %104 : vector<1x64x64xbf16> to vector<64x64xbf16>
    %cst_96 = arith.constant dense<0.000000e+00> : vector<2x64xf32>
    %106 = tpu.matmul %103, %105, %cst_96 {dimension_numbers = #tpu.dot_dimension_numbers<[1], [0], [0], [1], [0, 0, 1, 1], [], []>} : vector<2x64xbf16>, vector<64x64xbf16>, vector<2x64xf32> -> vector<2x64xf32>
    %c0_97 = arith.constant 0 : index
    %c0_98 = arith.constant 0 : index
    %c0_99 = arith.constant 0 : index
    %107 = vector.load %arg12[%c0_97, %c0_98, %c0_99] : memref<4x8x2xbf16, #tpu.memory_space<vmem>>, vector<1x8x2xbf16>
    %108 = vector.shape_cast %107 : vector<1x8x2xbf16> to vector<8x2xbf16>
    %109 = arith.truncf %106 : vector<2x64xf32> to vector<2x64xbf16>
    %cst_100 = arith.constant dense<0.000000e+00> : vector<8x64xf32>
    %110 = tpu.matmul %108, %109, %cst_100 {dimension_numbers = #tpu.dot_dimension_numbers<[1], [0], [0], [1], [0, 0, 1, 1], [], []>} : vector<8x2xbf16>, vector<2x64xbf16>, vector<8x64xf32> -> vector<8x64xf32>
    %c1_101 = arith.constant 1 : index
    %c0_102 = arith.constant 0 : index
    %c0_103 = arith.constant 0 : index
    %111 = vector.load %arg13[%c1_101, %c0_102, %c0_103] : memref<4x64x64xbf16, #tpu.memory_space<vmem>>, vector<1x64x64xbf16>
    %112 = vector.shape_cast %111 : vector<1x64x64xbf16> to vector<64x64xbf16>
    %cst_104 = arith.constant dense<0.000000e+00> : vector<2x64xf32>
    %113 = tpu.matmul %103, %112, %cst_104 {dimension_numbers = #tpu.dot_dimension_numbers<[1], [0], [0], [1], [0, 0, 1, 1], [], []>} : vector<2x64xbf16>, vector<64x64xbf16>, vector<2x64xf32> -> vector<2x64xf32>
    %c1_105 = arith.constant 1 : index
    %c0_106 = arith.constant 0 : index
    %c0_107 = arith.constant 0 : index
    %114 = vector.load %arg12[%c1_105, %c0_106, %c0_107] : memref<4x8x2xbf16, #tpu.memory_space<vmem>>, vector<1x8x2xbf16>
    %115 = vector.shape_cast %114 : vector<1x8x2xbf16> to vector<8x2xbf16>
    %116 = arith.truncf %113 : vector<2x64xf32> to vector<2x64xbf16>
    %cst_108 = arith.constant dense<0.000000e+00> : vector<8x64xf32>
    %117 = tpu.matmul %115, %116, %cst_108 {dimension_numbers = #tpu.dot_dimension_numbers<[1], [0], [0], [1], [0, 0, 1, 1], [], []>} : vector<8x2xbf16>, vector<2x64xbf16>, vector<8x64xf32> -> vector<8x64xf32>
    %118 = arith.addf %110, %117 : vector<8x64xf32>
    %c2_109 = arith.constant 2 : index
    %c0_110 = arith.constant 0 : index
    %c0_111 = arith.constant 0 : index
    %119 = vector.load %arg13[%c2_109, %c0_110, %c0_111] : memref<4x64x64xbf16, #tpu.memory_space<vmem>>, vector<1x64x64xbf16>
    %120 = vector.shape_cast %119 : vector<1x64x64xbf16> to vector<64x64xbf16>
    %cst_112 = arith.constant dense<0.000000e+00> : vector<2x64xf32>
    %121 = tpu.matmul %103, %120, %cst_112 {dimension_numbers = #tpu.dot_dimension_numbers<[1], [0], [0], [1], [0, 0, 1, 1], [], []>} : vector<2x64xbf16>, vector<64x64xbf16>, vector<2x64xf32> -> vector<2x64xf32>
    %c2_113 = arith.constant 2 : index
    %c0_114 = arith.constant 0 : index
    %c0_115 = arith.constant 0 : index
    %122 = vector.load %arg12[%c2_113, %c0_114, %c0_115] : memref<4x8x2xbf16, #tpu.memory_space<vmem>>, vector<1x8x2xbf16>
    %123 = vector.shape_cast %122 : vector<1x8x2xbf16> to vector<8x2xbf16>
    %124 = arith.truncf %121 : vector<2x64xf32> to vector<2x64xbf16>
    %cst_116 = arith.constant dense<0.000000e+00> : vector<8x64xf32>
    %125 = tpu.matmul %123, %124, %cst_116 {dimension_numbers = #tpu.dot_dimension_numbers<[1], [0], [0], [1], [0, 0, 1, 1], [], []>} : vector<8x2xbf16>, vector<2x64xbf16>, vector<8x64xf32> -> vector<8x64xf32>
    %126 = arith.addf %118, %125 : vector<8x64xf32>
    %c3_117 = arith.constant 3 : index
    %c0_118 = arith.constant 0 : index
    %c0_119 = arith.constant 0 : index
    %127 = vector.load %arg13[%c3_117, %c0_118, %c0_119] : memref<4x64x64xbf16, #tpu.memory_space<vmem>>, vector<1x64x64xbf16>
    %128 = vector.shape_cast %127 : vector<1x64x64xbf16> to vector<64x64xbf16>
    %cst_120 = arith.constant dense<0.000000e+00> : vector<2x64xf32>
    %129 = tpu.matmul %103, %128, %cst_120 {dimension_numbers = #tpu.dot_dimension_numbers<[1], [0], [0], [1], [0, 0, 1, 1], [], []>} : vector<2x64xbf16>, vector<64x64xbf16>, vector<2x64xf32> -> vector<2x64xf32>
    %c3_121 = arith.constant 3 : index
    %c0_122 = arith.constant 0 : index
    %c0_123 = arith.constant 0 : index
    %130 = vector.load %arg12[%c3_121, %c0_122, %c0_123] : memref<4x8x2xbf16, #tpu.memory_space<vmem>>, vector<1x8x2xbf16>
    %131 = vector.shape_cast %130 : vector<1x8x2xbf16> to vector<8x2xbf16>
    %132 = arith.truncf %129 : vector<2x64xf32> to vector<2x64xbf16>
    %cst_124 = arith.constant dense<0.000000e+00> : vector<8x64xf32>
    %133 = tpu.matmul %131, %132, %cst_124 {dimension_numbers = #tpu.dot_dimension_numbers<[1], [0], [0], [1], [0, 0, 1, 1], [], []>} : vector<8x2xbf16>, vector<2x64xbf16>, vector<8x64xf32> -> vector<8x64xf32>
    %134 = arith.addf %126, %133 : vector<8x64xf32>
    %c0_125 = arith.constant 0 : index
    %c0_126 = arith.constant 0 : index
    %135 = vector.load %arg14[%c0_125, %c0_126] : memref<8x64xf32, #tpu.memory_space<vmem>>, vector<8x64xf32>
    %136 = arith.addf %134, %135 : vector<8x64xf32>
    %cst_127 = arith.constant 0.000000e+00 : f32
    %137 = vector.broadcast %cst_127 : f32 to vector<8x64xf32>
    %138 = arith.maximumf %136, %137 : vector<8x64xf32>
    %139 = arith.truncf %138 : vector<8x64xf32> to vector<8x64xbf16>
    %c0_128 = arith.constant 0 : index
    %c0_129 = arith.constant 0 : index
    %c0_130 = arith.constant 0 : index
    %140 = vector.load %arg15[%c0_128, %c0_129, %c0_130] : memref<3x16x8xbf16, #tpu.memory_space<vmem>>, vector<1x16x8xbf16>
    %141 = vector.shape_cast %140 : vector<1x16x8xbf16> to vector<16x8xbf16>
    %cst_131 = arith.constant dense<0.000000e+00> : vector<16x64xf32>
    %142 = tpu.matmul %141, %139, %cst_131 {dimension_numbers = #tpu.dot_dimension_numbers<[1], [0], [0], [1], [0, 0, 1, 1], [], []>} : vector<16x8xbf16>, vector<8x64xbf16>, vector<16x64xf32> -> vector<16x64xf32>
    %143 = arith.truncf %142 : vector<16x64xf32> to vector<16x64xbf16>
    %c0_132 = arith.constant 0 : index
    %c0_133 = arith.constant 0 : index
    %c0_134 = arith.constant 0 : index
    %144 = vector.load %arg16[%c0_132, %c0_133, %c0_134] : memref<3x64x64xbf16, #tpu.memory_space<vmem>>, vector<1x64x64xbf16>
    %145 = vector.shape_cast %144 : vector<1x64x64xbf16> to vector<64x64xbf16>
    %cst_135 = arith.constant dense<0.000000e+00> : vector<16x64xf32>
    %146 = tpu.matmul %143, %145, %cst_135 {dimension_numbers = #tpu.dot_dimension_numbers<[1], [0], [0], [1], [0, 0, 1, 1], [], []>} : vector<16x64xbf16>, vector<64x64xbf16>, vector<16x64xf32> -> vector<16x64xf32>
    %c1_136 = arith.constant 1 : index
    %c0_137 = arith.constant 0 : index
    %c0_138 = arith.constant 0 : index
    %147 = vector.load %arg15[%c1_136, %c0_137, %c0_138] : memref<3x16x8xbf16, #tpu.memory_space<vmem>>, vector<1x16x8xbf16>
    %148 = vector.shape_cast %147 : vector<1x16x8xbf16> to vector<16x8xbf16>
    %cst_139 = arith.constant dense<0.000000e+00> : vector<16x64xf32>
    %149 = tpu.matmul %148, %139, %cst_139 {dimension_numbers = #tpu.dot_dimension_numbers<[1], [0], [0], [1], [0, 0, 1, 1], [], []>} : vector<16x8xbf16>, vector<8x64xbf16>, vector<16x64xf32> -> vector<16x64xf32>
    %150 = arith.truncf %149 : vector<16x64xf32> to vector<16x64xbf16>
    %c1_140 = arith.constant 1 : index
    %c0_141 = arith.constant 0 : index
    %c0_142 = arith.constant 0 : index
    %151 = vector.load %arg16[%c1_140, %c0_141, %c0_142] : memref<3x64x64xbf16, #tpu.memory_space<vmem>>, vector<1x64x64xbf16>
    %152 = vector.shape_cast %151 : vector<1x64x64xbf16> to vector<64x64xbf16>
    %cst_143 = arith.constant dense<0.000000e+00> : vector<16x64xf32>
    %153 = tpu.matmul %150, %152, %cst_143 {dimension_numbers = #tpu.dot_dimension_numbers<[1], [0], [0], [1], [0, 0, 1, 1], [], []>} : vector<16x64xbf16>, vector<64x64xbf16>, vector<16x64xf32> -> vector<16x64xf32>
    %154 = arith.addf %146, %153 : vector<16x64xf32>
    %c2_144 = arith.constant 2 : index
    %c0_145 = arith.constant 0 : index
    %c0_146 = arith.constant 0 : index
    %155 = vector.load %arg15[%c2_144, %c0_145, %c0_146] : memref<3x16x8xbf16, #tpu.memory_space<vmem>>, vector<1x16x8xbf16>
    %156 = vector.shape_cast %155 : vector<1x16x8xbf16> to vector<16x8xbf16>
    %cst_147 = arith.constant dense<0.000000e+00> : vector<16x64xf32>
    %157 = tpu.matmul %156, %139, %cst_147 {dimension_numbers = #tpu.dot_dimension_numbers<[1], [0], [0], [1], [0, 0, 1, 1], [], []>} : vector<16x8xbf16>, vector<8x64xbf16>, vector<16x64xf32> -> vector<16x64xf32>
    %158 = arith.truncf %157 : vector<16x64xf32> to vector<16x64xbf16>
    %c2_148 = arith.constant 2 : index
    %c0_149 = arith.constant 0 : index
    %c0_150 = arith.constant 0 : index
    %159 = vector.load %arg16[%c2_148, %c0_149, %c0_150] : memref<3x64x64xbf16, #tpu.memory_space<vmem>>, vector<1x64x64xbf16>
    %160 = vector.shape_cast %159 : vector<1x64x64xbf16> to vector<64x64xbf16>
    %cst_151 = arith.constant dense<0.000000e+00> : vector<16x64xf32>
    %161 = tpu.matmul %158, %160, %cst_151 {dimension_numbers = #tpu.dot_dimension_numbers<[1], [0], [0], [1], [0, 0, 1, 1], [], []>} : vector<16x64xbf16>, vector<64x64xbf16>, vector<16x64xf32> -> vector<16x64xf32>
    %162 = arith.addf %154, %161 : vector<16x64xf32>
    %c0_152 = arith.constant 0 : index
    %c0_153 = arith.constant 0 : index
    %163 = vector.load %arg17[%c0_152, %c0_153] : memref<1x64xf32, #tpu.memory_space<vmem>>, vector<1x64xf32>
    %164 = vector.broadcast %163 : vector<1x64xf32> to vector<16x64xf32>
    %165 = arith.addf %162, %164 : vector<16x64xf32>
    %cst_154 = arith.constant 0.000000e+00 : f32
    %166 = vector.broadcast %cst_154 : f32 to vector<16x64xf32>
    %167 = arith.maximumf %165, %166 : vector<16x64xf32>
    %168 = arith.truncf %167 : vector<16x64xf32> to vector<16x64xbf16>
    %c0_155 = arith.constant 0 : index
    %c0_156 = arith.constant 0 : index
    %c0_157 = arith.constant 0 : index
    %169 = vector.load %arg18[%c0_155, %c0_156, %c0_157] : memref<3x32x16xbf16, #tpu.memory_space<vmem>>, vector<1x32x16xbf16>
    %170 = vector.shape_cast %169 : vector<1x32x16xbf16> to vector<32x16xbf16>
    %cst_158 = arith.constant dense<0.000000e+00> : vector<32x64xf32>
    %171 = tpu.matmul %170, %168, %cst_158 {dimension_numbers = #tpu.dot_dimension_numbers<[1], [0], [0], [1], [0, 0, 1, 1], [], []>} : vector<32x16xbf16>, vector<16x64xbf16>, vector<32x64xf32> -> vector<32x64xf32>
    %172 = arith.truncf %171 : vector<32x64xf32> to vector<32x64xbf16>
    %c0_159 = arith.constant 0 : index
    %c0_160 = arith.constant 0 : index
    %c0_161 = arith.constant 0 : index
    %173 = vector.load %arg19[%c0_159, %c0_160, %c0_161] : memref<3x64x64xbf16, #tpu.memory_space<vmem>>, vector<1x64x64xbf16>
    %174 = vector.shape_cast %173 : vector<1x64x64xbf16> to vector<64x64xbf16>
    %cst_162 = arith.constant dense<0.000000e+00> : vector<32x64xf32>
    %175 = tpu.matmul %172, %174, %cst_162 {dimension_numbers = #tpu.dot_dimension_numbers<[1], [0], [0], [1], [0, 0, 1, 1], [], []>} : vector<32x64xbf16>, vector<64x64xbf16>, vector<32x64xf32> -> vector<32x64xf32>
    %c1_163 = arith.constant 1 : index
    %c0_164 = arith.constant 0 : index
    %c0_165 = arith.constant 0 : index
    %176 = vector.load %arg18[%c1_163, %c0_164, %c0_165] : memref<3x32x16xbf16, #tpu.memory_space<vmem>>, vector<1x32x16xbf16>
    %177 = vector.shape_cast %176 : vector<1x32x16xbf16> to vector<32x16xbf16>
    %cst_166 = arith.constant dense<0.000000e+00> : vector<32x64xf32>
    %178 = tpu.matmul %177, %168, %cst_166 {dimension_numbers = #tpu.dot_dimension_numbers<[1], [0], [0], [1], [0, 0, 1, 1], [], []>} : vector<32x16xbf16>, vector<16x64xbf16>, vector<32x64xf32> -> vector<32x64xf32>
    %179 = arith.truncf %178 : vector<32x64xf32> to vector<32x64xbf16>
    %c1_167 = arith.constant 1 : index
    %c0_168 = arith.constant 0 : index
    %c0_169 = arith.constant 0 : index
    %180 = vector.load %arg19[%c1_167, %c0_168, %c0_169] : memref<3x64x64xbf16, #tpu.memory_space<vmem>>, vector<1x64x64xbf16>
    %181 = vector.shape_cast %180 : vector<1x64x64xbf16> to vector<64x64xbf16>
    %cst_170 = arith.constant dense<0.000000e+00> : vector<32x64xf32>
    %182 = tpu.matmul %179, %181, %cst_170 {dimension_numbers = #tpu.dot_dimension_numbers<[1], [0], [0], [1], [0, 0, 1, 1], [], []>} : vector<32x64xbf16>, vector<64x64xbf16>, vector<32x64xf32> -> vector<32x64xf32>
    %183 = arith.addf %175, %182 : vector<32x64xf32>
    %c2_171 = arith.constant 2 : index
    %c0_172 = arith.constant 0 : index
    %c0_173 = arith.constant 0 : index
    %184 = vector.load %arg18[%c2_171, %c0_172, %c0_173] : memref<3x32x16xbf16, #tpu.memory_space<vmem>>, vector<1x32x16xbf16>
    %185 = vector.shape_cast %184 : vector<1x32x16xbf16> to vector<32x16xbf16>
    %cst_174 = arith.constant dense<0.000000e+00> : vector<32x64xf32>
    %186 = tpu.matmul %185, %168, %cst_174 {dimension_numbers = #tpu.dot_dimension_numbers<[1], [0], [0], [1], [0, 0, 1, 1], [], []>} : vector<32x16xbf16>, vector<16x64xbf16>, vector<32x64xf32> -> vector<32x64xf32>
    %187 = arith.truncf %186 : vector<32x64xf32> to vector<32x64xbf16>
    %c2_175 = arith.constant 2 : index
    %c0_176 = arith.constant 0 : index
    %c0_177 = arith.constant 0 : index
    %188 = vector.load %arg19[%c2_175, %c0_176, %c0_177] : memref<3x64x64xbf16, #tpu.memory_space<vmem>>, vector<1x64x64xbf16>
    %189 = vector.shape_cast %188 : vector<1x64x64xbf16> to vector<64x64xbf16>
    %cst_178 = arith.constant dense<0.000000e+00> : vector<32x64xf32>
    %190 = tpu.matmul %187, %189, %cst_178 {dimension_numbers = #tpu.dot_dimension_numbers<[1], [0], [0], [1], [0, 0, 1, 1], [], []>} : vector<32x64xbf16>, vector<64x64xbf16>, vector<32x64xf32> -> vector<32x64xf32>
    %191 = arith.addf %183, %190 : vector<32x64xf32>
    %c0_179 = arith.constant 0 : index
    %c0_180 = arith.constant 0 : index
    %192 = vector.load %arg20[%c0_179, %c0_180] : memref<1x64xf32, #tpu.memory_space<vmem>>, vector<1x64xf32>
    %193 = vector.broadcast %192 : vector<1x64xf32> to vector<32x64xf32>
    %194 = arith.addf %191, %193 : vector<32x64xf32>
    %195 = arith.negf %194 : vector<32x64xf32>
    %196 = math.exp %195 : vector<32x64xf32>
    %cst_181 = arith.constant 1.000000e+00 : f32
    %197 = vector.broadcast %cst_181 : f32 to vector<32x64xf32>
    %198 = arith.addf %197, %196 : vector<32x64xf32>
    %199 = arith.divf %197, %198 : vector<32x64xf32>
    %c0_182 = arith.constant 0 : index
    %c0_183 = arith.constant 0 : index
    %200 = vector.load %arg21[%c0_182, %c0_183] : memref<32x64xf32, #tpu.memory_space<vmem>>, vector<32x64xf32>
    tpu.vector_store %arg21[%c0_182, %c0_183], %199 {strides = array<i32>} : memref<32x64xf32, #tpu.memory_space<vmem>>, vector<32x64xf32>,
    return
  }
}

</mosaic_0001>

<llo_original>
// kernel: vae_forward.1
$region0: #{vae_forward.1}
  #allocation0 [shape = 'u32[]', space=smem, size = 0x4, offset = 0x4, fixed_abs, tag = 'smem constant byte address 0x4 - core index']
  #allocation1 [shape = 'u32[144,128]{1,0:T(1,128)}', space=vmem, size = 0x12000, scoped, tag = 'internal scratch']
  %s0 = inlined_call_operand.vmem [shape: f32[32,64], index: 0, kind: input, shape index: {}]
  %s1 = inlined_call_operand.vmem [shape: f32[2,64], index: 1, kind: input, shape index: {}]
  %s2 = inlined_call_operand.vmem [shape: f32[64,64], index: 2, kind: input, shape index: {}]
  %s3 = inlined_call_operand.vmem [shape: bf16[3,16,32], index: 3, kind: input, shape index: {}]
  %s4 = inlined_call_operand.vmem [shape: bf16[3,64,64], index: 4, kind: input, shape index: {}]
  %s5 = inlined_call_operand.vmem [shape: f32[1,64], index: 5, kind: input, shape index: {}]
  %s6 = inlined_call_operand.vmem [shape: bf16[3,8,16], index: 6, kind: input, shape index: {}]
  %s7 = inlined_call_operand.vmem [shape: bf16[3,64,64], index: 7, kind: input, shape index: {}]
  %s8 = inlined_call_operand.hbm [shape: f32[1,64], index: 8, kind: input, shape index: {}]
  %s9 = inlined_call_operand.hbm [shape: bf16[4,2,8], index: 9, kind: input, shape index: {}]
  %s10 = inlined_call_operand.vmem [shape: bf16[4,64,64], index: 10, kind: input, shape index: {}]
  %s11 = inlined_call_operand.hbm [shape: f32[1,64], index: 11, kind: input, shape index: {}]
  %s12 = inlined_call_operand.vmem [shape: bf16[4,8,2], index: 12, kind: input, shape index: {}]
  %s13 = inlined_call_operand.vmem [shape: bf16[4,64,64], index: 13, kind: input, shape index: {}]
  %s14 = inlined_call_operand.hbm [shape: f32[8,64], index: 14, kind: input, shape index: {}]
  %s15 = inlined_call_operand.vmem [shape: bf16[3,16,8], index: 15, kind: input, shape index: {}]
  %s16 = inlined_call_operand.vmem [shape: bf16[3,64,64], index: 16, kind: input, shape index: {}]
  %s17 = inlined_call_operand.hbm [shape: f32[1,64], index: 17, kind: input, shape index: {}]
  %s18 = inlined_call_operand.vmem [shape: bf16[3,32,16], index: 18, kind: input, shape index: {}]
  %s19 = inlined_call_operand.vmem [shape: bf16[3,64,64], index: 19, kind: input, shape index: {}]
  %s20 = inlined_call_operand.hbm [shape: f32[1,64], index: 20, kind: input, shape index: {}]
  %s21 = inlined_call_operand.vmem [shape: f32[32,64], index: 21, kind: output, shape index: {0}]
  %s22 = inlined_call_operand.vmem [shape: f32[2,64], index: 22, kind: output, shape index: {1}]
  %23 = xla_tuple %s21, %s22
  %s24 = sld [smem:[#allocation0]]
  $region126: #{vae_forward.1} parent=0
    _
  %s26 = ssub.s32 1, %s24
  %s27 = scalar_select 0, %s26, %s24
  $region1: #{vae_forward.1} parent=0
    #allocation2 [shape = 'u8[512]{0}', space=vmem, size = 0x400, scoped, tag = 'input window, operand 8, single buffered']
    #allocation3 [shape = 's32[1]{0}', space=sflag, size = 0x4, scoped, tag = 'scoped memory for vae_forward.1']
    #allocation4 [shape = 'u8[2048]{0}', space=vmem, size = 0x800, scoped, tag = 'input window, operand 9, single buffered']
    #allocation5 [shape = 's32[1]{0}', space=sflag, size = 0x4, scoped, tag = 'scoped memory for vae_forward.1']
    #allocation6 [shape = 'u8[512]{0}', space=vmem, size = 0x400, scoped, tag = 'input window, operand 11, single buffered']
    #allocation7 [shape = 'u8[4096]{0}', space=vmem, size = 0x1000, scoped, tag = 'input window, operand 14, single buffered']
    #allocation8 [shape = 's32[1]{0}', space=sflag, size = 0x4, scoped, tag = 'scoped memory for vae_forward.1']
    #allocation9 [shape = 'u8[512]{0}', space=vmem, size = 0x400, scoped, tag = 'input window, operand 17, single buffered']
    #allocation10 [shape = 'u8[512]{0}', space=vmem, size = 0x400, scoped, tag = 'input window, operand 20, single buffered']
    #allocation11 [shape = 's32[1]{0}', space=sflag, size = 0x4, scoped, tag = 'scoped memory for vae_forward.1']
    %28 = vsyncpa [#allocation3], 0
    %29 = vsyncpa [#allocation5], 0
    %30 = vsyncpa [#allocation8], 0
    %31 = vsyncpa [#allocation11], 0
    // Predicated region
    $region2: #{vae_forward.1} parent=1 // pred_check
      _
    $region3: #{vae_forward.1} parent=1 // pred_check_branch
      %33 = sbr.rel (0) target = $region5
    $region4: #{vae_forward.1} parent=1 // pred_region
      _
    $region5: #{vae_forward.1} parent=1 // pred_fallthru
      _
    // Predicated region
    $region6: #{vae_forward.1} parent=1 // pred_check
      _
    $region7: #{vae_forward.1} parent=1 // pred_check_branch
      %35 = sbr.rel (0) target = $region9
    $region8: #{vae_forward.1} parent=1 // pred_region
      _
    $region9: #{vae_forward.1} parent=1 // pred_fallthru
      _
    // Predicated region
    $region10: #{vae_forward.1} parent=1 // pred_check
      _
    $region11: #{vae_forward.1} parent=1 // pred_check_branch
      %37 = sbr.rel (0) target = $region13
    $region12: #{vae_forward.1} parent=1 // pred_region
      _
    $region13: #{vae_forward.1} parent=1 // pred_fallthru
      _
    // Predicated region
    $region14: #{vae_forward.1} parent=1 // pred_check
      _
    $region15: #{vae_forward.1} parent=1 // pred_check_branch
      %39 = sbr.rel (0) target = $region17
    $region16: #{vae_forward.1} parent=1 // pred_region
      _
    $region17: #{vae_forward.1} parent=1 // pred_fallthru
      _
    // Predicated region
    $region18: #{vae_forward.1} parent=1 // pred_check
      _
    $region19: #{vae_forward.1} parent=1 // pred_check_branch
      %41 = sbr.rel (0) target = $region21
    $region20: #{vae_forward.1} parent=1 // pred_region
      _
    $region21: #{vae_forward.1} parent=1 // pred_fallthru
      _
    // Predicated region
    $region22: #{vae_forward.1} parent=1 // pred_check
      _
    $region23: #{vae_forward.1} parent=1 // pred_check_branch
      %43 = sbr.rel (0) target = $region25
    $region24: #{vae_forward.1} parent=1 // pred_region
      _
    $region25: #{vae_forward.1} parent=1 // pred_fallthru
      _
    // Predicated region
    $region26: #{vae_forward.1} parent=1 // pred_check
      _
    $region27: #{vae_forward.1} parent=1 // pred_check_branch
      %45 = sbr.rel (0) target = $region29
    $region28: #{vae_forward.1} parent=1 // pred_region
      _
    $region29: #{vae_forward.1} parent=1 // pred_fallthru
      _
    // Predicated region
    $region30: #{vae_forward.1} parent=1 // pred_check
      _
    $region31: #{vae_forward.1} parent=1 // pred_check_branch
      %47 = sbr.rel (0) target = $region33
    $region32: #{vae_forward.1} parent=1 // pred_region
      _
    $region33: #{vae_forward.1} parent=1 // pred_fallthru
      _
    // Predicated region
    $region34: #{vae_forward.1} parent=1 // pred_check
      _
    $region35: #{vae_forward.1} parent=1 // pred_check_branch
      %49 = sbr.rel (0) target = $region37
    $region36: #{vae_forward.1} parent=1 // pred_region
      %s51 = ssub.s32 16, 16
      %52 = vsyncadd [#allocation3], %s51
      %s54 = sshll.u32 [#allocation2], 4
      %s55 = int_to_ptr.vmem [resolvable:$true] %s54
      %57 = dma.hbm_to_vmem [thread:$0]  %s8, 16, %s55, [#allocation3]
    $region37: #{vae_forward.1} parent=1 // pred_fallthru
      _
    // Predicated region
    $region38: #{vae_forward.1} parent=1 // pred_check
      _
    $region39: #{vae_forward.1} parent=1 // pred_check_branch
      %59 = sbr.rel (0) target = $region41
    $region40: #{vae_forward.1} parent=1 // pred_region
      %s61 = ssub.s32 64, 64
      %62 = vsyncadd [#allocation5], %s61
      %s63 = sshll.u32 [#allocation4], 4
      %s64 = int_to_ptr.vmem [resolvable:$true] %s63
      %69 = dma.hbm_to_vmem [thread:$0]  %s9, 64, %s64, [#allocation5], 16, 16, 1
    $region41: #{vae_forward.1} parent=1 // pred_fallthru
      _
    // Predicated region
    $region42: #{vae_forward.1} parent=1 // pred_check
      _
    $region43: #{vae_forward.1} parent=1 // pred_check_branch
      %71 = sbr.rel (0) target = $region45
    $region44: #{vae_forward.1} parent=1 // pred_region
      _
    $region45: #{vae_forward.1} parent=1 // pred_fallthru
      _
    // Predicated region
    $region46: #{vae_forward.1} parent=1 // pred_check
      _
    $region47: #{vae_forward.1} parent=1 // pred_check_branch
      %73 = sbr.rel (0) target = $region49
    $region48: #{vae_forward.1} parent=1 // pred_region
      %s75 = ssub.s32 16, 16
      %76 = vsyncadd [#allocation5], %s75
      %s78 = sshll.u32 [#allocation6], 4
      %s79 = int_to_ptr.vmem [resolvable:$true] %s78
      %81 = dma.hbm_to_vmem [thread:$0]  %s11, 16, %s79, [#allocation5]
    $region49: #{vae_forward.1} parent=1 // pred_fallthru
      _
    // Predicated region
    $region50: #{vae_forward.1} parent=1 // pred_check
      _
    $region51: #{vae_forward.1} parent=1 // pred_check_branch
      %83 = sbr.rel (0) target = $region53
    $region52: #{vae_forward.1} parent=1 // pred_region
      _
    $region53: #{vae_forward.1} parent=1 // pred_fallthru
      _
    // Predicated region
    $region54: #{vae_forward.1} parent=1 // pred_check
      _
    $region55: #{vae_forward.1} parent=1 // pred_check_branch
      %85 = sbr.rel (0) target = $region57
    $region56: #{vae_forward.1} parent=1 // pred_region
      _
    $region57: #{vae_forward.1} parent=1 // pred_fallthru
      _
    // Predicated region
    $region58: #{vae_forward.1} parent=1 // pred_check
      _
    $region59: #{vae_forward.1} parent=1 // pred_check_branch
      %87 = sbr.rel (0) target = $region61
    $region60: #{vae_forward.1} parent=1 // pred_region
      %s89 = ssub.s32 128, 128
      %90 = vsyncadd [#allocation8], %s89
      %s92 = sshll.u32 [#allocation7], 4
      %s93 = int_to_ptr.vmem [resolvable:$true] %s92
      %95 = dma.hbm_to_vmem [thread:$0]  %s14, 128, %s93, [#allocation8]
    $region61: #{vae_forward.1} parent=1 // pred_fallthru
      _
    // Predicated region
    $region62: #{vae_forward.1} parent=1 // pred_check
      _
    $region63: #{vae_forward.1} parent=1 // pred_check_branch
      %97 = sbr.rel (0) target = $region65
    $region64: #{vae_forward.1} parent=1 // pred_region
      _
    $region65: #{vae_forward.1} parent=1 // pred_fallthru
      _
    // Predicated region
    $region66: #{vae_forward.1} parent=1 // pred_check
      _
    $region67: #{vae_forward.1} parent=1 // pred_check_branch
      %99 = sbr.rel (0) target = $region69
    $region68: #{vae_forward.1} parent=1 // pred_region
      _
    $region69: #{vae_forward.1} parent=1 // pred_fallthru
      _
    // Predicated region
    $region70: #{vae_forward.1} parent=1 // pred_check
      _
    $region71: #{vae_forward.1} parent=1 // pred_check_branch
      %101 = sbr.rel (0) target = $region73
    $region72: #{vae_forward.1} parent=1 // pred_region
      %s103 = ssub.s32 16, 16
      %104 = vsyncadd [#allocation8], %s103
      %s106 = sshll.u32 [#allocation9], 4
      %s107 = int_to_ptr.vmem [resolvable:$true] %s106
      %109 = dma.hbm_to_vmem [thread:$0]  %s17, 16, %s107, [#allocation8]
    $region73: #{vae_forward.1} parent=1 // pred_fallthru
      _
    // Predicated region
    $region74: #{vae_forward.1} parent=1 // pred_check
      _
    $region75: #{vae_forward.1} parent=1 // pred_check_branch
      %111 = sbr.rel (0) target = $region77
    $region76: #{vae_forward.1} parent=1 // pred_region
      _
    $region77: #{vae_forward.1} parent=1 // pred_fallthru
      _
    // Predicated region
    $region78: #{vae_forward.1} parent=1 // pred_check
      _
    $region79: #{vae_forward.1} parent=1 // pred_check_branch
      %113 = sbr.rel (0) target = $region81
    $region80: #{vae_forward.1} parent=1 // pred_region
      _
    $region81: #{vae_forward.1} parent=1 // pred_fallthru
      _
    // Predicated region
    $region82: #{vae_forward.1} parent=1 // pred_check
      _
    $region83: #{vae_forward.1} parent=1 // pred_check_branch
      %115 = sbr.rel (0) target = $region85
    $region84: #{vae_forward.1} parent=1 // pred_region
      %s117 = ssub.s32 16, 16
      %118 = vsyncadd [#allocation11], %s117
      %s120 = sshll.u32 [#allocation10], 4
      %s121 = int_to_ptr.vmem [resolvable:$true] %s120
      %123 = dma.hbm_to_vmem [thread:$0]  %s20, 16, %s121, [#allocation11]
    $region85: #{vae_forward.1} parent=1 // pred_fallthru
      _
    // Predicated region
    $region86: #{vae_forward.1} parent=1 // pred_check
      _
    $region87: #{vae_forward.1} parent=1 // pred_check_branch
      %125 = sbr.rel (0) target = $region89
    $region88: #{vae_forward.1} parent=1 // pred_region
      %126 = dma.done [#allocation3], 16
    $region89: #{vae_forward.1} parent=1 // pred_fallthru
      _
    // Predicated region
    $region90: #{vae_forward.1} parent=1 // pred_check
      _
    $region91: #{vae_forward.1} parent=1 // pred_check_branch
      %128 = sbr.rel (0) target = $region93
    $region92: #{vae_forward.1} parent=1 // pred_region
      %129 = dma.done [#allocation5], 64
    $region93: #{vae_forward.1} parent=1 // pred_fallthru
      _
    // Predicated region
    $region94: #{vae_forward.1} parent=1 // pred_check
      _
    $region95: #{vae_forward.1} parent=1 // pred_check_branch
      %131 = sbr.rel (0) target = $region97
    $region96: #{vae_forward.1} parent=1 // pred_region
      %132 = dma.done [#allocation5], 16
    $region97: #{vae_forward.1} parent=1 // pred_fallthru
      _
    // Predicated region
    $region98: #{vae_forward.1} parent=1 // pred_check
      _
    $region99: #{vae_forward.1} parent=1 // pred_check_branch
      %134 = sbr.rel (0) target = $region101
    $region100: #{vae_forward.1} parent=1 // pred_region
      %135 = dma.done [#allocation8], 128
    $region101: #{vae_forward.1} parent=1 // pred_fallthru
      _
    // Predicated region
    $region102: #{vae_forward.1} parent=1 // pred_check
      _
    $region103: #{vae_forward.1} parent=1 // pred_check_branch
      %137 = sbr.rel (0) target = $region105
    $region104: #{vae_forward.1} parent=1 // pred_region
      %138 = dma.done [#allocation8], 16
    $region105: #{vae_forward.1} parent=1 // pred_fallthru
      _
    // Predicated region
    $region106: #{vae_forward.1} parent=1 // pred_check
      _
    $region107: #{vae_forward.1} parent=1 // pred_check_branch
      %140 = sbr.rel (0) target = $region109
    $region108: #{vae_forward.1} parent=1 // pred_region
      %141 = dma.done [#allocation11], 16
    $region109: #{vae_forward.1} parent=1 // pred_fallthru
      _
    %v143 = vld [vmem:[%s0] sm:$0xff]
    %v144 = vld [vmem:[%s0 + $0x8] sm:$0xff]
    %v145 = vld [vmem:[%s0 + $0x10] sm:$0xff]
    %v146 = vld [vmem:[%s0 + $0x18] sm:$0xff]
    %v147 = vpack.c.bf16 %v144, %v143
    %v148 = vpack.c.bf16 %v146, %v145
    %v149 = vld [vmem:[%s3] sm:$0xf]
    %v150 = vld [vmem:[%s3 + $0x4] sm:$0xf]
    %v153 = vunpack.c.l.b16 %v149
    %v154 = vunpack.c.l.b16 %v150
    %v155 = vpack.c.b16 %v154, %v153
    %vm156 = vcmask 261120
    %v158 = vsel %vm156, %v155, 0
    %160 = vmatprep.subr.bf16.mxu0 0
    %161 = vmatpush1.bf16.msra.mxu0 %v147
    %162 = vmatprep.subr.bf16.mxu0 0
    %163 = vmatpush1.bf16.msra.mxu0 %v148
    %164 = vmatprep.subr.bf16.mxu0 0
    %165 = vmatpush1.bf16.msra.mxu0 0
    %166 = vmatprep.subr.bf16.mxu0 0
    %167 = vmatpush1.bf16.msra.mxu0 0
    %168 = vmatprep.subr.bf16.mxu0 0
    %169 = vmatpush1.bf16.msra.mxu0 0
    %170 = vmatprep.subr.bf16.mxu0 0
    %171 = vmatpush1.bf16.msra.mxu0 0
    %172 = vmatprep.subr.bf16.mxu0 0
    %173 = vmatpush1.bf16.msra.mxu0 0
    %174 = vmatprep.subr.bf16.mxu0 0
    %175 = vmatpush1.bf16.msra.mxu0 0
    %176 = vmatprep.subr.bf16.mxu0 0
    %177 = vmatpush1.bf16.msra.mxu0 0
    %178 = vmatprep.subr.bf16.mxu0 0
    %179 = vmatpush1.bf16.msra.mxu0 0
    %180 = vmatprep.subr.bf16.mxu0 0
    %181 = vmatpush1.bf16.msra.mxu0 0
    %182 = vmatprep.subr.bf16.mxu0 0
    %183 = vmatpush1.bf16.msra.mxu0 0
    %184 = vmatprep.subr.bf16.mxu0 0
    %185 = vmatpush1.bf16.msra.mxu0 0
    %186 = vmatprep.subr.bf16.mxu0 0
    %187 = vmatpush1.bf16.msra.mxu0 0
    %188 = vmatprep.subr.bf16.mxu0 0
    %189 = vmatpush1.bf16.msra.mxu0 0
    %190 = vmatprep.subr.bf16.mxu0 0
    %191 = vmatpush1.bf16.msra.mxu0 0
    %192 = vmatprep.mubr.bf16.mxu0 0
    %193 = vmatmul.mubr.bf16.gmra.mrb[0].mxu0 %v158
    %v194 = vpop.f32.mrb[0].mxu0
    %v195 = vadd.f32 0.0, %v194
    %v196 = vpop.f32.mrb[0].mxu0
    %v197 = vpop.f32.mrb[0].mxu0
    %v198 = vadd.f32 0.0, %v197
    %v199 = vpop.f32.mrb[0].mxu0
    %200 = vdwg.mxu0
    %v201 = vpack.c.bf16 %v198, %v195
    %v202 = vld [vmem:[%s4] sm:$0xf]
    %v203 = vld [vmem:[%s4 + $0x4] sm:$0xf]
    %v204 = vld [vmem:[%s4 + $0x8] sm:$0xf]
    %v205 = vld [vmem:[%s4 + $0xc] sm:$0xf]
    %v206 = vld [vmem:[%s4 + $0x10] sm:$0xf]
    %v207 = vld [vmem:[%s4 + $0x14] sm:$0xf]
    %v208 = vld [vmem:[%s4 + $0x18] sm:$0xf]
    %v209 = vld [vmem:[%s4 + $0x1c] sm:$0xf]
    %s210 = scalar_lea.vmem %s3, 8
    %v211 = vld [vmem:[%s210] sm:$0xf]
    %v212 = vld [vmem:[%s210 + $0x4] sm:$0xf]
    %v215 = vunpack.c.l.b16 %v211
    %v216 = vunpack.c.l.b16 %v212
    %v217 = vpack.c.b16 %v216, %v215
    %v219 = vsel %vm156, %v217, 0
    %221 = vmatprep.subr.bf16.mxu0 0
    %222 = vmatpush1.bf16.msra.mxu0 %v147
    %223 = vmatprep.subr.bf16.mxu0 0
    %224 = vmatpush1.bf16.msra.mxu0 %v148
    %225 = vmatprep.subr.bf16.mxu0 0
    %226 = vmatpush1.bf16.msra.mxu0 0
    %227 = vmatprep.subr.bf16.mxu0 0
    %228 = vmatpush1.bf16.msra.mxu0 0
    %229 = vmatprep.subr.bf16.mxu0 0
    %230 = vmatpush1.bf16.msra.mxu0 0
    %231 = vmatprep.subr.bf16.mxu0 0
    %232 = vmatpush1.bf16.msra.mxu0 0
    %233 = vmatprep.subr.bf16.mxu0 0
    %234 = vmatpush1.bf16.msra.mxu0 0
    %235 = vmatprep.subr.bf16.mxu0 0
    %236 = vmatpush1.bf16.msra.mxu0 0
    %237 = vmatprep.subr.bf16.mxu0 0
    %238 = vmatpush1.bf16.msra.mxu0 0
    %239 = vmatprep.subr.bf16.mxu0 0
    %240 = vmatpush1.bf16.msra.mxu0 0
    %241 = vmatprep.subr.bf16.mxu0 0
    %242 = vmatpush1.bf16.msra.mxu0 0
    %243 = vmatprep.subr.bf16.mxu0 0
    %244 = vmatpush1.bf16.msra.mxu0 0
    %245 = vmatprep.subr.bf16.mxu0 0
    %246 = vmatpush1.bf16.msra.mxu0 0
    %247 = vmatprep.subr.bf16.mxu0 0
    %248 = vmatpush1.bf16.msra.mxu0 0
    %249 = vmatprep.subr.bf16.mxu0 0
    %250 = vmatpush1.bf16.msra.mxu0 0
    %251 = vmatprep.subr.bf16.mxu0 0
    %252 = vmatpush1.bf16.msra.mxu0 0
    %253 = vmatprep.mubr.bf16.mxu0 0
    %254 = vmatmul.mubr.bf16.gmra.mrb[0].mxu0 %v219
    %v255 = vpop.f32.mrb[0].mxu0
    %v256 = vadd.f32 0.0, %v255
    %v257 = vpop.f32.mrb[0].mxu0
    %v258 = vpop.f32.mrb[0].mxu0
    %v259 = vadd.f32 0.0, %v258
    %v260 = vpop.f32.mrb[0].mxu0
    %261 = vdwg.mxu0
    %v262 = vpack.c.bf16 %v259, %v256
    %s263 = scalar_lea.vmem %s4, 32
    %v264 = vld [vmem:[%s263] sm:$0xf]
    %v265 = vld [vmem:[%s263 + $0x4] sm:$0xf]
    %v266 = vld [vmem:[%s263 + $0x8] sm:$0xf]
    %v267 = vld [vmem:[%s263 + $0xc] sm:$0xf]
    %v268 = vld [vmem:[%s263 + $0x10] sm:$0xf]
    %v269 = vld [vmem:[%s263 + $0x14] sm:$0xf]
    %v270 = vld [vmem:[%s263 + $0x18] sm:$0xf]
    %v271 = vld [vmem:[%s263 + $0x1c] sm:$0xf]
    %v280 = vunpack.c.l.b16 %v264
    %v281 = vunpack.c.l.b16 %v265
    %v282 = vunpack.c.l.b16 %v266
    %v283 = vunpack.c.l.b16 %v267
    %v284 = vunpack.c.l.b16 %v268
    %v285 = vunpack.c.l.b16 %v269
    %v286 = vunpack.c.l.b16 %v270
    %v287 = vunpack.c.l.b16 %v271
    %v288 = vpack.c.b16 %v281, %v280
    %v289 = vpack.c.b16 %v283, %v282
    %v290 = vpack.c.b16 %v285, %v284
    %v291 = vpack.c.b16 %v287, %v286
    %vm296 = vcmask 523264
    %v298 = vsel %vm296, %v262, 0
    %300 = vmatprep.subr.bf16.mxu0 0
    %301 = vmatpush1.bf16.msra.mxu0 %v288
    %302 = vmatprep.subr.bf16.mxu0 0
    %303 = vmatpush1.bf16.msra.mxu0 %v289
    %304 = vmatprep.subr.bf16.mxu0 0
    %305 = vmatpush1.bf16.msra.mxu0 %v290
    %306 = vmatprep.subr.bf16.mxu0 0
    %307 = vmatpush1.bf16.msra.mxu0 %v291
    %308 = vmatprep.subr.bf16.mxu0 0
    %309 = vmatpush1.bf16.msra.mxu0 0
    %310 = vmatprep.subr.bf16.mxu0 0
    %311 = vmatpush1.bf16.msra.mxu0 0
    %312 = vmatprep.subr.bf16.mxu0 0
    %313 = vmatpush1.bf16.msra.mxu0 0
    %314 = vmatprep.subr.bf16.mxu0 0
    %315 = vmatpush1.bf16.msra.mxu0 0
    %316 = vmatprep.subr.bf16.mxu0 0
    %317 = vmatpush1.bf16.msra.mxu0 0
    %318 = vmatprep.subr.bf16.mxu0 0
    %319 = vmatpush1.bf16.msra.mxu0 0
    %320 = vmatprep.subr.bf16.mxu0 0
    %321 = vmatpush1.bf16.msra.mxu0 0
    %322 = vmatprep.subr.bf16.mxu0 0
    %323 = vmatpush1.bf16.msra.mxu0 0
    %324 = vmatprep.subr.bf16.mxu0 0
    %325 = vmatpush1.bf16.msra.mxu0 0
    %326 = vmatprep.subr.bf16.mxu0 0
    %327 = vmatpush1.bf16.msra.mxu0 0
    %328 = vmatprep.subr.bf16.mxu0 0
    %329 = vmatpush1.bf16.msra.mxu0 0
    %330 = vmatprep.subr.bf16.mxu0 0
    %331 = vmatpush1.bf16.msra.mxu0 0
    %332 = vmatprep.mubr.bf16.mxu0 0
    %333 = vmatmul.mubr.bf16.gmra.mrb[0].mxu0 %v298
    %v334 = vpop.f32.mrb[0].mxu0
    %v335 = vadd.f32 0.0, %v334
    %v336 = vpop.f32.mrb[0].mxu0
    %v337 = vpop.f32.mrb[0].mxu0
    %v338 = vadd.f32 0.0, %v337
    %v339 = vpop.f32.mrb[0].mxu0
    %340 = vdwg.mxu0
    %v349 = vunpack.c.l.b16 %v202
    %v350 = vunpack.c.l.b16 %v203
    %v351 = vunpack.c.l.b16 %v204
    %v352 = vunpack.c.l.b16 %v205
    %v353 = vunpack.c.l.b16 %v206
    %v354 = vunpack.c.l.b16 %v207
    %v355 = vunpack.c.l.b16 %v208
    %v356 = vunpack.c.l.b16 %v209
    %v357 = vpack.c.b16 %v350, %v349
    %v358 = vpack.c.b16 %v352, %v351
    %v359 = vpack.c.b16 %v354, %v353
    %v360 = vpack.c.b16 %v356, %v355
    %v366 = vsel %vm296, %v201, 0
    %368 = vmatprep.subr.bf16.mxu0 0
    %369 = vmatpush1.bf16.msra.mxu0 %v357
    %370 = vmatprep.subr.bf16.mxu0 0
    %371 = vmatpush1.bf16.msra.mxu0 %v358
    %372 = vmatprep.subr.bf16.mxu0 0
    %373 = vmatpush1.bf16.msra.mxu0 %v359
    %374 = vmatprep.subr.bf16.mxu0 0
    %375 = vmatpush1.bf16.msra.mxu0 %v360
    %376 = vmatprep.subr.bf16.mxu0 0
    %377 = vmatpush1.bf16.msra.mxu0 0
    %378 = vmatprep.subr.bf16.mxu0 0
    %379 = vmatpush1.bf16.msra.mxu0 0
    %380 = vmatprep.subr.bf16.mxu0 0
    %381 = vmatpush1.bf16.msra.mxu0 0
    %382 = vmatprep.subr.bf16.mxu0 0
    %383 = vmatpush1.bf16.msra.mxu0 0
    %384 = vmatprep.subr.bf16.mxu0 0
    %385 = vmatpush1.bf16.msra.mxu0 0
    %386 = vmatprep.subr.bf16.mxu0 0
    %387 = vmatpush1.bf16.msra.mxu0 0
    %388 = vmatprep.subr.bf16.mxu0 0
    %389 = vmatpush1.bf16.msra.mxu0 0
    %390 = vmatprep.subr.bf16.mxu0 0
    %391 = vmatpush1.bf16.msra.mxu0 0
    %392 = vmatprep.subr.bf16.mxu0 0
    %393 = vmatpush1.bf16.msra.mxu0 0
    %394 = vmatprep.subr.bf16.mxu0 0
    %395 = vmatpush1.bf16.msra.mxu0 0
    %396 = vmatprep.subr.bf16.mxu0 0
    %397 = vmatpush1.bf16.msra.mxu0 0
    %398 = vmatprep.subr.bf16.mxu0 0
    %399 = vmatpush1.bf16.msra.mxu0 0
    %400 = vmatprep.mubr.bf16.mxu0 0
    %401 = vmatmul.mubr.bf16.gmra.mrb[0].mxu0 %v366
    %v402 = vpop.f32.mrb[0].mxu0
    %v403 = vadd.f32 %v335, %v402
    %v404 = vpop.f32.mrb[0].mxu0
    %v405 = vpop.f32.mrb[0].mxu0
    %v406 = vadd.f32 %v338, %v405
    %v407 = vpop.f32.mrb[0].mxu0
    %408 = vdwg.mxu0
    %s409 = scalar_lea.vmem %s3, 16
    %v410 = vld [vmem:[%s409] sm:$0xf]
    %v411 = vld [vmem:[%s409 + $0x4] sm:$0xf]
    %v414 = vunpack.c.l.b16 %v410
    %v415 = vunpack.c.l.b16 %v411
    %v416 = vpack.c.b16 %v415, %v414
    %v418 = vsel %vm156, %v416, 0
    %420 = vmatprep.subr.bf16.mxu0 0
    %421 = vmatpush1.bf16.msra.mxu0 %v147
    %422 = vmatprep.subr.bf16.mxu0 0
    %423 = vmatpush1.bf16.msra.mxu0 %v148
    %424 = vmatprep.subr.bf16.mxu0 0
    %425 = vmatpush1.bf16.msra.mxu0 0
    %426 = vmatprep.subr.bf16.mxu0 0
    %427 = vmatpush1.bf16.msra.mxu0 0
    %428 = vmatprep.subr.bf16.mxu0 0
    %429 = vmatpush1.bf16.msra.mxu0 0
    %430 = vmatprep.subr.bf16.mxu0 0
    %431 = vmatpush1.bf16.msra.mxu0 0
    %432 = vmatprep.subr.bf16.mxu0 0
    %433 = vmatpush1.bf16.msra.mxu0 0
    %434 = vmatprep.subr.bf16.mxu0 0
    %435 = vmatpush1.bf16.msra.mxu0 0
    %436 = vmatprep.subr.bf16.mxu0 0
    %437 = vmatpush1.bf16.msra.mxu0 0
    %438 = vmatprep.subr.bf16.mxu0 0
    %439 = vmatpush1.bf16.msra.mxu0 0
    %440 = vmatprep.subr.bf16.mxu0 0
    %441 = vmatpush1.bf16.msra.mxu0 0
    %442 = vmatprep.subr.bf16.mxu0 0
    %443 = vmatpush1.bf16.msra.mxu0 0
    %444 = vmatprep.subr.bf16.mxu0 0
    %445 = vmatpush1.bf16.msra.mxu0 0
    %446 = vmatprep.subr.bf16.mxu0 0
    %447 = vmatpush1.bf16.msra.mxu0 0
    %448 = vmatprep.subr.bf16.mxu0 0
    %449 = vmatpush1.bf16.msra.mxu0 0
    %450 = vmatprep.subr.bf16.mxu0 0
    %451 = vmatpush1.bf16.msra.mxu0 0
    %452 = vmatprep.mubr.bf16.mxu0 0
    %453 = vmatmul.mubr.bf16.gmra.mrb[0].mxu0 %v418
    %v454 = vpop.f32.mrb[0].mxu0
    %v455 = vadd.f32 0.0, %v454
    %v456 = vpop.f32.mrb[0].mxu0
    %v457 = vpop.f32.mrb[0].mxu0
    %v458 = vadd.f32 0.0, %v457
    %v459 = vpop.f32.mrb[0].mxu0
    %460 = vdwg.mxu0
    %v461 = vpack.c.bf16 %v458, %v455
    %s462 = scalar_lea.vmem %s4, 64
    %v463 = vld [vmem:[%s462] sm:$0xf]
    %v464 = vld [vmem:[%s462 + $0x4] sm:$0xf]
    %v465 = vld [vmem:[%s462 + $0x8] sm:$0xf]
    %v466 = vld [vmem:[%s462 + $0xc] sm:$0xf]
    %v467 = vld [vmem:[%s462 + $0x10] sm:$0xf]
    %v468 = vld [vmem:[%s462 + $0x14] sm:$0xf]
    %v469 = vld [vmem:[%s462 + $0x18] sm:$0xf]
    %v470 = vld [vmem:[%s462 + $0x1c] sm:$0xf]
    %v479 = vunpack.c.l.b16 %v463
    %v480 = vunpack.c.l.b16 %v464
    %v481 = vunpack.c.l.b16 %v465
    %v482 = vunpack.c.l.b16 %v466
    %v483 = vunpack.c.l.b16 %v467
    %v484 = vunpack.c.l.b16 %v468
    %v485 = vunpack.c.l.b16 %v469
    %v486 = vunpack.c.l.b16 %v470
    %v487 = vpack.c.b16 %v480, %v479
    %v488 = vpack.c.b16 %v482, %v481
    %v489 = vpack.c.b16 %v484, %v483
    %v490 = vpack.c.b16 %v486, %v485
    %v496 = vsel %vm296, %v461, 0
    %498 = vmatprep.subr.bf16.mxu0 0
    %499 = vmatpush1.bf16.msra.mxu0 %v487
    %500 = vmatprep.subr.bf16.mxu0 0
    %501 = vmatpush1.bf16.msra.mxu0 %v488
    %502 = vmatprep.subr.bf16.mxu0 0
    %503 = vmatpush1.bf16.msra.mxu0 %v489
    %504 = vmatprep.subr.bf16.mxu0 0
    %505 = vmatpush1.bf16.msra.mxu0 %v490
    %506 = vmatprep.subr.bf16.mxu0 0
    %507 = vmatpush1.bf16.msra.mxu0 0
    %508 = vmatprep.subr.bf16.mxu0 0
    %509 = vmatpush1.bf16.msra.mxu0 0
    %510 = vmatprep.subr.bf16.mxu0 0
    %511 = vmatpush1.bf16.msra.mxu0 0
    %512 = vmatprep.subr.bf16.mxu0 0
    %513 = vmatpush1.bf16.msra.mxu0 0
    %514 = vmatprep.subr.bf16.mxu0 0
    %515 = vmatpush1.bf16.msra.mxu0 0
    %516 = vmatprep.subr.bf16.mxu0 0
    %517 = vmatpush1.bf16.msra.mxu0 0
    %518 = vmatprep.subr.bf16.mxu0 0
    %519 = vmatpush1.bf16.msra.mxu0 0
    %520 = vmatprep.subr.bf16.mxu0 0
    %521 = vmatpush1.bf16.msra.mxu0 0
    %522 = vmatprep.subr.bf16.mxu0 0
    %523 = vmatpush1.bf16.msra.mxu0 0
    %524 = vmatprep.subr.bf16.mxu0 0
    %525 = vmatpush1.bf16.msra.mxu0 0
    %526 = vmatprep.subr.bf16.mxu0 0
    %527 = vmatpush1.bf16.msra.mxu0 0
    %528 = vmatprep.subr.bf16.mxu0 0
    %529 = vmatpush1.bf16.msra.mxu0 0
    %530 = vmatprep.mubr.bf16.mxu0 0
    %531 = vmatmul.mubr.bf16.gmra.mrb[0].mxu0 %v496
    %v532 = vpop.f32.mrb[0].mxu0
    %v533 = vadd.f32 0.0, %v532
    %v534 = vpop.f32.mrb[0].mxu0
    %v535 = vpop.f32.mrb[0].mxu0
    %v536 = vadd.f32 0.0, %v535
    %v537 = vpop.f32.mrb[0].mxu0
    %538 = vdwg.mxu0
    %v539 = vadd.f32 %v403, %v533
    %v540 = vadd.f32 %v406, %v536
    %v541 = vld [vmem:[%s5] sm:$0x1]
    %v543 = vlaneseq
    %v544 = vshrl.u32 %v543, 7
    %v545 = vsub.s32 0, %v544
    %v546 = vrot.slane %v541, %v545
    %v548 = vadd.f32 %v539, %v546
    %v549 = vadd.f32 %v540, %v546
    %v550 = vmax.f32 %v548, 0.0
    %v551 = vmax.f32 %v549, 0.0
    %v552 = vpack.c.bf16 %v551, %v550
    %v553 = vld [vmem:[%s6] sm:$0xf]
    %vm554 = vcmask 130048
    %v556 = vsel %vm554, %v553, 0
    %558 = vmatprep.subr.bf16.mxu0 0
    %559 = vmatpush1.bf16.msra.mxu0 %v552
    %560 = vmatprep.subr.bf16.mxu0 0
    %561 = vmatpush1.bf16.msra.mxu0 0
    %562 = vmatprep.subr.bf16.mxu0 0
    %563 = vmatpush1.bf16.msra.mxu0 0
    %564 = vmatprep.subr.bf16.mxu0 0
    %565 = vmatpush1.bf16.msra.mxu0 0
    %566 = vmatprep.subr.bf16.mxu0 0
    %567 = vmatpush1.bf16.msra.mxu0 0
    %568 = vmatprep.subr.bf16.mxu0 0
    %569 = vmatpush1.bf16.msra.mxu0 0
    %570 = vmatprep.subr.bf16.mxu0 0
    %571 = vmatpush1.bf16.msra.mxu0 0
    %572 = vmatprep.subr.bf16.mxu0 0
    %573 = vmatpush1.bf16.msra.mxu0 0
    %574 = vmatprep.subr.bf16.mxu0 0
    %575 = vmatpush1.bf16.msra.mxu0 0
    %576 = vmatprep.subr.bf16.mxu0 0
    %577 = vmatpush1.bf16.msra.mxu0 0
    %578 = vmatprep.subr.bf16.mxu0 0
    %579 = vmatpush1.bf16.msra.mxu0 0
    %580 = vmatprep.subr.bf16.mxu0 0
    %581 = vmatpush1.bf16.msra.mxu0 0
    %582 = vmatprep.subr.bf16.mxu0 0
    %583 = vmatpush1.bf16.msra.mxu0 0
    %584 = vmatprep.subr.bf16.mxu0 0
    %585 = vmatpush1.bf16.msra.mxu0 0
    %586 = vmatprep.subr.bf16.mxu0 0
    %587 = vmatpush1.bf16.msra.mxu0 0
    %588 = vmatprep.subr.bf16.mxu0 0
    %589 = vmatpush1.bf16.msra.mxu0 0
    %590 = vmatprep.mubr.bf16.mxu0 0
    %591 = vmatmul.mubr.bf16.gmra.mrb[0].mxu0 %v556
    %v592 = vpop.f32.mrb[0].mxu0
    %v593 = vadd.f32 0.0, %v592
    %v594 = vpop.f32.mrb[0].mxu0
    %v595 = vpop.f32.mrb[0].mxu0
    %v596 = vpop.f32.mrb[0].mxu0
    %597 = vdwg.mxu0
    %v598 = vpack.c.bf16 %v593, %v593
    %v599 = vld [vmem:[%s7] sm:$0xf]
    %v600 = vld [vmem:[%s7 + $0x4] sm:$0xf]
    %v601 = vld [vmem:[%s7 + $0x8] sm:$0xf]
    %v602 = vld [vmem:[%s7 + $0xc] sm:$0xf]
    %v603 = vld [vmem:[%s7 + $0x10] sm:$0xf]
    %v604 = vld [vmem:[%s7 + $0x14] sm:$0xf]
    %v605 = vld [vmem:[%s7 + $0x18] sm:$0xf]
    %v606 = vld [vmem:[%s7 + $0x1c] sm:$0xf]
    %s607 = scalar_lea.vmem %s6, 4
    %v608 = vld [vmem:[%s607] sm:$0xf]
    %v610 = vsel %vm554, %v608, 0
    %612 = vmatprep.subr.bf16.mxu0 0
    %613 = vmatpush1.bf16.msra.mxu0 %v552
    %614 = vmatprep.subr.bf16.mxu0 0
    %615 = vmatpush1.bf16.msra.mxu0 0
    %616 = vmatprep.subr.bf16.mxu0 0
    %617 = vmatpush1.bf16.msra.mxu0 0
    %618 = vmatprep.subr.bf16.mxu0 0
    %619 = vmatpush1.bf16.msra.mxu0 0
    %620 = vmatprep.subr.bf16.mxu0 0
    %621 = vmatpush1.bf16.msra.mxu0 0
    %622 = vmatprep.subr.bf16.mxu0 0
    %623 = vmatpush1.bf16.msra.mxu0 0
    %624 = vmatprep.subr.bf16.mxu0 0
    %625 = vmatpush1.bf16.msra.mxu0 0
    %626 = vmatprep.subr.bf16.mxu0 0
    %627 = vmatpush1.bf16.msra.mxu0 0
    %628 = vmatprep.subr.bf16.mxu0 0
    %629 = vmatpush1.bf16.msra.mxu0 0
    %630 = vmatprep.subr.bf16.mxu0 0
    %631 = vmatpush1.bf16.msra.mxu0 0
    %632 = vmatprep.subr.bf16.mxu0 0
    %633 = vmatpush1.bf16.msra.mxu0 0
    %634 = vmatprep.subr.bf16.mxu0 0
    %635 = vmatpush1.bf16.msra.mxu0 0
    %636 = vmatprep.subr.bf16.mxu0 0
    %637 = vmatpush1.bf16.msra.mxu0 0
    %638 = vmatprep.subr.bf16.mxu0 0
    %639 = vmatpush1.bf16.msra.mxu0 0
    %640 = vmatprep.subr.bf16.mxu0 0
    %641 = vmatpush1.bf16.msra.mxu0 0
    %642 = vmatprep.subr.bf16.mxu0 0
    %643 = vmatpush1.bf16.msra.mxu0 0
    %644 = vmatprep.mubr.bf16.mxu0 0
    %645 = vmatmul.mubr.bf16.gmra.mrb[0].mxu0 %v610
    %v646 = vpop.f32.mrb[0].mxu0
    %v647 = vadd.f32 0.0, %v646
    %v648 = vpop.f32.mrb[0].mxu0
    %v649 = vpop.f32.mrb[0].mxu0
    %v650 = vpop.f32.mrb[0].mxu0
    %651 = vdwg.mxu0
    %v652 = vpack.c.bf16 %v647, %v647
    %s653 = scalar_lea.vmem %s7, 32
    %v654 = vld [vmem:[%s653] sm:$0xf]
    %v655 = vld [vmem:[%s653 + $0x4] sm:$0xf]
    %v656 = vld [vmem:[%s653 + $0x8] sm:$0xf]
    %v657 = vld [vmem:[%s653 + $0xc] sm:$0xf]
    %v658 = vld [vmem:[%s653 + $0x10] sm:$0xf]
    %v659 = vld [vmem:[%s653 + $0x14] sm:$0xf]
    %v660 = vld [vmem:[%s653 + $0x18] sm:$0xf]
    %v661 = vld [vmem:[%s653 + $0x1c] sm:$0xf]
    %v670 = vunpack.c.l.b16 %v654
    %v671 = vunpack.c.l.b16 %v655
    %v672 = vunpack.c.l.b16 %v656
    %v673 = vunpack.c.l.b16 %v657
    %v674 = vunpack.c.l.b16 %v658
    %v675 = vunpack.c.l.b16 %v659
    %v676 = vunpack.c.l.b16 %v660
    %v677 = vunpack.c.l.b16 %v661
    %v678 = vpack.c.b16 %v671, %v670
    %v679 = vpack.c.b16 %v673, %v672
    %v680 = vpack.c.b16 %v675, %v674
    %v681 = vpack.c.b16 %v677, %v676
    %v687 = vsel %vm296, %v652, 0
    %689 = vmatprep.subr.bf16.mxu0 0
    %690 = vmatpush1.bf16.msra.mxu0 %v678
    %691 = vmatprep.subr.bf16.mxu0 0
    %692 = vmatpush1.bf16.msra.mxu0 %v679
    %693 = vmatprep.subr.bf16.mxu0 0
    %694 = vmatpush1.bf16.msra.mxu0 %v680
    %695 = vmatprep.subr.bf16.mxu0 0
    %696 = vmatpush1.bf16.msra.mxu0 %v681
    %697 = vmatprep.subr.bf16.mxu0 0
    %698 = vmatpush1.bf16.msra.mxu0 0
    %699 = vmatprep.subr.bf16.mxu0 0
    %700 = vmatpush1.bf16.msra.mxu0 0
    %701 = vmatprep.subr.bf16.mxu0 0
    %702 = vmatpush1.bf16.msra.mxu0 0
    %703 = vmatprep.subr.bf16.mxu0 0
    %704 = vmatpush1.bf16.msra.mxu0 0
    %705 = vmatprep.subr.bf16.mxu0 0
    %706 = vmatpush1.bf16.msra.mxu0 0
    %707 = vmatprep.subr.bf16.mxu0 0
    %708 = vmatpush1.bf16.msra.mxu0 0
    %709 = vmatprep.subr.bf16.mxu0 0
    %710 = vmatpush1.bf16.msra.mxu0 0
    %711 = vmatprep.subr.bf16.mxu0 0
    %712 = vmatpush1.bf16.msra.mxu0 0
    %713 = vmatprep.subr.bf16.mxu0 0
    %714 = vmatpush1.bf16.msra.mxu0 0
    %715 = vmatprep.subr.bf16.mxu0 0
    %716 = vmatpush1.bf16.msra.mxu0 0
    %717 = vmatprep.subr.bf16.mxu0 0
    %718 = vmatpush1.bf16.msra.mxu0 0
    %719 = vmatprep.subr.bf16.mxu0 0
    %720 = vmatpush1.bf16.msra.mxu0 0
    %721 = vmatprep.mubr.bf16.mxu0 0
    %722 = vmatmul.mubr.bf16.gmra.mrb[0].mxu0 %v687
    %v723 = vpop.f32.mrb[0].mxu0
    %v724 = vadd.f32 0.0, %v723
    %v725 = vpop.f32.mrb[0].mxu0
    %v726 = vpop.f32.mrb[0].mxu0
    %v727 = vpop.f32.mrb[0].mxu0
    %728 = vdwg.mxu0
    %v737 = vunpack.c.l.b16 %v599
    %v738 = vunpack.c.l.b16 %v600
    %v739 = vunpack.c.l.b16 %v601
    %v740 = vunpack.c.l.b16 %v602
    %v741 = vunpack.c.l.b16 %v603
    %v742 = vunpack.c.l.b16 %v604
    %v743 = vunpack.c.l.b16 %v605
    %v744 = vunpack.c.l.b16 %v606
    %v745 = vpack.c.b16 %v738, %v737
    %v746 = vpack.c.b16 %v740, %v739
    %v747 = vpack.c.b16 %v742, %v741
    %v748 = vpack.c.b16 %v744, %v743
    %v754 = vsel %vm296, %v598, 0
    %756 = vmatprep.subr.bf16.mxu0 0
    %757 = vmatpush1.bf16.msra.mxu0 %v745
    %758 = vmatprep.subr.bf16.mxu0 0
    %759 = vmatpush1.bf16.msra.mxu0 %v746
    %760 = vmatprep.subr.bf16.mxu0 0
    %761 = vmatpush1.bf16.msra.mxu0 %v747
    %762 = vmatprep.subr.bf16.mxu0 0
    %763 = vmatpush1.bf16.msra.mxu0 %v748
    %764 = vmatprep.subr.bf16.mxu0 0
    %765 = vmatpush1.bf16.msra.mxu0 0
    %766 = vmatprep.subr.bf16.mxu0 0
    %767 = vmatpush1.bf16.msra.mxu0 0
    %768 = vmatprep.subr.bf16.mxu0 0
    %769 = vmatpush1.bf16.msra.mxu0 0
    %770 = vmatprep.subr.bf16.mxu0 0
    %771 = vmatpush1.bf16.msra.mxu0 0
    %772 = vmatprep.subr.bf16.mxu0 0
    %773 = vmatpush1.bf16.msra.mxu0 0
    %774 = vmatprep.subr.bf16.mxu0 0
    %775 = vmatpush1.bf16.msra.mxu0 0
    %776 = vmatprep.subr.bf16.mxu0 0
    %777 = vmatpush1.bf16.msra.mxu0 0
    %778 = vmatprep.subr.bf16.mxu0 0
    %779 = vmatpush1.bf16.msra.mxu0 0
    %780 = vmatprep.subr.bf16.mxu0 0
    %781 = vmatpush1.bf16.msra.mxu0 0
    %782 = vmatprep.subr.bf16.mxu0 0
    %783 = vmatpush1.bf16.msra.mxu0 0
    %784 = vmatprep.subr.bf16.mxu0 0
    %785 = vmatpush1.bf16.msra.mxu0 0
    %786 = vmatprep.subr.bf16.mxu0 0
    %787 = vmatpush1.bf16.msra.mxu0 0
    %788 = vmatprep.mubr.bf16.mxu0 0
    %789 = vmatmul.mubr.bf16.gmra.mrb[0].mxu0 %v754
    %v790 = vpop.f32.mrb[0].mxu0
    %v791 = vadd.f32 %v724, %v790
    %v792 = vpop.f32.mrb[0].mxu0
    %v793 = vpop.f32.mrb[0].mxu0
    %v794 = vpop.f32.mrb[0].mxu0
    %795 = vdwg.mxu0
    %s796 = scalar_lea.vmem %s6, 8
    %v797 = vld [vmem:[%s796] sm:$0xf]
    %v799 = vsel %vm554, %v797, 0
    %801 = vmatprep.subr.bf16.mxu0 0
    %802 = vmatpush1.bf16.msra.mxu0 %v552
    %803 = vmatprep.subr.bf16.mxu0 0
    %804 = vmatpush1.bf16.msra.mxu0 0
    %805 = vmatprep.subr.bf16.mxu0 0
    %806 = vmatpush1.bf16.msra.mxu0 0
    %807 = vmatprep.subr.bf16.mxu0 0
    %808 = vmatpush1.bf16.msra.mxu0 0
    %809 = vmatprep.subr.bf16.mxu0 0
    %810 = vmatpush1.bf16.msra.mxu0 0
    %811 = vmatprep.subr.bf16.mxu0 0
    %812 = vmatpush1.bf16.msra.mxu0 0
    %813 = vmatprep.subr.bf16.mxu0 0
    %814 = vmatpush1.bf16.msra.mxu0 0
    %815 = vmatprep.subr.bf16.mxu0 0
    %816 = vmatpush1.bf16.msra.mxu0 0
    %817 = vmatprep.subr.bf16.mxu0 0
    %818 = vmatpush1.bf16.msra.mxu0 0
    %819 = vmatprep.subr.bf16.mxu0 0
    %820 = vmatpush1.bf16.msra.mxu0 0
    %821 = vmatprep.subr.bf16.mxu0 0
    %822 = vmatpush1.bf16.msra.mxu0 0
    %823 = vmatprep.subr.bf16.mxu0 0
    %824 = vmatpush1.bf16.msra.mxu0 0
    %825 = vmatprep.subr.bf16.mxu0 0
    %826 = vmatpush1.bf16.msra.mxu0 0
    %827 = vmatprep.subr.bf16.mxu0 0
    %828 = vmatpush1.bf16.msra.mxu0 0
    %829 = vmatprep.subr.bf16.mxu0 0
    %830 = vmatpush1.bf16.msra.mxu0 0
    %831 = vmatprep.subr.bf16.mxu0 0
    %832 = vmatpush1.bf16.msra.mxu0 0
    %833 = vmatprep.mubr.bf16.mxu0 0
    %834 = vmatmul.mubr.bf16.gmra.mrb[0].mxu0 %v799
    %v835 = vpop.f32.mrb[0].mxu0
    %v836 = vadd.f32 0.0, %v835
    %v837 = vpop.f32.mrb[0].mxu0
    %v838 = vpop.f32.mrb[0].mxu0
    %v839 = vpop.f32.mrb[0].mxu0
    %840 = vdwg.mxu0
    %v841 = vpack.c.bf16 %v836, %v836
    %s842 = scalar_lea.vmem %s7, 64
    %v843 = vld [vmem:[%s842] sm:$0xf]
    %v844 = vld [vmem:[%s842 + $0x4] sm:$0xf]
    %v845 = vld [vmem:[%s842 + $0x8] sm:$0xf]
    %v846 = vld [vmem:[%s842 + $0xc] sm:$0xf]
    %v847 = vld [vmem:[%s842 + $0x10] sm:$0xf]
    %v848 = vld [vmem:[%s842 + $0x14] sm:$0xf]
    %v849 = vld [vmem:[%s842 + $0x18] sm:$0xf]
    %v850 = vld [vmem:[%s842 + $0x1c] sm:$0xf]
    %v859 = vunpack.c.l.b16 %v843
    %v860 = vunpack.c.l.b16 %v844
    %v861 = vunpack.c.l.b16 %v845
    %v862 = vunpack.c.l.b16 %v846
    %v863 = vunpack.c.l.b16 %v847
    %v864 = vunpack.c.l.b16 %v848
    %v865 = vunpack.c.l.b16 %v849
    %v866 = vunpack.c.l.b16 %v850
    %v867 = vpack.c.b16 %v860, %v859
    %v868 = vpack.c.b16 %v862, %v861
    %v869 = vpack.c.b16 %v864, %v863
    %v870 = vpack.c.b16 %v866, %v865
    %v876 = vsel %vm296, %v841, 0
    %878 = vmatprep.subr.bf16.mxu0 0
    %879 = vmatpush1.bf16.msra.mxu0 %v867
    %880 = vmatprep.subr.bf16.mxu0 0
    %881 = vmatpush1.bf16.msra.mxu0 %v868
    %882 = vmatprep.subr.bf16.mxu0 0
    %883 = vmatpush1.bf16.msra.mxu0 %v869
    %884 = vmatprep.subr.bf16.mxu0 0
    %885 = vmatpush1.bf16.msra.mxu0 %v870
    %886 = vmatprep.subr.bf16.mxu0 0
    %887 = vmatpush1.bf16.msra.mxu0 0
    %888 = vmatprep.subr.bf16.mxu0 0
    %889 = vmatpush1.bf16.msra.mxu0 0
    %890 = vmatprep.subr.bf16.mxu0 0
    %891 = vmatpush1.bf16.msra.mxu0 0
    %892 = vmatprep.subr.bf16.mxu0 0
    %893 = vmatpush1.bf16.msra.mxu0 0
    %894 = vmatprep.subr.bf16.mxu0 0
    %895 = vmatpush1.bf16.msra.mxu0 0
    %896 = vmatprep.subr.bf16.mxu0 0
    %897 = vmatpush1.bf16.msra.mxu0 0
    %898 = vmatprep.subr.bf16.mxu0 0
    %899 = vmatpush1.bf16.msra.mxu0 0
    %900 = vmatprep.subr.bf16.mxu0 0
    %901 = vmatpush1.bf16.msra.mxu0 0
    %902 = vmatprep.subr.bf16.mxu0 0
    %903 = vmatpush1.bf16.msra.mxu0 0
    %904 = vmatprep.subr.bf16.mxu0 0
    %905 = vmatpush1.bf16.msra.mxu0 0
    %906 = vmatprep.subr.bf16.mxu0 0
    %907 = vmatpush1.bf16.msra.mxu0 0
    %908 = vmatprep.subr.bf16.mxu0 0
    %909 = vmatpush1.bf16.msra.mxu0 0
    %910 = vmatprep.mubr.bf16.mxu0 0
    %911 = vmatmul.mubr.bf16.gmra.mrb[0].mxu0 %v876
    %v912 = vpop.f32.mrb[0].mxu0
    %v913 = vadd.f32 0.0, %v912
    %v914 = vpop.f32.mrb[0].mxu0
    %v915 = vpop.f32.mrb[0].mxu0
    %v916 = vpop.f32.mrb[0].mxu0
    %917 = vdwg.mxu0
    %v918 = vadd.f32 %v791, %v913
    %v919 = vld [vmem:[#allocation2] sm:$0x1]
    %v921 = vlaneseq
    %v922 = vshrl.u32 %v921, 7
    %v923 = vsub.s32 0, %v922
    %v924 = vrot.slane %v919, %v923
    %v926 = vadd.f32 %v918, %v924
    %v927 = vmax.f32 %v926, 0.0
    %v928 = vpack.c.bf16 %v927, %v927
    %v929 = vld [vmem:[#allocation4] sm:$0x1]
    %vm930 = vcmask 64512
    %v932 = vsel %vm930, %v929, 0
    %vm934 = vcmask 1043456
    %v936 = vsel %vm934, %v928, 0
    %938 = vmatprep.subr.bf16.mxu0 0
    %939 = vmatpush1.bf16.msra.mxu0 %v936
    %940 = vmatprep.subr.bf16.mxu0 0
    %941 = vmatpush1.bf16.msra.mxu0 0
    %942 = vmatprep.subr.bf16.mxu0 0
    %943 = vmatpush1.bf16.msra.mxu0 0
    %944 = vmatprep.subr.bf16.mxu0 0
    %945 = vmatpush1.bf16.msra.mxu0 0
    %946 = vmatprep.subr.bf16.mxu0 0
    %947 = vmatpush1.bf16.msra.mxu0 0
    %948 = vmatprep.subr.bf16.mxu0 0
    %949 = vmatpush1.bf16.msra.mxu0 0
    %950 = vmatprep.subr.bf16.mxu0 0
    %951 = vmatpush1.bf16.msra.mxu0 0
    %952 = vmatprep.subr.bf16.mxu0 0
    %953 = vmatpush1.bf16.msra.mxu0 0
    %954 = vmatprep.subr.bf16.mxu0 0
    %955 = vmatpush1.bf16.msra.mxu0 0
    %956 = vmatprep.subr.bf16.mxu0 0
    %957 = vmatpush1.bf16.msra.mxu0 0
    %958 = vmatprep.subr.bf16.mxu0 0
    %959 = vmatpush1.bf16.msra.mxu0 0
    %960 = vmatprep.subr.bf16.mxu0 0
    %961 = vmatpush1.bf16.msra.mxu0 0
    %962 = vmatprep.subr.bf16.mxu0 0
    %963 = vmatpush1.bf16.msra.mxu0 0
    %964 = vmatprep.subr.bf16.mxu0 0
    %965 = vmatpush1.bf16.msra.mxu0 0
    %966 = vmatprep.subr.bf16.mxu0 0
    %967 = vmatpush1.bf16.msra.mxu0 0
    %968 = vmatprep.subr.bf16.mxu0 0
    %969 = vmatpush1.bf16.msra.mxu0 0
    %970 = vmatprep.mubr.bf16.mxu0 0
    %971 = vmatmul.mubr.bf16.gmra.mrb[0].mxu0 %v932
    %v972 = vpop.f32.mrb[0].mxu0
    %v973 = vadd.f32 0.0, %v972
    %v974 = vpop.f32.mrb[0].mxu0
    %v975 = vpop.f32.mrb[0].mxu0
    %v976 = vpop.f32.mrb[0].mxu0
    %977 = vdwg.mxu0
    %v978 = vpack.c.bf16 %v973, %v973
    %v979 = vld [vmem:[%s10] sm:$0xf]
    %v980 = vld [vmem:[%s10 + $0x4] sm:$0xf]
    %v981 = vld [vmem:[%s10 + $0x8] sm:$0xf]
    %v982 = vld [vmem:[%s10 + $0xc] sm:$0xf]
    %v983 = vld [vmem:[%s10 + $0x10] sm:$0xf]
    %v984 = vld [vmem:[%s10 + $0x14] sm:$0xf]
    %v985 = vld [vmem:[%s10 + $0x18] sm:$0xf]
    %v986 = vld [vmem:[%s10 + $0x1c] sm:$0xf]
    %s987 = scalar_lea.vmem [#allocation4], 1
    %v988 = vld [vmem:[%s987] sm:$0x1]
    %v990 = vsel %vm930, %v988, 0
    %992 = vmatprep.subr.bf16.mxu0 0
    %993 = vmatpush1.bf16.msra.mxu0 %v936
    %994 = vmatprep.subr.bf16.mxu0 0
    %995 = vmatpush1.bf16.msra.mxu0 0
    %996 = vmatprep.subr.bf16.mxu0 0
    %997 = vmatpush1.bf16.msra.mxu0 0
    %998 = vmatprep.subr.bf16.mxu0 0
    %999 = vmatpush1.bf16.msra.mxu0 0
    %1000 = vmatprep.subr.bf16.mxu0 0
    %1001 = vmatpush1.bf16.msra.mxu0 0
    %1002 = vmatprep.subr.bf16.mxu0 0
    %1003 = vmatpush1.bf16.msra.mxu0 0
    %1004 = vmatprep.subr.bf16.mxu0 0
    %1005 = vmatpush1.bf16.msra.mxu0 0
    %1006 = vmatprep.subr.bf16.mxu0 0
    %1007 = vmatpush1.bf16.msra.mxu0 0
    %1008 = vmatprep.subr.bf16.mxu0 0
    %1009 = vmatpush1.bf16.msra.mxu0 0
    %1010 = vmatprep.subr.bf16.mxu0 0
    %1011 = vmatpush1.bf16.msra.mxu0 0
    %1012 = vmatprep.subr.bf16.mxu0 0
    %1013 = vmatpush1.bf16.msra.mxu0 0
    %1014 = vmatprep.subr.bf16.mxu0 0
    %1015 = vmatpush1.bf16.msra.mxu0 0
    %1016 = vmatprep.subr.bf16.mxu0 0
    %1017 = vmatpush1.bf16.msra.mxu0 0
    %1018 = vmatprep.subr.bf16.mxu0 0
    %1019 = vmatpush1.bf16.msra.mxu0 0
    %1020 = vmatprep.subr.bf16.mxu0 0
    %1021 = vmatpush1.bf16.msra.mxu0 0
    %1022 = vmatprep.subr.bf16.mxu0 0
    %1023 = vmatpush1.bf16.msra.mxu0 0
    %1024 = vmatprep.mubr.bf16.mxu0 0
    %1025 = vmatmul.mubr.bf16.gmra.mrb[0].mxu0 %v990
    %v1026 = vpop.f32.mrb[0].mxu0
    %v1027 = vadd.f32 0.0, %v1026
    %v1028 = vpop.f32.mrb[0].mxu0
    %v1029 = vpop.f32.mrb[0].mxu0
    %v1030 = vpop.f32.mrb[0].mxu0
    %1031 = vdwg.mxu0
    %v1032 = vpack.c.bf16 %v1027, %v1027
    %s1033 = scalar_lea.vmem %s10, 32
    %v1034 = vld [vmem:[%s1033] sm:$0xf]
    %v1035 = vld [vmem:[%s1033 + $0x4] sm:$0xf]
    %v1036 = vld [vmem:[%s1033 + $0x8] sm:$0xf]
    %v1037 = vld [vmem:[%s1033 + $0xc] sm:$0xf]
    %v1038 = vld [vmem:[%s1033 + $0x10] sm:$0xf]
    %v1039 = vld [vmem:[%s1033 + $0x14] sm:$0xf]
    %v1040 = vld [vmem:[%s1033 + $0x18] sm:$0xf]
    %v1041 = vld [vmem:[%s1033 + $0x1c] sm:$0xf]
    %v1050 = vunpack.c.l.b16 %v1034
    %v1051 = vunpack.c.l.b16 %v1035
    %v1052 = vunpack.c.l.b16 %v1036
    %v1053 = vunpack.c.l.b16 %v1037
    %v1054 = vunpack.c.l.b16 %v1038
    %v1055 = vunpack.c.l.b16 %v1039
    %v1056 = vunpack.c.l.b16 %v1040
    %v1057 = vunpack.c.l.b16 %v1041
    %v1058 = vpack.c.b16 %v1051, %v1050
    %v1059 = vpack.c.b16 %v1053, %v1052
    %v1060 = vpack.c.b16 %v1055, %v1054
    %v1061 = vpack.c.b16 %v1057, %v1056
    %v1067 = vsel %vm296, %v1032, 0
    %1069 = vmatprep.subr.bf16.mxu0 0
    %1070 = vmatpush1.bf16.msra.mxu0 %v1058
    %1071 = vmatprep.subr.bf16.mxu0 0
    %1072 = vmatpush1.bf16.msra.mxu0 %v1059
    %1073 = vmatprep.subr.bf16.mxu0 0
    %1074 = vmatpush1.bf16.msra.mxu0 %v1060
    %1075 = vmatprep.subr.bf16.mxu0 0
    %1076 = vmatpush1.bf16.msra.mxu0 %v1061
    %1077 = vmatprep.subr.bf16.mxu0 0
    %1078 = vmatpush1.bf16.msra.mxu0 0
    %1079 = vmatprep.subr.bf16.mxu0 0
    %1080 = vmatpush1.bf16.msra.mxu0 0
    %1081 = vmatprep.subr.bf16.mxu0 0
    %1082 = vmatpush1.bf16.msra.mxu0 0
    %1083 = vmatprep.subr.bf16.mxu0 0
    %1084 = vmatpush1.bf16.msra.mxu0 0
    %1085 = vmatprep.subr.bf16.mxu0 0
    %1086 = vmatpush1.bf16.msra.mxu0 0
    %1087 = vmatprep.subr.bf16.mxu0 0
    %1088 = vmatpush1.bf16.msra.mxu0 0
    %1089 = vmatprep.subr.bf16.mxu0 0
    %1090 = vmatpush1.bf16.msra.mxu0 0
    %1091 = vmatprep.subr.bf16.mxu0 0
    %1092 = vmatpush1.bf16.msra.mxu0 0
    %1093 = vmatprep.subr.bf16.mxu0 0
    %1094 = vmatpush1.bf16.msra.mxu0 0
    %1095 = vmatprep.subr.bf16.mxu0 0
    %1096 = vmatpush1.bf16.msra.mxu0 0
    %1097 = vmatprep.subr.bf16.mxu0 0
    %1098 = vmatpush1.bf16.msra.mxu0 0
    %1099 = vmatprep.subr.bf16.mxu0 0
    %1100 = vmatpush1.bf16.msra.mxu0 0
    %1101 = vmatprep.mubr.bf16.mxu0 0
    %1102 = vmatmul.mubr.bf16.gmra.mrb[0].mxu0 %v1067
    %v1103 = vpop.f32.mrb[0].mxu0
    %v1104 = vadd.f32 0.0, %v1103
    %v1105 = vpop.f32.mrb[0].mxu0
    %v1106 = vpop.f32.mrb[0].mxu0
    %v1107 = vpop.f32.mrb[0].mxu0
    %1108 = vdwg.mxu0
    %v1117 = vunpack.c.l.b16 %v979
    %v1118 = vunpack.c.l.b16 %v980
    %v1119 = vunpack.c.l.b16 %v981
    %v1120 = vunpack.c.l.b16 %v982
    %v1121 = vunpack.c.l.b16 %v983
    %v1122 = vunpack.c.l.b16 %v984
    %v1123 = vunpack.c.l.b16 %v985
    %v1124 = vunpack.c.l.b16 %v986
    %v1125 = vpack.c.b16 %v1118, %v1117
    %v1126 = vpack.c.b16 %v1120, %v1119
    %v1127 = vpack.c.b16 %v1122, %v1121
    %v1128 = vpack.c.b16 %v1124, %v1123
    %v1134 = vsel %vm296, %v978, 0
    %1136 = vmatprep.subr.bf16.mxu0 0
    %1137 = vmatpush1.bf16.msra.mxu0 %v1125
    %1138 = vmatprep.subr.bf16.mxu0 0
    %1139 = vmatpush1.bf16.msra.mxu0 %v1126
    %1140 = vmatprep.subr.bf16.mxu0 0
    %1141 = vmatpush1.bf16.msra.mxu0 %v1127
    %1142 = vmatprep.subr.bf16.mxu0 0
    %1143 = vmatpush1.bf16.msra.mxu0 %v1128
    %1144 = vmatprep.subr.bf16.mxu0 0
    %1145 = vmatpush1.bf16.msra.mxu0 0
    %1146 = vmatprep.subr.bf16.mxu0 0
    %1147 = vmatpush1.bf16.msra.mxu0 0
    %1148 = vmatprep.subr.bf16.mxu0 0
    %1149 = vmatpush1.bf16.msra.mxu0 0
    %1150 = vmatprep.subr.bf16.mxu0 0
    %1151 = vmatpush1.bf16.msra.mxu0 0
    %1152 = vmatprep.subr.bf16.mxu0 0
    %1153 = vmatpush1.bf16.msra.mxu0 0
    %1154 = vmatprep.subr.bf16.mxu0 0
    %1155 = vmatpush1.bf16.msra.mxu0 0
    %1156 = vmatprep.subr.bf16.mxu0 0
    %1157 = vmatpush1.bf16.msra.mxu0 0
    %1158 = vmatprep.subr.bf16.mxu0 0
    %1159 = vmatpush1.bf16.msra.mxu0 0
    %1160 = vmatprep.subr.bf16.mxu0 0
    %1161 = vmatpush1.bf16.msra.mxu0 0
    %1162 = vmatprep.subr.bf16.mxu0 0
    %1163 = vmatpush1.bf16.msra.mxu0 0
    %1164 = vmatprep.subr.bf16.mxu0 0
    %1165 = vmatpush1.bf16.msra.mxu0 0
    %1166 = vmatprep.subr.bf16.mxu0 0
    %1167 = vmatpush1.bf16.msra.mxu0 0
    %1168 = vmatprep.mubr.bf16.mxu0 0
    %1169 = vmatmul.mubr.bf16.gmra.mrb[0].mxu0 %v1134
    %v1170 = vpop.f32.mrb[0].mxu0
    %v1171 = vadd.f32 %v1104, %v1170
    %v1172 = vpop.f32.mrb[0].mxu0
    %v1173 = vpop.f32.mrb[0].mxu0
    %v1174 = vpop.f32.mrb[0].mxu0
    %1175 = vdwg.mxu0
    %s1176 = scalar_lea.vmem [#allocation4], 2
    %v1177 = vld [vmem:[%s1176] sm:$0x1]
    %v1179 = vsel %vm930, %v1177, 0
    %1181 = vmatprep.subr.bf16.mxu0 0
    %1182 = vmatpush1.bf16.msra.mxu0 %v936
    %1183 = vmatprep.subr.bf16.mxu0 0
    %1184 = vmatpush1.bf16.msra.mxu0 0
    %1185 = vmatprep.subr.bf16.mxu0 0
    %1186 = vmatpush1.bf16.msra.mxu0 0
    %1187 = vmatprep.subr.bf16.mxu0 0
    %1188 = vmatpush1.bf16.msra.mxu0 0
    %1189 = vmatprep.subr.bf16.mxu0 0
    %1190 = vmatpush1.bf16.msra.mxu0 0
    %1191 = vmatprep.subr.bf16.mxu0 0
    %1192 = vmatpush1.bf16.msra.mxu0 0
    %1193 = vmatprep.subr.bf16.mxu0 0
    %1194 = vmatpush1.bf16.msra.mxu0 0
    %1195 = vmatprep.subr.bf16.mxu0 0
    %1196 = vmatpush1.bf16.msra.mxu0 0
    %1197 = vmatprep.subr.bf16.mxu0 0
    %1198 = vmatpush1.bf16.msra.mxu0 0
    %1199 = vmatprep.subr.bf16.mxu0 0
    %1200 = vmatpush1.bf16.msra.mxu0 0
    %1201 = vmatprep.subr.bf16.mxu0 0
    %1202 = vmatpush1.bf16.msra.mxu0 0
    %1203 = vmatprep.subr.bf16.mxu0 0
    %1204 = vmatpush1.bf16.msra.mxu0 0
    %1205 = vmatprep.subr.bf16.mxu0 0
    %1206 = vmatpush1.bf16.msra.mxu0 0
    %1207 = vmatprep.subr.bf16.mxu0 0
    %1208 = vmatpush1.bf16.msra.mxu0 0
    %1209 = vmatprep.subr.bf16.mxu0 0
    %1210 = vmatpush1.bf16.msra.mxu0 0
    %1211 = vmatprep.subr.bf16.mxu0 0
    %1212 = vmatpush1.bf16.msra.mxu0 0
    %1213 = vmatprep.mubr.bf16.mxu0 0
    %1214 = vmatmul.mubr.bf16.gmra.mrb[0].mxu0 %v1179
    %v1215 = vpop.f32.mrb[0].mxu0
    %v1216 = vadd.f32 0.0, %v1215
    %v1217 = vpop.f32.mrb[0].mxu0
    %v1218 = vpop.f32.mrb[0].mxu0
    %v1219 = vpop.f32.mrb[0].mxu0
    %1220 = vdwg.mxu0
    %v1221 = vpack.c.bf16 %v1216, %v1216
    %s1222 = scalar_lea.vmem %s10, 64
    %v1223 = vld [vmem:[%s1222] sm:$0xf]
    %v1224 = vld [vmem:[%s1222 + $0x4] sm:$0xf]
    %v1225 = vld [vmem:[%s1222 + $0x8] sm:$0xf]
    %v1226 = vld [vmem:[%s1222 + $0xc] sm:$0xf]
    %v1227 = vld [vmem:[%s1222 + $0x10] sm:$0xf]
    %v1228 = vld [vmem:[%s1222 + $0x14] sm:$0xf]
    %v1229 = vld [vmem:[%s1222 + $0x18] sm:$0xf]
    %v1230 = vld [vmem:[%s1222 + $0x1c] sm:$0xf]
    %v1239 = vunpack.c.l.b16 %v1223
    %v1240 = vunpack.c.l.b16 %v1224
    %v1241 = vunpack.c.l.b16 %v1225
    %v1242 = vunpack.c.l.b16 %v1226
    %v1243 = vunpack.c.l.b16 %v1227
    %v1244 = vunpack.c.l.b16 %v1228
    %v1245 = vunpack.c.l.b16 %v1229
    %v1246 = vunpack.c.l.b16 %v1230
    %v1247 = vpack.c.b16 %v1240, %v1239
    %v1248 = vpack.c.b16 %v1242, %v1241
    %v1249 = vpack.c.b16 %v1244, %v1243
    %v1250 = vpack.c.b16 %v1246, %v1245
    %v1256 = vsel %vm296, %v1221, 0
    %1258 = vmatprep.subr.bf16.mxu0 0
    %1259 = vmatpush1.bf16.msra.mxu0 %v1247
    %1260 = vmatprep.subr.bf16.mxu0 0
    %1261 = vmatpush1.bf16.msra.mxu0 %v1248
    %1262 = vmatprep.subr.bf16.mxu0 0
    %1263 = vmatpush1.bf16.msra.mxu0 %v1249
    %1264 = vmatprep.subr.bf16.mxu0 0
    %1265 = vmatpush1.bf16.msra.mxu0 %v1250
    %1266 = vmatprep.subr.bf16.mxu0 0
    %1267 = vmatpush1.bf16.msra.mxu0 0
    %1268 = vmatprep.subr.bf16.mxu0 0
    %1269 = vmatpush1.bf16.msra.mxu0 0
    %1270 = vmatprep.subr.bf16.mxu0 0
    %1271 = vmatpush1.bf16.msra.mxu0 0
    %1272 = vmatprep.subr.bf16.mxu0 0
    %1273 = vmatpush1.bf16.msra.mxu0 0
    %1274 = vmatprep.subr.bf16.mxu0 0
    %1275 = vmatpush1.bf16.msra.mxu0 0
    %1276 = vmatprep.subr.bf16.mxu0 0
    %1277 = vmatpush1.bf16.msra.mxu0 0
    %1278 = vmatprep.subr.bf16.mxu0 0
    %1279 = vmatpush1.bf16.msra.mxu0 0
    %1280 = vmatprep.subr.bf16.mxu0 0
    %1281 = vmatpush1.bf16.msra.mxu0 0
    %1282 = vmatprep.subr.bf16.mxu0 0
    %1283 = vmatpush1.bf16.msra.mxu0 0
    %1284 = vmatprep.subr.bf16.mxu0 0
    %1285 = vmatpush1.bf16.msra.mxu0 0
    %1286 = vmatprep.subr.bf16.mxu0 0
    %1287 = vmatpush1.bf16.msra.mxu0 0
    %1288 = vmatprep.subr.bf16.mxu0 0
    %1289 = vmatpush1.bf16.msra.mxu0 0
    %1290 = vmatprep.mubr.bf16.mxu0 0
    %1291 = vmatmul.mubr.bf16.gmra.mrb[0].mxu0 %v1256
    %v1292 = vpop.f32.mrb[0].mxu0
    %v1293 = vadd.f32 0.0, %v1292
    %v1294 = vpop.f32.mrb[0].mxu0
    %v1295 = vpop.f32.mrb[0].mxu0
    %v1296 = vpop.f32.mrb[0].mxu0
    %1297 = vdwg.mxu0
    %v1298 = vadd.f32 %v1171, %v1293
    %s1299 = scalar_lea.vmem [#allocation4], 3
    %v1300 = vld [vmem:[%s1299] sm:$0x1]
    %v1302 = vsel %vm930, %v1300, 0
    %1304 = vmatprep.subr.bf16.mxu0 0
    %1305 = vmatpush1.bf16.msra.mxu0 %v936
    %1306 = vmatprep.subr.bf16.mxu0 0
    %1307 = vmatpush1.bf16.msra.mxu0 0
    %1308 = vmatprep.subr.bf16.mxu0 0
    %1309 = vmatpush1.bf16.msra.mxu0 0
    %1310 = vmatprep.subr.bf16.mxu0 0
    %1311 = vmatpush1.bf16.msra.mxu0 0
    %1312 = vmatprep.subr.bf16.mxu0 0
    %1313 = vmatpush1.bf16.msra.mxu0 0
    %1314 = vmatprep.subr.bf16.mxu0 0
    %1315 = vmatpush1.bf16.msra.mxu0 0
    %1316 = vmatprep.subr.bf16.mxu0 0
    %1317 = vmatpush1.bf16.msra.mxu0 0
    %1318 = vmatprep.subr.bf16.mxu0 0
    %1319 = vmatpush1.bf16.msra.mxu0 0
    %1320 = vmatprep.subr.bf16.mxu0 0
    %1321 = vmatpush1.bf16.msra.mxu0 0
    %1322 = vmatprep.subr.bf16.mxu0 0
    %1323 = vmatpush1.bf16.msra.mxu0 0
    %1324 = vmatprep.subr.bf16.mxu0 0
    %1325 = vmatpush1.bf16.msra.mxu0 0
    %1326 = vmatprep.subr.bf16.mxu0 0
    %1327 = vmatpush1.bf16.msra.mxu0 0
    %1328 = vmatprep.subr.bf16.mxu0 0
    %1329 = vmatpush1.bf16.msra.mxu0 0
    %1330 = vmatprep.subr.bf16.mxu0 0
    %1331 = vmatpush1.bf16.msra.mxu0 0
    %1332 = vmatprep.subr.bf16.mxu0 0
    %1333 = vmatpush1.bf16.msra.mxu0 0
    %1334 = vmatprep.subr.bf16.mxu0 0
    %1335 = vmatpush1.bf16.msra.mxu0 0
    %1336 = vmatprep.mubr.bf16.mxu0 0
    %1337 = vmatmul.mubr.bf16.gmra.mrb[0].mxu0 %v1302
    %v1338 = vpop.f32.mrb[0].mxu0
    %v1339 = vadd.f32 0.0, %v1338
    %v1340 = vpop.f32.mrb[0].mxu0
    %v1341 = vpop.f32.mrb[0].mxu0
    %v1342 = vpop.f32.mrb[0].mxu0
    %1343 = vdwg.mxu0
    %v1344 = vpack.c.bf16 %v1339, %v1339
    %s1345 = scalar_lea.vmem %s10, 96
    %v1346 = vld [vmem:[%s1345] sm:$0xf]
    %v1347 = vld [vmem:[%s1345 + $0x4] sm:$0xf]
    %v1348 = vld [vmem:[%s1345 + $0x8] sm:$0xf]
    %v1349 = vld [vmem:[%s1345 + $0xc] sm:$0xf]
    %v1350 = vld [vmem:[%s1345 + $0x10] sm:$0xf]
    %v1351 = vld [vmem:[%s1345 + $0x14] sm:$0xf]
    %v1352 = vld [vmem:[%s1345 + $0x18] sm:$0xf]
    %v1353 = vld [vmem:[%s1345 + $0x1c] sm:$0xf]
    %v1362 = vunpack.c.l.b16 %v1346
    %v1363 = vunpack.c.l.b16 %v1347
    %v1364 = vunpack.c.l.b16 %v1348
    %v1365 = vunpack.c.l.b16 %v1349
    %v1366 = vunpack.c.l.b16 %v1350
    %v1367 = vunpack.c.l.b16 %v1351
    %v1368 = vunpack.c.l.b16 %v1352
    %v1369 = vunpack.c.l.b16 %v1353
    %v1370 = vpack.c.b16 %v1363, %v1362
    %v1371 = vpack.c.b16 %v1365, %v1364
    %v1372 = vpack.c.b16 %v1367, %v1366
    %v1373 = vpack.c.b16 %v1369, %v1368
    %v1379 = vsel %vm296, %v1344, 0
    %1381 = vmatprep.subr.bf16.mxu0 0
    %1382 = vmatpush1.bf16.msra.mxu0 %v1370
    %1383 = vmatprep.subr.bf16.mxu0 0
    %1384 = vmatpush1.bf16.msra.mxu0 %v1371
    %1385 = vmatprep.subr.bf16.mxu0 0
    %1386 = vmatpush1.bf16.msra.mxu0 %v1372
    %1387 = vmatprep.subr.bf16.mxu0 0
    %1388 = vmatpush1.bf16.msra.mxu0 %v1373
    %1389 = vmatprep.subr.bf16.mxu0 0
    %1390 = vmatpush1.bf16.msra.mxu0 0
    %1391 = vmatprep.subr.bf16.mxu0 0
    %1392 = vmatpush1.bf16.msra.mxu0 0
    %1393 = vmatprep.subr.bf16.mxu0 0
    %1394 = vmatpush1.bf16.msra.mxu0 0
    %1395 = vmatprep.subr.bf16.mxu0 0
    %1396 = vmatpush1.bf16.msra.mxu0 0
    %1397 = vmatprep.subr.bf16.mxu0 0
    %1398 = vmatpush1.bf16.msra.mxu0 0
    %1399 = vmatprep.subr.bf16.mxu0 0
    %1400 = vmatpush1.bf16.msra.mxu0 0
    %1401 = vmatprep.subr.bf16.mxu0 0
    %1402 = vmatpush1.bf16.msra.mxu0 0
    %1403 = vmatprep.subr.bf16.mxu0 0
    %1404 = vmatpush1.bf16.msra.mxu0 0
    %1405 = vmatprep.subr.bf16.mxu0 0
    %1406 = vmatpush1.bf16.msra.mxu0 0
    %1407 = vmatprep.subr.bf16.mxu0 0
    %1408 = vmatpush1.bf16.msra.mxu0 0
    %1409 = vmatprep.subr.bf16.mxu0 0
    %1410 = vmatpush1.bf16.msra.mxu0 0
    %1411 = vmatprep.subr.bf16.mxu0 0
    %1412 = vmatpush1.bf16.msra.mxu0 0
    %1413 = vmatprep.mubr.bf16.mxu0 0
    %1414 = vmatmul.mubr.bf16.gmra.mrb[0].mxu0 %v1379
    %v1415 = vpop.f32.mrb[0].mxu0
    %v1416 = vadd.f32 0.0, %v1415
    %v1417 = vpop.f32.mrb[0].mxu0
    %v1418 = vpop.f32.mrb[0].mxu0
    %v1419 = vpop.f32.mrb[0].mxu0
    %1420 = vdwg.mxu0
    %v1421 = vadd.f32 %v1298, %v1416
    %v1422 = vld [vmem:[#allocation6] sm:$0x1]
    %v1424 = vlaneseq
    %v1425 = vshrl.u32 %v1424, 7
    %v1426 = vsub.s32 0, %v1425
    %v1427 = vrot.slane %v1422, %v1426
    %v1429 = vadd.f32 %v1421, %v1427
    %vm1430 = vcmask 517120
    %1431 = vst.msk [vmem:[%s22] sm:$0x3] %vm1430, %v1429
    %v1432 = vld [vmem:[%s2] sm:$0xff]
    %v1433 = vld [vmem:[%s2 + $0x8] sm:$0xff]
    %v1434 = vld [vmem:[%s2 + $0x10] sm:$0xff]
    %v1435 = vld [vmem:[%s2 + $0x18] sm:$0xff]
    %v1436 = vld [vmem:[%s2 + $0x20] sm:$0xff]
    %v1437 = vld [vmem:[%s2 + $0x28] sm:$0xff]
    %v1438 = vld [vmem:[%s2 + $0x30] sm:$0xff]
    %v1439 = vld [vmem:[%s2 + $0x38] sm:$0xff]
    %v1441 = vsel %vm296, %v1429, 0
    %1443 = vmatprep.subr.mxu0 0.0
    %1444 = vmatpush1.msra.mxu0 %v1432
    %1445 = vmatprep.subr.mxu0 0.0
    %1446 = vmatpush1.msra.mxu0 %v1433
    %1447 = vmatprep.subr.mxu0 0.0
    %1448 = vmatpush1.msra.mxu0 %v1434
    %1449 = vmatprep.subr.mxu0 0.0
    %1450 = vmatpush1.msra.mxu0 %v1435
    %1451 = vmatprep.subr.mxu0 0.0
    %1452 = vmatpush1.msra.mxu0 %v1436
    %1453 = vmatprep.subr.mxu0 0.0
    %1454 = vmatpush1.msra.mxu0 %v1437
    %1455 = vmatprep.subr.mxu0 0.0
    %1456 = vmatpush1.msra.mxu0 %v1438
    %1457 = vmatprep.subr.mxu0 0.0
    %1458 = vmatpush1.msra.mxu0 %v1439
    %1459 = vmatprep.subr.mxu0 0.0
    %1460 = vmatpush1.msra.mxu0 0.0
    %1461 = vmatprep.subr.mxu0 0.0
    %1462 = vmatpush1.msra.mxu0 0.0
    %1463 = vmatprep.subr.mxu0 0.0
    %1464 = vmatpush1.msra.mxu0 0.0
    %1465 = vmatprep.subr.mxu0 0.0
    %1466 = vmatpush1.msra.mxu0 0.0
    %1467 = vmatprep.subr.mxu0 0.0
    %1468 = vmatpush1.msra.mxu0 0.0
    %1469 = vmatprep.subr.mxu0 0.0
    %1470 = vmatpush1.msra.mxu0 0.0
    %1471 = vmatprep.subr.mxu0 0.0
    %1472 = vmatpush1.msra.mxu0 0.0
    %1473 = vmatprep.subr.mxu0 0.0
    %1474 = vmatpush1.msra.mxu0 0.0
    %1475 = vmatprep.subr.mxu0 0.0
    %1476 = vmatpush1.msra.mxu0 0.0
    %1477 = vmatprep.subr.mxu0 0.0
    %1478 = vmatpush1.msra.mxu0 0.0
    %1479 = vmatprep.subr.mxu0 0.0
    %1480 = vmatpush1.msra.mxu0 0.0
    %1481 = vmatprep.subr.mxu0 0.0
    %1482 = vmatpush1.msra.mxu0 0.0
    %1483 = vmatprep.subr.mxu0 0.0
    %1484 = vmatpush1.msra.mxu0 0.0
    %1485 = vmatprep.subr.mxu0 0.0
    %1486 = vmatpush1.msra.mxu0 0.0
    %1487 = vmatprep.subr.mxu0 0.0
    %1488 = vmatpush1.msra.mxu0 0.0
    %1489 = vmatprep.subr.mxu0 0.0
    %1490 = vmatpush1.msra.mxu0 0.0
    %1491 = vmatprep.subr.mxu0 0.0
    %1492 = vmatpush1.msra.mxu0 0.0
    %1493 = vmatprep.subr.mxu0 0.0
    %1494 = vmatpush1.msra.mxu0 0.0
    %1495 = vmatprep.subr.mxu0 0.0
    %1496 = vmatpush1.msra.mxu0 0.0
    %1497 = vmatprep.subr.mxu0 0.0
    %1498 = vmatpush1.msra.mxu0 0.0
    %1499 = vmatprep.subr.mxu0 0.0
    %1500 = vmatpush1.msra.mxu0 0.0
    %1501 = vmatprep.subr.mxu0 0.0
    %1502 = vmatpush1.msra.mxu0 0.0
    %1503 = vmatprep.subr.mxu0 0.0
    %1504 = vmatpush1.msra.mxu0 0.0
    %1505 = vmatprep.subr.mxu0 0.0
    %1506 = vmatpush1.msra.mxu0 0.0
    %1507 = vmatprep.mubr.f32.mxu0 0.0
    %1508 = vmatmul.mubr.f32.gmra.mrb[0].mxu0 %v1441
    %v1509 = vpop.f32.mrb[0].mxu0
    %v1510 = vadd.f32 0.0, %v1509
    %v1511 = vpop.f32.mrb[0].mxu0
    %1512 = vdwg.mxu0
    %v1513 = vmul.f32 %v1510, 0.5
    %v1514 = vmul.f32 %v1513, 1.442695
    %v1515 = vpow.pop %v1514
    %v1516 = vld [vmem:[%s1] sm:$0x3]
    %v1517 = vmul.f32 %v1515, %v1516
    %v1518 = vadd.f32 %v1429, %v1517
    %v1519 = vpack.c.bf16 %v1518, %v1518
    %v1520 = vld [vmem:[%s13] sm:$0xf]
    %v1521 = vld [vmem:[%s13 + $0x4] sm:$0xf]
    %v1522 = vld [vmem:[%s13 + $0x8] sm:$0xf]
    %v1523 = vld [vmem:[%s13 + $0xc] sm:$0xf]
    %v1524 = vld [vmem:[%s13 + $0x10] sm:$0xf]
    %v1525 = vld [vmem:[%s13 + $0x14] sm:$0xf]
    %v1526 = vld [vmem:[%s13 + $0x18] sm:$0xf]
    %v1527 = vld [vmem:[%s13 + $0x1c] sm:$0xf]
    %v1536 = vunpack.c.l.b16 %v1520
    %v1537 = vunpack.c.l.b16 %v1521
    %v1538 = vunpack.c.l.b16 %v1522
    %v1539 = vunpack.c.l.b16 %v1523
    %v1540 = vunpack.c.l.b16 %v1524
    %v1541 = vunpack.c.l.b16 %v1525
    %v1542 = vunpack.c.l.b16 %v1526
    %v1543 = vunpack.c.l.b16 %v1527
    %v1544 = vpack.c.b16 %v1537, %v1536
    %v1545 = vpack.c.b16 %v1539, %v1538
    %v1546 = vpack.c.b16 %v1541, %v1540
    %v1547 = vpack.c.b16 %v1543, %v1542
    %v1553 = vsel %vm296, %v1519, 0
    %1555 = vmatprep.subr.bf16.mxu0 0
    %1556 = vmatpush1.bf16.msra.mxu0 %v1544
    %1557 = vmatprep.subr.bf16.mxu0 0
    %1558 = vmatpush1.bf16.msra.mxu0 %v1545
    %1559 = vmatprep.subr.bf16.mxu0 0
    %1560 = vmatpush1.bf16.msra.mxu0 %v1546
    %1561 = vmatprep.subr.bf16.mxu0 0
    %1562 = vmatpush1.bf16.msra.mxu0 %v1547
    %1563 = vmatprep.subr.bf16.mxu0 0
    %1564 = vmatpush1.bf16.msra.mxu0 0
    %1565 = vmatprep.subr.bf16.mxu0 0
    %1566 = vmatpush1.bf16.msra.mxu0 0
    %1567 = vmatprep.subr.bf16.mxu0 0
    %1568 = vmatpush1.bf16.msra.mxu0 0
    %1569 = vmatprep.subr.bf16.mxu0 0
    %1570 = vmatpush1.bf16.msra.mxu0 0
    %1571 = vmatprep.subr.bf16.mxu0 0
    %1572 = vmatpush1.bf16.msra.mxu0 0
    %1573 = vmatprep.subr.bf16.mxu0 0
    %1574 = vmatpush1.bf16.msra.mxu0 0
    %1575 = vmatprep.subr.bf16.mxu0 0
    %1576 = vmatpush1.bf16.msra.mxu0 0
    %1577 = vmatprep.subr.bf16.mxu0 0
    %1578 = vmatpush1.bf16.msra.mxu0 0
    %1579 = vmatprep.subr.bf16.mxu0 0
    %1580 = vmatpush1.bf16.msra.mxu0 0
    %1581 = vmatprep.subr.bf16.mxu0 0
    %1582 = vmatpush1.bf16.msra.mxu0 0
    %1583 = vmatprep.subr.bf16.mxu0 0
    %1584 = vmatpush1.bf16.msra.mxu0 0
    %1585 = vmatprep.subr.bf16.mxu0 0
    %1586 = vmatpush1.bf16.msra.mxu0 0
    %1587 = vmatprep.mubr.bf16.mxu0 0
    %1588 = vmatmul.mubr.bf16.gmra.mrb[0].mxu0 %v1553
    %v1589 = vpop.f32.mrb[0].mxu0
    %v1590 = vadd.f32 0.0, %v1589
    %v1591 = vpop.f32.mrb[0].mxu0
    %v1592 = vpop.f32.mrb[0].mxu0
    %v1593 = vpop.f32.mrb[0].mxu0
    %1594 = vdwg.mxu0
    %v1595 = vld [vmem:[%s12] sm:$0xf]
    %v1596 = vpack.c.bf16 %v1590, %v1590
    %s1597 = scalar_lea.vmem %s13, 32
    %v1598 = vld [vmem:[%s1597] sm:$0xf]
    %v1599 = vld [vmem:[%s1597 + $0x4] sm:$0xf]
    %v1600 = vld [vmem:[%s1597 + $0x8] sm:$0xf]
    %v1601 = vld [vmem:[%s1597 + $0xc] sm:$0xf]
    %v1602 = vld [vmem:[%s1597 + $0x10] sm:$0xf]
    %v1603 = vld [vmem:[%s1597 + $0x14] sm:$0xf]
    %v1604 = vld [vmem:[%s1597 + $0x18] sm:$0xf]
    %v1605 = vld [vmem:[%s1597 + $0x1c] sm:$0xf]
    %v1614 = vunpack.c.l.b16 %v1598
    %v1615 = vunpack.c.l.b16 %v1599
    %v1616 = vunpack.c.l.b16 %v1600
    %v1617 = vunpack.c.l.b16 %v1601
    %v1618 = vunpack.c.l.b16 %v1602
    %v1619 = vunpack.c.l.b16 %v1603
    %v1620 = vunpack.c.l.b16 %v1604
    %v1621 = vunpack.c.l.b16 %v1605
    %v1622 = vpack.c.b16 %v1615, %v1614
    %v1623 = vpack.c.b16 %v1617, %v1616
    %v1624 = vpack.c.b16 %v1619, %v1618
    %v1625 = vpack.c.b16 %v1621, %v1620
    %1630 = vmatprep.subr.bf16.mxu0 0
    %1631 = vmatpush1.bf16.msra.mxu0 %v1622
    %1632 = vmatprep.subr.bf16.mxu0 0
    %1633 = vmatpush1.bf16.msra.mxu0 %v1623
    %1634 = vmatprep.subr.bf16.mxu0 0
    %1635 = vmatpush1.bf16.msra.mxu0 %v1624
    %1636 = vmatprep.subr.bf16.mxu0 0
    %1637 = vmatpush1.bf16.msra.mxu0 %v1625
    %1638 = vmatprep.subr.bf16.mxu0 0
    %1639 = vmatpush1.bf16.msra.mxu0 0
    %1640 = vmatprep.subr.bf16.mxu0 0
    %1641 = vmatpush1.bf16.msra.mxu0 0
    %1642 = vmatprep.subr.bf16.mxu0 0
    %1643 = vmatpush1.bf16.msra.mxu0 0
    %1644 = vmatprep.subr.bf16.mxu0 0
    %1645 = vmatpush1.bf16.msra.mxu0 0
    %1646 = vmatprep.subr.bf16.mxu0 0
    %1647 = vmatpush1.bf16.msra.mxu0 0
    %1648 = vmatprep.subr.bf16.mxu0 0
    %1649 = vmatpush1.bf16.msra.mxu0 0
    %1650 = vmatprep.subr.bf16.mxu0 0
    %1651 = vmatpush1.bf16.msra.mxu0 0
    %1652 = vmatprep.subr.bf16.mxu0 0
    %1653 = vmatpush1.bf16.msra.mxu0 0
    %1654 = vmatprep.subr.bf16.mxu0 0
    %1655 = vmatpush1.bf16.msra.mxu0 0
    %1656 = vmatprep.subr.bf16.mxu0 0
    %1657 = vmatpush1.bf16.msra.mxu0 0
    %1658 = vmatprep.subr.bf16.mxu0 0
    %1659 = vmatpush1.bf16.msra.mxu0 0
    %1660 = vmatprep.subr.bf16.mxu0 0
    %1661 = vmatpush1.bf16.msra.mxu0 0
    %1662 = vmatprep.mubr.bf16.mxu0 0
    %1663 = vmatmul.mubr.bf16.gmra.mrb[0].mxu0 %v1553
    %v1664 = vpop.f32.mrb[0].mxu0
    %v1665 = vadd.f32 0.0, %v1664
    %v1666 = vpop.f32.mrb[0].mxu0
    %v1667 = vpop.f32.mrb[0].mxu0
    %v1668 = vpop.f32.mrb[0].mxu0
    %1669 = vdwg.mxu0
    %s1670 = scalar_lea.vmem %s12, 4
    %v1671 = vld [vmem:[%s1670] sm:$0xf]
    %v1672 = vpack.c.bf16 %v1665, %v1665
    %vm1673 = vcmask 15360
    %v1675 = vsel %vm1673, %v1671, 0
    %vm1677 = vcmask 1040384
    %v1679 = vsel %vm1677, %v1672, 0
    %1681 = vmatprep.subr.bf16.mxu0 0
    %1682 = vmatpush1.bf16.msra.mxu0 %v1679
    %1683 = vmatprep.subr.bf16.mxu0 0
    %1684 = vmatpush1.bf16.msra.mxu0 0
    %1685 = vmatprep.subr.bf16.mxu0 0
    %1686 = vmatpush1.bf16.msra.mxu0 0
    %1687 = vmatprep.subr.bf16.mxu0 0
    %1688 = vmatpush1.bf16.msra.mxu0 0
    %1689 = vmatprep.subr.bf16.mxu0 0
    %1690 = vmatpush1.bf16.msra.mxu0 0
    %1691 = vmatprep.subr.bf16.mxu0 0
    %1692 = vmatpush1.bf16.msra.mxu0 0
    %1693 = vmatprep.subr.bf16.mxu0 0
    %1694 = vmatpush1.bf16.msra.mxu0 0
    %1695 = vmatprep.subr.bf16.mxu0 0
    %1696 = vmatpush1.bf16.msra.mxu0 0
    %1697 = vmatprep.subr.bf16.mxu0 0
    %1698 = vmatpush1.bf16.msra.mxu0 0
    %1699 = vmatprep.subr.bf16.mxu0 0
    %1700 = vmatpush1.bf16.msra.mxu0 0
    %1701 = vmatprep.subr.bf16.mxu0 0
    %1702 = vmatpush1.bf16.msra.mxu0 0
    %1703 = vmatprep.subr.bf16.mxu0 0
    %1704 = vmatpush1.bf16.msra.mxu0 0
    %1705 = vmatprep.subr.bf16.mxu0 0
    %1706 = vmatpush1.bf16.msra.mxu0 0
    %1707 = vmatprep.subr.bf16.mxu0 0
    %1708 = vmatpush1.bf16.msra.mxu0 0
    %1709 = vmatprep.subr.bf16.mxu0 0
    %1710 = vmatpush1.bf16.msra.mxu0 0
    %1711 = vmatprep.subr.bf16.mxu0 0
    %1712 = vmatpush1.bf16.msra.mxu0 0
    %1713 = vmatprep.mubr.bf16.mxu0 0
    %1714 = vmatmul.mubr.bf16.gmra.mrb[0].mxu0 %v1675
    %v1715 = vpop.f32.mrb[0].mxu0
    %v1716 = vadd.f32 0.0, %v1715
    %v1717 = vpop.f32.mrb[0].mxu0
    %v1718 = vpop.f32.mrb[0].mxu0
    %v1719 = vpop.f32.mrb[0].mxu0
    %1720 = vdwg.mxu0
    %v1722 = vsel %vm1673, %v1595, 0
    %v1725 = vsel %vm1677, %v1596, 0
    %1727 = vmatprep.subr.bf16.mxu0 0
    %1728 = vmatpush1.bf16.msra.mxu0 %v1725
    %1729 = vmatprep.subr.bf16.mxu0 0
    %1730 = vmatpush1.bf16.msra.mxu0 0
    %1731 = vmatprep.subr.bf16.mxu0 0
    %1732 = vmatpush1.bf16.msra.mxu0 0
    %1733 = vmatprep.subr.bf16.mxu0 0
    %1734 = vmatpush1.bf16.msra.mxu0 0
    %1735 = vmatprep.subr.bf16.mxu0 0
    %1736 = vmatpush1.bf16.msra.mxu0 0
    %1737 = vmatprep.subr.bf16.mxu0 0
    %1738 = vmatpush1.bf16.msra.mxu0 0
    %1739 = vmatprep.subr.bf16.mxu0 0
    %1740 = vmatpush1.bf16.msra.mxu0 0
    %1741 = vmatprep.subr.bf16.mxu0 0
    %1742 = vmatpush1.bf16.msra.mxu0 0
    %1743 = vmatprep.subr.bf16.mxu0 0
    %1744 = vmatpush1.bf16.msra.mxu0 0
    %1745 = vmatprep.subr.bf16.mxu0 0
    %1746 = vmatpush1.bf16.msra.mxu0 0
    %1747 = vmatprep.subr.bf16.mxu0 0
    %1748 = vmatpush1.bf16.msra.mxu0 0
    %1749 = vmatprep.subr.bf16.mxu0 0
    %1750 = vmatpush1.bf16.msra.mxu0 0
    %1751 = vmatprep.subr.bf16.mxu0 0
    %1752 = vmatpush1.bf16.msra.mxu0 0
    %1753 = vmatprep.subr.bf16.mxu0 0
    %1754 = vmatpush1.bf16.msra.mxu0 0
    %1755 = vmatprep.subr.bf16.mxu0 0
    %1756 = vmatpush1.bf16.msra.mxu0 0
    %1757 = vmatprep.subr.bf16.mxu0 0
    %1758 = vmatpush1.bf16.msra.mxu0 0
    %1759 = vmatprep.mubr.bf16.mxu0 0
    %1760 = vmatmul.mubr.bf16.gmra.mrb[0].mxu0 %v1722
    %v1761 = vpop.f32.mrb[0].mxu0
    %v1762 = vadd.f32 %v1716, %v1761
    %v1763 = vpop.f32.mrb[0].mxu0
    %v1764 = vpop.f32.mrb[0].mxu0
    %v1765 = vpop.f32.mrb[0].mxu0
    %1766 = vdwg.mxu0
    %s1767 = scalar_lea.vmem %s13, 64
    %v1768 = vld [vmem:[%s1767] sm:$0xf]
    %v1769 = vld [vmem:[%s1767 + $0x4] sm:$0xf]
    %v1770 = vld [vmem:[%s1767 + $0x8] sm:$0xf]
    %v1771 = vld [vmem:[%s1767 + $0xc] sm:$0xf]
    %v1772 = vld [vmem:[%s1767 + $0x10] sm:$0xf]
    %v1773 = vld [vmem:[%s1767 + $0x14] sm:$0xf]
    %v1774 = vld [vmem:[%s1767 + $0x18] sm:$0xf]
    %v1775 = vld [vmem:[%s1767 + $0x1c] sm:$0xf]
    %v1784 = vunpack.c.l.b16 %v1768
    %v1785 = vunpack.c.l.b16 %v1769
    %v1786 = vunpack.c.l.b16 %v1770
    %v1787 = vunpack.c.l.b16 %v1771
    %v1788 = vunpack.c.l.b16 %v1772
    %v1789 = vunpack.c.l.b16 %v1773
    %v1790 = vunpack.c.l.b16 %v1774
    %v1791 = vunpack.c.l.b16 %v1775
    %v1792 = vpack.c.b16 %v1785, %v1784
    %v1793 = vpack.c.b16 %v1787, %v1786
    %v1794 = vpack.c.b16 %v1789, %v1788
    %v1795 = vpack.c.b16 %v1791, %v1790
    %1800 = vmatprep.subr.bf16.mxu0 0
    %1801 = vmatpush1.bf16.msra.mxu0 %v1792
    %1802 = vmatprep.subr.bf16.mxu0 0
    %1803 = vmatpush1.bf16.msra.mxu0 %v1793
    %1804 = vmatprep.subr.bf16.mxu0 0
    %1805 = vmatpush1.bf16.msra.mxu0 %v1794
    %1806 = vmatprep.subr.bf16.mxu0 0
    %1807 = vmatpush1.bf16.msra.mxu0 %v1795
    %1808 = vmatprep.subr.bf16.mxu0 0
    %1809 = vmatpush1.bf16.msra.mxu0 0
    %1810 = vmatprep.subr.bf16.mxu0 0
    %1811 = vmatpush1.bf16.msra.mxu0 0
    %1812 = vmatprep.subr.bf16.mxu0 0
    %1813 = vmatpush1.bf16.msra.mxu0 0
    %1814 = vmatprep.subr.bf16.mxu0 0
    %1815 = vmatpush1.bf16.msra.mxu0 0
    %1816 = vmatprep.subr.bf16.mxu0 0
    %1817 = vmatpush1.bf16.msra.mxu0 0
    %1818 = vmatprep.subr.bf16.mxu0 0
    %1819 = vmatpush1.bf16.msra.mxu0 0
    %1820 = vmatprep.subr.bf16.mxu0 0
    %1821 = vmatpush1.bf16.msra.mxu0 0
    %1822 = vmatprep.subr.bf16.mxu0 0
    %1823 = vmatpush1.bf16.msra.mxu0 0
    %1824 = vmatprep.subr.bf16.mxu0 0
    %1825 = vmatpush1.bf16.msra.mxu0 0
    %1826 = vmatprep.subr.bf16.mxu0 0
    %1827 = vmatpush1.bf16.msra.mxu0 0
    %1828 = vmatprep.subr.bf16.mxu0 0
    %1829 = vmatpush1.bf16.msra.mxu0 0
    %1830 = vmatprep.subr.bf16.mxu0 0
    %1831 = vmatpush1.bf16.msra.mxu0 0
    %1832 = vmatprep.mubr.bf16.mxu0 0
    %1833 = vmatmul.mubr.bf16.gmra.mrb[0].mxu0 %v1553
    %v1834 = vpop.f32.mrb[0].mxu0
    %v1835 = vadd.f32 0.0, %v1834
    %v1836 = vpop.f32.mrb[0].mxu0
    %v1837 = vpop.f32.mrb[0].mxu0
    %v1838 = vpop.f32.mrb[0].mxu0
    %1839 = vdwg.mxu0
    %s1840 = scalar_lea.vmem %s12, 8
    %v1841 = vld [vmem:[%s1840] sm:$0xf]
    %v1842 = vpack.c.bf16 %v1835, %v1835
    %v1844 = vsel %vm1673, %v1841, 0
    %v1847 = vsel %vm1677, %v1842, 0
    %1849 = vmatprep.subr.bf16.mxu0 0
    %1850 = vmatpush1.bf16.msra.mxu0 %v1847
    %1851 = vmatprep.subr.bf16.mxu0 0
    %1852 = vmatpush1.bf16.msra.mxu0 0
    %1853 = vmatprep.subr.bf16.mxu0 0
    %1854 = vmatpush1.bf16.msra.mxu0 0
    %1855 = vmatprep.subr.bf16.mxu0 0
    %1856 = vmatpush1.bf16.msra.mxu0 0
    %1857 = vmatprep.subr.bf16.mxu0 0
    %1858 = vmatpush1.bf16.msra.mxu0 0
    %1859 = vmatprep.subr.bf16.mxu0 0
    %1860 = vmatpush1.bf16.msra.mxu0 0
    %1861 = vmatprep.subr.bf16.mxu0 0
    %1862 = vmatpush1.bf16.msra.mxu0 0
    %1863 = vmatprep.subr.bf16.mxu0 0
    %1864 = vmatpush1.bf16.msra.mxu0 0
    %1865 = vmatprep.subr.bf16.mxu0 0
    %1866 = vmatpush1.bf16.msra.mxu0 0
    %1867 = vmatprep.subr.bf16.mxu0 0
    %1868 = vmatpush1.bf16.msra.mxu0 0
    %1869 = vmatprep.subr.bf16.mxu0 0
    %1870 = vmatpush1.bf16.msra.mxu0 0
    %1871 = vmatprep.subr.bf16.mxu0 0
    %1872 = vmatpush1.bf16.msra.mxu0 0
    %1873 = vmatprep.subr.bf16.mxu0 0
    %1874 = vmatpush1.bf16.msra.mxu0 0
    %1875 = vmatprep.subr.bf16.mxu0 0
    %1876 = vmatpush1.bf16.msra.mxu0 0
    %1877 = vmatprep.subr.bf16.mxu0 0
    %1878 = vmatpush1.bf16.msra.mxu0 0
    %1879 = vmatprep.subr.bf16.mxu0 0
    %1880 = vmatpush1.bf16.msra.mxu0 0
    %1881 = vmatprep.mubr.bf16.mxu0 0
    %1882 = vmatmul.mubr.bf16.gmra.mrb[0].mxu0 %v1844
    %v1883 = vpop.f32.mrb[0].mxu0
    %v1884 = vadd.f32 0.0, %v1883
    %v1885 = vpop.f32.mrb[0].mxu0
    %v1886 = vpop.f32.mrb[0].mxu0
    %v1887 = vpop.f32.mrb[0].mxu0
    %1888 = vdwg.mxu0
    %v1889 = vadd.f32 %v1762, %v1884
    %s1890 = scalar_lea.vmem %s13, 96
    %v1891 = vld [vmem:[%s1890] sm:$0xf]
    %v1892 = vld [vmem:[%s1890 + $0x4] sm:$0xf]
    %v1893 = vld [vmem:[%s1890 + $0x8] sm:$0xf]
    %v1894 = vld [vmem:[%s1890 + $0xc] sm:$0xf]
    %v1895 = vld [vmem:[%s1890 + $0x10] sm:$0xf]
    %v1896 = vld [vmem:[%s1890 + $0x14] sm:$0xf]
    %v1897 = vld [vmem:[%s1890 + $0x18] sm:$0xf]
    %v1898 = vld [vmem:[%s1890 + $0x1c] sm:$0xf]
    %v1907 = vunpack.c.l.b16 %v1891
    %v1908 = vunpack.c.l.b16 %v1892
    %v1909 = vunpack.c.l.b16 %v1893
    %v1910 = vunpack.c.l.b16 %v1894
    %v1911 = vunpack.c.l.b16 %v1895
    %v1912 = vunpack.c.l.b16 %v1896
    %v1913 = vunpack.c.l.b16 %v1897
    %v1914 = vunpack.c.l.b16 %v1898
    %v1915 = vpack.c.b16 %v1908, %v1907
    %v1916 = vpack.c.b16 %v1910, %v1909
    %v1917 = vpack.c.b16 %v1912, %v1911
    %v1918 = vpack.c.b16 %v1914, %v1913
    %1923 = vmatprep.subr.bf16.mxu0 0
    %1924 = vmatpush1.bf16.msra.mxu0 %v1915
    %1925 = vmatprep.subr.bf16.mxu0 0
    %1926 = vmatpush1.bf16.msra.mxu0 %v1916
    %1927 = vmatprep.subr.bf16.mxu0 0
    %1928 = vmatpush1.bf16.msra.mxu0 %v1917
    %1929 = vmatprep.subr.bf16.mxu0 0
    %1930 = vmatpush1.bf16.msra.mxu0 %v1918
    %1931 = vmatprep.subr.bf16.mxu0 0
    %1932 = vmatpush1.bf16.msra.mxu0 0
    %1933 = vmatprep.subr.bf16.mxu0 0
    %1934 = vmatpush1.bf16.msra.mxu0 0
    %1935 = vmatprep.subr.bf16.mxu0 0
    %1936 = vmatpush1.bf16.msra.mxu0 0
    %1937 = vmatprep.subr.bf16.mxu0 0
    %1938 = vmatpush1.bf16.msra.mxu0 0
    %1939 = vmatprep.subr.bf16.mxu0 0
    %1940 = vmatpush1.bf16.msra.mxu0 0
    %1941 = vmatprep.subr.bf16.mxu0 0
    %1942 = vmatpush1.bf16.msra.mxu0 0
    %1943 = vmatprep.subr.bf16.mxu0 0
    %1944 = vmatpush1.bf16.msra.mxu0 0
    %1945 = vmatprep.subr.bf16.mxu0 0
    %1946 = vmatpush1.bf16.msra.mxu0 0
    %1947 = vmatprep.subr.bf16.mxu0 0
    %1948 = vmatpush1.bf16.msra.mxu0 0
    %1949 = vmatprep.subr.bf16.mxu0 0
    %1950 = vmatpush1.bf16.msra.mxu0 0
    %1951 = vmatprep.subr.bf16.mxu0 0
    %1952 = vmatpush1.bf16.msra.mxu0 0
    %1953 = vmatprep.subr.bf16.mxu0 0
    %1954 = vmatpush1.bf16.msra.mxu0 0
    %1955 = vmatprep.mubr.bf16.mxu0 0
    %1956 = vmatmul.mubr.bf16.gmra.mrb[0].mxu0 %v1553
    %v1957 = vpop.f32.mrb[0].mxu0
    %v1958 = vadd.f32 0.0, %v1957
    %v1959 = vpop.f32.mrb[0].mxu0
    %v1960 = vpop.f32.mrb[0].mxu0
    %v1961 = vpop.f32.mrb[0].mxu0
    %1962 = vdwg.mxu0
    %s1963 = scalar_lea.vmem %s12, 12
    %v1964 = vld [vmem:[%s1963] sm:$0xf]
    %v1965 = vpack.c.bf16 %v1958, %v1958
    %v1967 = vsel %vm1673, %v1964, 0
    %v1970 = vsel %vm1677, %v1965, 0
    %1972 = vmatprep.subr.bf16.mxu0 0
    %1973 = vmatpush1.bf16.msra.mxu0 %v1970
    %1974 = vmatprep.subr.bf16.mxu0 0
    %1975 = vmatpush1.bf16.msra.mxu0 0
    %1976 = vmatprep.subr.bf16.mxu0 0
    %1977 = vmatpush1.bf16.msra.mxu0 0
    %1978 = vmatprep.subr.bf16.mxu0 0
    %1979 = vmatpush1.bf16.msra.mxu0 0
    %1980 = vmatprep.subr.bf16.mxu0 0
    %1981 = vmatpush1.bf16.msra.mxu0 0
    %1982 = vmatprep.subr.bf16.mxu0 0
    %1983 = vmatpush1.bf16.msra.mxu0 0
    %1984 = vmatprep.subr.bf16.mxu0 0
    %1985 = vmatpush1.bf16.msra.mxu0 0
    %1986 = vmatprep.subr.bf16.mxu0 0
    %1987 = vmatpush1.bf16.msra.mxu0 0
    %1988 = vmatprep.subr.bf16.mxu0 0
    %1989 = vmatpush1.bf16.msra.mxu0 0
    %1990 = vmatprep.subr.bf16.mxu0 0
    %1991 = vmatpush1.bf16.msra.mxu0 0
    %1992 = vmatprep.subr.bf16.mxu0 0
    %1993 = vmatpush1.bf16.msra.mxu0 0
    %1994 = vmatprep.subr.bf16.mxu0 0
    %1995 = vmatpush1.bf16.msra.mxu0 0
    %1996 = vmatprep.subr.bf16.mxu0 0
    %1997 = vmatpush1.bf16.msra.mxu0 0
    %1998 = vmatprep.subr.bf16.mxu0 0
    %1999 = vmatpush1.bf16.msra.mxu0 0
    %2000 = vmatprep.subr.bf16.mxu0 0
    %2001 = vmatpush1.bf16.msra.mxu0 0
    %2002 = vmatprep.subr.bf16.mxu0 0
    %2003 = vmatpush1.bf16.msra.mxu0 0
    %2004 = vmatprep.mubr.bf16.mxu0 0
    %2005 = vmatmul.mubr.bf16.gmra.mrb[0].mxu0 %v1967
    %v2006 = vpop.f32.mrb[0].mxu0
    %v2007 = vadd.f32 0.0, %v2006
    %v2008 = vpop.f32.mrb[0].mxu0
    %v2009 = vpop.f32.mrb[0].mxu0
    %v2010 = vpop.f32.mrb[0].mxu0
    %2011 = vdwg.mxu0
    %v2012 = vadd.f32 %v1889, %v2007
    %v2013 = vld [vmem:[#allocation7] sm:$0xff]
    %v2014 = vadd.f32 %v2012, %v2013
    %v2015 = vmax.f32 %v2014, 0.0
    %v2016 = vpack.c.bf16 %v2015, %v2015
    %v2017 = vld [vmem:[%s15] sm:$0xf]
    %v2018 = vld [vmem:[%s15 + $0x4] sm:$0xf]
    %v2021 = vunpack.c.l.b16 %v2017
    %v2022 = vunpack.c.l.b16 %v2018
    %v2023 = vpack.c.b16 %v2022, %v2021
    %v2025 = vsel %vm930, %v2023, 0
    %v2028 = vsel %vm934, %v2016, 0
    %2030 = vmatprep.subr.bf16.mxu0 0
    %2031 = vmatpush1.bf16.msra.mxu0 %v2028
    %2032 = vmatprep.subr.bf16.mxu0 0
    %2033 = vmatpush1.bf16.msra.mxu0 0
    %2034 = vmatprep.subr.bf16.mxu0 0
    %2035 = vmatpush1.bf16.msra.mxu0 0
    %2036 = vmatprep.subr.bf16.mxu0 0
    %2037 = vmatpush1.bf16.msra.mxu0 0
    %2038 = vmatprep.subr.bf16.mxu0 0
    %2039 = vmatpush1.bf16.msra.mxu0 0
    %2040 = vmatprep.subr.bf16.mxu0 0
    %2041 = vmatpush1.bf16.msra.mxu0 0
    %2042 = vmatprep.subr.bf16.mxu0 0
    %2043 = vmatpush1.bf16.msra.mxu0 0
    %2044 = vmatprep.subr.bf16.mxu0 0
    %2045 = vmatpush1.bf16.msra.mxu0 0
    %2046 = vmatprep.subr.bf16.mxu0 0
    %2047 = vmatpush1.bf16.msra.mxu0 0
    %2048 = vmatprep.subr.bf16.mxu0 0
    %2049 = vmatpush1.bf16.msra.mxu0 0
    %2050 = vmatprep.subr.bf16.mxu0 0
    %2051 = vmatpush1.bf16.msra.mxu0 0
    %2052 = vmatprep.subr.bf16.mxu0 0
    %2053 = vmatpush1.bf16.msra.mxu0 0
    %2054 = vmatprep.subr.bf16.mxu0 0
    %2055 = vmatpush1.bf16.msra.mxu0 0
    %2056 = vmatprep.subr.bf16.mxu0 0
    %2057 = vmatpush1.bf16.msra.mxu0 0
    %2058 = vmatprep.subr.bf16.mxu0 0
    %2059 = vmatpush1.bf16.msra.mxu0 0
    %2060 = vmatprep.subr.bf16.mxu0 0
    %2061 = vmatpush1.bf16.msra.mxu0 0
    %2062 = vmatprep.mubr.bf16.mxu0 0
    %2063 = vmatmul.mubr.bf16.gmra.mrb[0].mxu0 %v2025
    %v2064 = vpop.f32.mrb[0].mxu0
    %v2065 = vadd.f32 0.0, %v2064
    %v2066 = vpop.f32.mrb[0].mxu0
    %v2067 = vpop.f32.mrb[0].mxu0
    %v2068 = vadd.f32 0.0, %v2067
    %v2069 = vpop.f32.mrb[0].mxu0
    %2070 = vdwg.mxu0
    %v2071 = vpack.c.bf16 %v2068, %v2065
    %v2072 = vld [vmem:[%s16] sm:$0xf]
    %v2073 = vld [vmem:[%s16 + $0x4] sm:$0xf]
    %v2074 = vld [vmem:[%s16 + $0x8] sm:$0xf]
    %v2075 = vld [vmem:[%s16 + $0xc] sm:$0xf]
    %v2076 = vld [vmem:[%s16 + $0x10] sm:$0xf]
    %v2077 = vld [vmem:[%s16 + $0x14] sm:$0xf]
    %v2078 = vld [vmem:[%s16 + $0x18] sm:$0xf]
    %v2079 = vld [vmem:[%s16 + $0x1c] sm:$0xf]
    %s2080 = scalar_lea.vmem %s15, 8
    %v2081 = vld [vmem:[%s2080] sm:$0xf]
    %v2082 = vld [vmem:[%s2080 + $0x4] sm:$0xf]
    %v2085 = vunpack.c.l.b16 %v2081
    %v2086 = vunpack.c.l.b16 %v2082
    %v2087 = vpack.c.b16 %v2086, %v2085
    %v2089 = vsel %vm930, %v2087, 0
    %2091 = vmatprep.subr.bf16.mxu0 0
    %2092 = vmatpush1.bf16.msra.mxu0 %v2028
    %2093 = vmatprep.subr.bf16.mxu0 0
    %2094 = vmatpush1.bf16.msra.mxu0 0
    %2095 = vmatprep.subr.bf16.mxu0 0
    %2096 = vmatpush1.bf16.msra.mxu0 0
    %2097 = vmatprep.subr.bf16.mxu0 0
    %2098 = vmatpush1.bf16.msra.mxu0 0
    %2099 = vmatprep.subr.bf16.mxu0 0
    %2100 = vmatpush1.bf16.msra.mxu0 0
    %2101 = vmatprep.subr.bf16.mxu0 0
    %2102 = vmatpush1.bf16.msra.mxu0 0
    %2103 = vmatprep.subr.bf16.mxu0 0
    %2104 = vmatpush1.bf16.msra.mxu0 0
    %2105 = vmatprep.subr.bf16.mxu0 0
    %2106 = vmatpush1.bf16.msra.mxu0 0
    %2107 = vmatprep.subr.bf16.mxu0 0
    %2108 = vmatpush1.bf16.msra.mxu0 0
    %2109 = vmatprep.subr.bf16.mxu0 0
    %2110 = vmatpush1.bf16.msra.mxu0 0
    %2111 = vmatprep.subr.bf16.mxu0 0
    %2112 = vmatpush1.bf16.msra.mxu0 0
    %2113 = vmatprep.subr.bf16.mxu0 0
    %2114 = vmatpush1.bf16.msra.mxu0 0
    %2115 = vmatprep.subr.bf16.mxu0 0
    %2116 = vmatpush1.bf16.msra.mxu0 0
    %2117 = vmatprep.subr.bf16.mxu0 0
    %2118 = vmatpush1.bf16.msra.mxu0 0
    %2119 = vmatprep.subr.bf16.mxu0 0
    %2120 = vmatpush1.bf16.msra.mxu0 0
    %2121 = vmatprep.subr.bf16.mxu0 0
    %2122 = vmatpush1.bf16.msra.mxu0 0
    %2123 = vmatprep.mubr.bf16.mxu0 0
    %2124 = vmatmul.mubr.bf16.gmra.mrb[0].mxu0 %v2089
    %v2125 = vpop.f32.mrb[0].mxu0
    %v2126 = vadd.f32 0.0, %v2125
    %v2127 = vpop.f32.mrb[0].mxu0
    %v2128 = vpop.f32.mrb[0].mxu0
    %v2129 = vadd.f32 0.0, %v2128
    %v2130 = vpop.f32.mrb[0].mxu0
    %2131 = vdwg.mxu0
    %v2132 = vpack.c.bf16 %v2129, %v2126
    %s2133 = scalar_lea.vmem %s16, 32
    %v2134 = vld [vmem:[%s2133] sm:$0xf]
    %v2135 = vld [vmem:[%s2133 + $0x4] sm:$0xf]
    %v2136 = vld [vmem:[%s2133 + $0x8] sm:$0xf]
    %v2137 = vld [vmem:[%s2133 + $0xc] sm:$0xf]
    %v2138 = vld [vmem:[%s2133 + $0x10] sm:$0xf]
    %v2139 = vld [vmem:[%s2133 + $0x14] sm:$0xf]
    %v2140 = vld [vmem:[%s2133 + $0x18] sm:$0xf]
    %v2141 = vld [vmem:[%s2133 + $0x1c] sm:$0xf]
    %v2150 = vunpack.c.l.b16 %v2134
    %v2151 = vunpack.c.l.b16 %v2135
    %v2152 = vunpack.c.l.b16 %v2136
    %v2153 = vunpack.c.l.b16 %v2137
    %v2154 = vunpack.c.l.b16 %v2138
    %v2155 = vunpack.c.l.b16 %v2139
    %v2156 = vunpack.c.l.b16 %v2140
    %v2157 = vunpack.c.l.b16 %v2141
    %v2158 = vpack.c.b16 %v2151, %v2150
    %v2159 = vpack.c.b16 %v2153, %v2152
    %v2160 = vpack.c.b16 %v2155, %v2154
    %v2161 = vpack.c.b16 %v2157, %v2156
    %v2167 = vsel %vm296, %v2132, 0
    %2169 = vmatprep.subr.bf16.mxu0 0
    %2170 = vmatpush1.bf16.msra.mxu0 %v2158
    %2171 = vmatprep.subr.bf16.mxu0 0
    %2172 = vmatpush1.bf16.msra.mxu0 %v2159
    %2173 = vmatprep.subr.bf16.mxu0 0
    %2174 = vmatpush1.bf16.msra.mxu0 %v2160
    %2175 = vmatprep.subr.bf16.mxu0 0
    %2176 = vmatpush1.bf16.msra.mxu0 %v2161
    %2177 = vmatprep.subr.bf16.mxu0 0
    %2178 = vmatpush1.bf16.msra.mxu0 0
    %2179 = vmatprep.subr.bf16.mxu0 0
    %2180 = vmatpush1.bf16.msra.mxu0 0
    %2181 = vmatprep.subr.bf16.mxu0 0
    %2182 = vmatpush1.bf16.msra.mxu0 0
    %2183 = vmatprep.subr.bf16.mxu0 0
    %2184 = vmatpush1.bf16.msra.mxu0 0
    %2185 = vmatprep.subr.bf16.mxu0 0
    %2186 = vmatpush1.bf16.msra.mxu0 0
    %2187 = vmatprep.subr.bf16.mxu0 0
    %2188 = vmatpush1.bf16.msra.mxu0 0
    %2189 = vmatprep.subr.bf16.mxu0 0
    %2190 = vmatpush1.bf16.msra.mxu0 0
    %2191 = vmatprep.subr.bf16.mxu0 0
    %2192 = vmatpush1.bf16.msra.mxu0 0
    %2193 = vmatprep.subr.bf16.mxu0 0
    %2194 = vmatpush1.bf16.msra.mxu0 0
    %2195 = vmatprep.subr.bf16.mxu0 0
    %2196 = vmatpush1.bf16.msra.mxu0 0
    %2197 = vmatprep.subr.bf16.mxu0 0
    %2198 = vmatpush1.bf16.msra.mxu0 0
    %2199 = vmatprep.subr.bf16.mxu0 0
    %2200 = vmatpush1.bf16.msra.mxu0 0
    %2201 = vmatprep.mubr.bf16.mxu0 0
    %2202 = vmatmul.mubr.bf16.gmra.mrb[0].mxu0 %v2167
    %v2203 = vpop.f32.mrb[0].mxu0
    %v2204 = vadd.f32 0.0, %v2203
    %v2205 = vpop.f32.mrb[0].mxu0
    %v2206 = vpop.f32.mrb[0].mxu0
    %v2207 = vadd.f32 0.0, %v2206
    %v2208 = vpop.f32.mrb[0].mxu0
    %2209 = vdwg.mxu0
    %v2218 = vunpack.c.l.b16 %v2072
    %v2219 = vunpack.c.l.b16 %v2073
    %v2220 = vunpack.c.l.b16 %v2074
    %v2221 = vunpack.c.l.b16 %v2075
    %v2222 = vunpack.c.l.b16 %v2076
    %v2223 = vunpack.c.l.b16 %v2077
    %v2224 = vunpack.c.l.b16 %v2078
    %v2225 = vunpack.c.l.b16 %v2079
    %v2226 = vpack.c.b16 %v2219, %v2218
    %v2227 = vpack.c.b16 %v2221, %v2220
    %v2228 = vpack.c.b16 %v2223, %v2222
    %v2229 = vpack.c.b16 %v2225, %v2224
    %v2235 = vsel %vm296, %v2071, 0
    %2237 = vmatprep.subr.bf16.mxu0 0
    %2238 = vmatpush1.bf16.msra.mxu0 %v2226
    %2239 = vmatprep.subr.bf16.mxu0 0
    %2240 = vmatpush1.bf16.msra.mxu0 %v2227
    %2241 = vmatprep.subr.bf16.mxu0 0
    %2242 = vmatpush1.bf16.msra.mxu0 %v2228
    %2243 = vmatprep.subr.bf16.mxu0 0
    %2244 = vmatpush1.bf16.msra.mxu0 %v2229
    %2245 = vmatprep.subr.bf16.mxu0 0
    %2246 = vmatpush1.bf16.msra.mxu0 0
    %2247 = vmatprep.subr.bf16.mxu0 0
    %2248 = vmatpush1.bf16.msra.mxu0 0
    %2249 = vmatprep.subr.bf16.mxu0 0
    %2250 = vmatpush1.bf16.msra.mxu0 0
    %2251 = vmatprep.subr.bf16.mxu0 0
    %2252 = vmatpush1.bf16.msra.mxu0 0
    %2253 = vmatprep.subr.bf16.mxu0 0
    %2254 = vmatpush1.bf16.msra.mxu0 0
    %2255 = vmatprep.subr.bf16.mxu0 0
    %2256 = vmatpush1.bf16.msra.mxu0 0
    %2257 = vmatprep.subr.bf16.mxu0 0
    %2258 = vmatpush1.bf16.msra.mxu0 0
    %2259 = vmatprep.subr.bf16.mxu0 0
    %2260 = vmatpush1.bf16.msra.mxu0 0
    %2261 = vmatprep.subr.bf16.mxu0 0
    %2262 = vmatpush1.bf16.msra.mxu0 0
    %2263 = vmatprep.subr.bf16.mxu0 0
    %2264 = vmatpush1.bf16.msra.mxu0 0
    %2265 = vmatprep.subr.bf16.mxu0 0
    %2266 = vmatpush1.bf16.msra.mxu0 0
    %2267 = vmatprep.subr.bf16.mxu0 0
    %2268 = vmatpush1.bf16.msra.mxu0 0
    %2269 = vmatprep.mubr.bf16.mxu0 0
    %2270 = vmatmul.mubr.bf16.gmra.mrb[0].mxu0 %v2235
    %v2271 = vpop.f32.mrb[0].mxu0
    %v2272 = vadd.f32 %v2204, %v2271
    %v2273 = vpop.f32.mrb[0].mxu0
    %v2274 = vpop.f32.mrb[0].mxu0
    %v2275 = vadd.f32 %v2207, %v2274
    %v2276 = vpop.f32.mrb[0].mxu0
    %2277 = vdwg.mxu0
    %s2278 = scalar_lea.vmem %s15, 16
    %v2279 = vld [vmem:[%s2278] sm:$0xf]
    %v2280 = vld [vmem:[%s2278 + $0x4] sm:$0xf]
    %v2283 = vunpack.c.l.b16 %v2279
    %v2284 = vunpack.c.l.b16 %v2280
    %v2285 = vpack.c.b16 %v2284, %v2283
    %v2287 = vsel %vm930, %v2285, 0
    %2289 = vmatprep.subr.bf16.mxu0 0
    %2290 = vmatpush1.bf16.msra.mxu0 %v2028
    %2291 = vmatprep.subr.bf16.mxu0 0
    %2292 = vmatpush1.bf16.msra.mxu0 0
    %2293 = vmatprep.subr.bf16.mxu0 0
    %2294 = vmatpush1.bf16.msra.mxu0 0
    %2295 = vmatprep.subr.bf16.mxu0 0
    %2296 = vmatpush1.bf16.msra.mxu0 0
    %2297 = vmatprep.subr.bf16.mxu0 0
    %2298 = vmatpush1.bf16.msra.mxu0 0
    %2299 = vmatprep.subr.bf16.mxu0 0
    %2300 = vmatpush1.bf16.msra.mxu0 0
    %2301 = vmatprep.subr.bf16.mxu0 0
    %2302 = vmatpush1.bf16.msra.mxu0 0
    %2303 = vmatprep.subr.bf16.mxu0 0
    %2304 = vmatpush1.bf16.msra.mxu0 0
    %2305 = vmatprep.subr.bf16.mxu0 0
    %2306 = vmatpush1.bf16.msra.mxu0 0
    %2307 = vmatprep.subr.bf16.mxu0 0
    %2308 = vmatpush1.bf16.msra.mxu0 0
    %2309 = vmatprep.subr.bf16.mxu0 0
    %2310 = vmatpush1.bf16.msra.mxu0 0
    %2311 = vmatprep.subr.bf16.mxu0 0
    %2312 = vmatpush1.bf16.msra.mxu0 0
    %2313 = vmatprep.subr.bf16.mxu0 0
    %2314 = vmatpush1.bf16.msra.mxu0 0
    %2315 = vmatprep.subr.bf16.mxu0 0
    %2316 = vmatpush1.bf16.msra.mxu0 0
    %2317 = vmatprep.subr.bf16.mxu0 0
    %2318 = vmatpush1.bf16.msra.mxu0 0
    %2319 = vmatprep.subr.bf16.mxu0 0
    %2320 = vmatpush1.bf16.msra.mxu0 0
    %2321 = vmatprep.mubr.bf16.mxu0 0
    %2322 = vmatmul.mubr.bf16.gmra.mrb[0].mxu0 %v2287
    %v2323 = vpop.f32.mrb[0].mxu0
    %v2324 = vadd.f32 0.0, %v2323
    %v2325 = vpop.f32.mrb[0].mxu0
    %v2326 = vpop.f32.mrb[0].mxu0
    %v2327 = vadd.f32 0.0, %v2326
    %v2328 = vpop.f32.mrb[0].mxu0
    %2329 = vdwg.mxu0
    %v2330 = vpack.c.bf16 %v2327, %v2324
    %s2331 = scalar_lea.vmem %s16, 64
    %v2332 = vld [vmem:[%s2331] sm:$0xf]
    %v2333 = vld [vmem:[%s2331 + $0x4] sm:$0xf]
    %v2334 = vld [vmem:[%s2331 + $0x8] sm:$0xf]
    %v2335 = vld [vmem:[%s2331 + $0xc] sm:$0xf]
    %v2336 = vld [vmem:[%s2331 + $0x10] sm:$0xf]
    %v2337 = vld [vmem:[%s2331 + $0x14] sm:$0xf]
    %v2338 = vld [vmem:[%s2331 + $0x18] sm:$0xf]
    %v2339 = vld [vmem:[%s2331 + $0x1c] sm:$0xf]
    %v2348 = vunpack.c.l.b16 %v2332
    %v2349 = vunpack.c.l.b16 %v2333
    %v2350 = vunpack.c.l.b16 %v2334
    %v2351 = vunpack.c.l.b16 %v2335
    %v2352 = vunpack.c.l.b16 %v2336
    %v2353 = vunpack.c.l.b16 %v2337
    %v2354 = vunpack.c.l.b16 %v2338
    %v2355 = vunpack.c.l.b16 %v2339
    %v2356 = vpack.c.b16 %v2349, %v2348
    %v2357 = vpack.c.b16 %v2351, %v2350
    %v2358 = vpack.c.b16 %v2353, %v2352
    %v2359 = vpack.c.b16 %v2355, %v2354
    %v2365 = vsel %vm296, %v2330, 0
    %2367 = vmatprep.subr.bf16.mxu0 0
    %2368 = vmatpush1.bf16.msra.mxu0 %v2356
    %2369 = vmatprep.subr.bf16.mxu0 0
    %2370 = vmatpush1.bf16.msra.mxu0 %v2357
    %2371 = vmatprep.subr.bf16.mxu0 0
    %2372 = vmatpush1.bf16.msra.mxu0 %v2358
    %2373 = vmatprep.subr.bf16.mxu0 0
    %2374 = vmatpush1.bf16.msra.mxu0 %v2359
    %2375 = vmatprep.subr.bf16.mxu0 0
    %2376 = vmatpush1.bf16.msra.mxu0 0
    %2377 = vmatprep.subr.bf16.mxu0 0
    %2378 = vmatpush1.bf16.msra.mxu0 0
    %2379 = vmatprep.subr.bf16.mxu0 0
    %2380 = vmatpush1.bf16.msra.mxu0 0
    %2381 = vmatprep.subr.bf16.mxu0 0
    %2382 = vmatpush1.bf16.msra.mxu0 0
    %2383 = vmatprep.subr.bf16.mxu0 0
    %2384 = vmatpush1.bf16.msra.mxu0 0
    %2385 = vmatprep.subr.bf16.mxu0 0
    %2386 = vmatpush1.bf16.msra.mxu0 0
    %2387 = vmatprep.subr.bf16.mxu0 0
    %2388 = vmatpush1.bf16.msra.mxu0 0
    %2389 = vmatprep.subr.bf16.mxu0 0
    %2390 = vmatpush1.bf16.msra.mxu0 0
    %2391 = vmatprep.subr.bf16.mxu0 0
    %2392 = vmatpush1.bf16.msra.mxu0 0
    %2393 = vmatprep.subr.bf16.mxu0 0
    %2394 = vmatpush1.bf16.msra.mxu0 0
    %2395 = vmatprep.subr.bf16.mxu0 0
    %2396 = vmatpush1.bf16.msra.mxu0 0
    %2397 = vmatprep.subr.bf16.mxu0 0
    %2398 = vmatpush1.bf16.msra.mxu0 0
    %2399 = vmatprep.mubr.bf16.mxu0 0
    %2400 = vmatmul.mubr.bf16.gmra.mrb[0].mxu0 %v2365
    %v2401 = vpop.f32.mrb[0].mxu0
    %v2402 = vadd.f32 0.0, %v2401
    %v2403 = vpop.f32.mrb[0].mxu0
    %v2404 = vpop.f32.mrb[0].mxu0
    %v2405 = vadd.f32 0.0, %v2404
    %v2406 = vpop.f32.mrb[0].mxu0
    %2407 = vdwg.mxu0
    %v2408 = vadd.f32 %v2272, %v2402
    %v2409 = vadd.f32 %v2275, %v2405
    %v2410 = vld [vmem:[#allocation9] sm:$0x1]
    %v2412 = vlaneseq
    %v2413 = vshrl.u32 %v2412, 7
    %v2414 = vsub.s32 0, %v2413
    %v2415 = vrot.slane %v2410, %v2414
    %v2417 = vadd.f32 %v2408, %v2415
    %v2418 = vadd.f32 %v2409, %v2415
    %v2419 = vmax.f32 %v2417, 0.0
    %v2420 = vmax.f32 %v2418, 0.0
    %v2421 = vpack.c.bf16 %v2420, %v2419
    %v2422 = vld [vmem:[%s18] sm:$0xf]
    %v2423 = vld [vmem:[%s18 + $0x4] sm:$0xf]
    %v2424 = vld [vmem:[%s18 + $0x8] sm:$0xf]
    %v2425 = vld [vmem:[%s18 + $0xc] sm:$0xf]
    %v2430 = vunpack.c.l.b16 %v2422
    %v2431 = vunpack.c.l.b16 %v2423
    %v2432 = vunpack.c.l.b16 %v2424
    %v2433 = vunpack.c.l.b16 %v2425
    %v2434 = vpack.c.b16 %v2431, %v2430
    %v2435 = vpack.c.b16 %v2433, %v2432
    %v2437 = vsel %vm554, %v2434, 0
    %v2440 = vsel %vm554, %v2435, 0
    %2442 = vmatprep.subr.bf16.mxu0 0
    %2443 = vmatpush1.bf16.msra.mxu0 %v2421
    %2444 = vmatprep.subr.bf16.mxu0 0
    %2445 = vmatpush1.bf16.msra.mxu0 0
    %2446 = vmatprep.subr.bf16.mxu0 0
    %2447 = vmatpush1.bf16.msra.mxu0 0
    %2448 = vmatprep.subr.bf16.mxu0 0
    %2449 = vmatpush1.bf16.msra.mxu0 0
    %2450 = vmatprep.subr.bf16.mxu0 0
    %2451 = vmatpush1.bf16.msra.mxu0 0
    %2452 = vmatprep.subr.bf16.mxu0 0
    %2453 = vmatpush1.bf16.msra.mxu0 0
    %2454 = vmatprep.subr.bf16.mxu0 0
    %2455 = vmatpush1.bf16.msra.mxu0 0
    %2456 = vmatprep.subr.bf16.mxu0 0
    %2457 = vmatpush1.bf16.msra.mxu0 0
    %2458 = vmatprep.subr.bf16.mxu0 0
    %2459 = vmatpush1.bf16.msra.mxu0 0
    %2460 = vmatprep.subr.bf16.mxu0 0
    %2461 = vmatpush1.bf16.msra.mxu0 0
    %2462 = vmatprep.subr.bf16.mxu0 0
    %2463 = vmatpush1.bf16.msra.mxu0 0
    %2464 = vmatprep.subr.bf16.mxu0 0
    %2465 = vmatpush1.bf16.msra.mxu0 0
    %2466 = vmatprep.subr.bf16.mxu0 0
    %2467 = vmatpush1.bf16.msra.mxu0 0
    %2468 = vmatprep.subr.bf16.mxu0 0
    %2469 = vmatpush1.bf16.msra.mxu0 0
    %2470 = vmatprep.subr.bf16.mxu0 0
    %2471 = vmatpush1.bf16.msra.mxu0 0
    %2472 = vmatprep.subr.bf16.mxu0 0
    %2473 = vmatpush1.bf16.msra.mxu0 0
    %2474 = vmatprep.mubr.bf16.mxu0 0
    %2475 = vmatmul.mubr.bf16.gmra.mrb[0].mxu0 %v2437
    %v2476 = vpop.f32.mrb[0].mxu0
    %v2477 = vadd.f32 0.0, %v2476
    %v2478 = vpop.f32.mrb[0].mxu0
    %v2479 = vpop.f32.mrb[0].mxu0
    %v2480 = vadd.f32 0.0, %v2479
    %v2481 = vpop.f32.mrb[0].mxu0
    %2482 = vmatprep.mubr.bf16.mxu0 0
    %2483 = vmatmul.mubr.bf16.gmra.mrb[0].mxu0 %v2440
    %v2484 = vpop.f32.mrb[0].mxu0
    %v2485 = vadd.f32 0.0, %v2484
    %v2486 = vpop.f32.mrb[0].mxu0
    %v2487 = vpop.f32.mrb[0].mxu0
    %v2488 = vadd.f32 0.0, %v2487
    %v2489 = vpop.f32.mrb[0].mxu0
    %2490 = vdwg.mxu0
    %v2491 = vpack.c.bf16 %v2480, %v2477
    %v2492 = vpack.c.bf16 %v2488, %v2485
    %v2493 = vld [vmem:[%s19] sm:$0xf]
    %v2494 = vld [vmem:[%s19 + $0x4] sm:$0xf]
    %v2495 = vld [vmem:[%s19 + $0x8] sm:$0xf]
    %v2496 = vld [vmem:[%s19 + $0xc] sm:$0xf]
    %v2497 = vld [vmem:[%s19 + $0x10] sm:$0xf]
    %v2498 = vld [vmem:[%s19 + $0x14] sm:$0xf]
    %v2499 = vld [vmem:[%s19 + $0x18] sm:$0xf]
    %v2500 = vld [vmem:[%s19 + $0x1c] sm:$0xf]
    %s2501 = scalar_lea.vmem %s18, 16
    %v2502 = vld [vmem:[%s2501] sm:$0xf]
    %v2503 = vld [vmem:[%s2501 + $0x4] sm:$0xf]
    %v2504 = vld [vmem:[%s2501 + $0x8] sm:$0xf]
    %v2505 = vld [vmem:[%s2501 + $0xc] sm:$0xf]
    %v2510 = vunpack.c.l.b16 %v2502
    %v2511 = vunpack.c.l.b16 %v2503
    %v2512 = vunpack.c.l.b16 %v2504
    %v2513 = vunpack.c.l.b16 %v2505
    %v2514 = vpack.c.b16 %v2511, %v2510
    %v2515 = vpack.c.b16 %v2513, %v2512
    %v2517 = vsel %vm554, %v2514, 0
    %v2520 = vsel %vm554, %v2515, 0
    %2522 = vmatprep.subr.bf16.mxu0 0
    %2523 = vmatpush1.bf16.msra.mxu0 %v2421
    %2524 = vmatprep.subr.bf16.mxu0 0
    %2525 = vmatpush1.bf16.msra.mxu0 0
    %2526 = vmatprep.subr.bf16.mxu0 0
    %2527 = vmatpush1.bf16.msra.mxu0 0
    %2528 = vmatprep.subr.bf16.mxu0 0
    %2529 = vmatpush1.bf16.msra.mxu0 0
    %2530 = vmatprep.subr.bf16.mxu0 0
    %2531 = vmatpush1.bf16.msra.mxu0 0
    %2532 = vmatprep.subr.bf16.mxu0 0
    %2533 = vmatpush1.bf16.msra.mxu0 0
    %2534 = vmatprep.subr.bf16.mxu0 0
    %2535 = vmatpush1.bf16.msra.mxu0 0
    %2536 = vmatprep.subr.bf16.mxu0 0
    %2537 = vmatpush1.bf16.msra.mxu0 0
    %2538 = vmatprep.subr.bf16.mxu0 0
    %2539 = vmatpush1.bf16.msra.mxu0 0
    %2540 = vmatprep.subr.bf16.mxu0 0
    %2541 = vmatpush1.bf16.msra.mxu0 0
    %2542 = vmatprep.subr.bf16.mxu0 0
    %2543 = vmatpush1.bf16.msra.mxu0 0
    %2544 = vmatprep.subr.bf16.mxu0 0
    %2545 = vmatpush1.bf16.msra.mxu0 0
    %2546 = vmatprep.subr.bf16.mxu0 0
    %2547 = vmatpush1.bf16.msra.mxu0 0
    %2548 = vmatprep.subr.bf16.mxu0 0
    %2549 = vmatpush1.bf16.msra.mxu0 0
    %2550 = vmatprep.subr.bf16.mxu0 0
    %2551 = vmatpush1.bf16.msra.mxu0 0
    %2552 = vmatprep.subr.bf16.mxu0 0
    %2553 = vmatpush1.bf16.msra.mxu0 0
    %2554 = vmatprep.mubr.bf16.mxu0 0
    %2555 = vmatmul.mubr.bf16.gmra.mrb[0].mxu0 %v2517
    %v2556 = vpop.f32.mrb[0].mxu0
    %v2557 = vadd.f32 0.0, %v2556
    %v2558 = vpop.f32.mrb[0].mxu0
    %v2559 = vpop.f32.mrb[0].mxu0
    %v2560 = vadd.f32 0.0, %v2559
    %v2561 = vpop.f32.mrb[0].mxu0
    %2562 = vmatprep.mubr.bf16.mxu0 0
    %2563 = vmatmul.mubr.bf16.gmra.mrb[0].mxu0 %v2520
    %v2564 = vpop.f32.mrb[0].mxu0
    %v2565 = vadd.f32 0.0, %v2564
    %v2566 = vpop.f32.mrb[0].mxu0
    %v2567 = vpop.f32.mrb[0].mxu0
    %v2568 = vadd.f32 0.0, %v2567
    %v2569 = vpop.f32.mrb[0].mxu0
    %2570 = vdwg.mxu0
    %v2571 = vpack.c.bf16 %v2560, %v2557
    %v2572 = vpack.c.bf16 %v2568, %v2565
    %s2573 = scalar_lea.vmem %s19, 32
    %v2574 = vld [vmem:[%s2573] sm:$0xf]
    %v2575 = vld [vmem:[%s2573 + $0x4] sm:$0xf]
    %v2576 = vld [vmem:[%s2573 + $0x8] sm:$0xf]
    %v2577 = vld [vmem:[%s2573 + $0xc] sm:$0xf]
    %v2578 = vld [vmem:[%s2573 + $0x10] sm:$0xf]
    %v2579 = vld [vmem:[%s2573 + $0x14] sm:$0xf]
    %v2580 = vld [vmem:[%s2573 + $0x18] sm:$0xf]
    %v2581 = vld [vmem:[%s2573 + $0x1c] sm:$0xf]
    %v2590 = vunpack.c.l.b16 %v2574
    %v2591 = vunpack.c.l.b16 %v2575
    %v2592 = vunpack.c.l.b16 %v2576
    %v2593 = vunpack.c.l.b16 %v2577
    %v2594 = vunpack.c.l.b16 %v2578
    %v2595 = vunpack.c.l.b16 %v2579
    %v2596 = vunpack.c.l.b16 %v2580
    %v2597 = vunpack.c.l.b16 %v2581
    %v2598 = vpack.c.b16 %v2591, %v2590
    %v2599 = vpack.c.b16 %v2593, %v2592
    %v2600 = vpack.c.b16 %v2595, %v2594
    %v2601 = vpack.c.b16 %v2597, %v2596
    %v2607 = vsel %vm296, %v2571, 0
    %v2610 = vsel %vm296, %v2572, 0
    %2612 = vmatprep.subr.bf16.mxu0 0
    %2613 = vmatpush1.bf16.msra.mxu0 %v2598
    %2614 = vmatprep.subr.bf16.mxu0 0
    %2615 = vmatpush1.bf16.msra.mxu0 %v2599
    %2616 = vmatprep.subr.bf16.mxu0 0
    %2617 = vmatpush1.bf16.msra.mxu0 %v2600
    %2618 = vmatprep.subr.bf16.mxu0 0
    %2619 = vmatpush1.bf16.msra.mxu0 %v2601
    %2620 = vmatprep.subr.bf16.mxu0 0
    %2621 = vmatpush1.bf16.msra.mxu0 0
    %2622 = vmatprep.subr.bf16.mxu0 0
    %2623 = vmatpush1.bf16.msra.mxu0 0
    %2624 = vmatprep.subr.bf16.mxu0 0
    %2625 = vmatpush1.bf16.msra.mxu0 0
    %2626 = vmatprep.subr.bf16.mxu0 0
    %2627 = vmatpush1.bf16.msra.mxu0 0
    %2628 = vmatprep.subr.bf16.mxu0 0
    %2629 = vmatpush1.bf16.msra.mxu0 0
    %2630 = vmatprep.subr.bf16.mxu0 0
    %2631 = vmatpush1.bf16.msra.mxu0 0
    %2632 = vmatprep.subr.bf16.mxu0 0
    %2633 = vmatpush1.bf16.msra.mxu0 0
    %2634 = vmatprep.subr.bf16.mxu0 0
    %2635 = vmatpush1.bf16.msra.mxu0 0
    %2636 = vmatprep.subr.bf16.mxu0 0
    %2637 = vmatpush1.bf16.msra.mxu0 0
    %2638 = vmatprep.subr.bf16.mxu0 0
    %2639 = vmatpush1.bf16.msra.mxu0 0
    %2640 = vmatprep.subr.bf16.mxu0 0
    %2641 = vmatpush1.bf16.msra.mxu0 0
    %2642 = vmatprep.subr.bf16.mxu0 0
    %2643 = vmatpush1.bf16.msra.mxu0 0
    %2644 = vmatprep.mubr.bf16.mxu0 0
    %2645 = vmatmul.mubr.bf16.gmra.mrb[0].mxu0 %v2607
    %v2646 = vpop.f32.mrb[0].mxu0
    %v2647 = vadd.f32 0.0, %v2646
    %v2648 = vpop.f32.mrb[0].mxu0
    %v2649 = vpop.f32.mrb[0].mxu0
    %v2650 = vadd.f32 0.0, %v2649
    %v2651 = vpop.f32.mrb[0].mxu0
    %2652 = vmatprep.mubr.bf16.mxu0 0
    %2653 = vmatmul.mubr.bf16.gmra.mrb[0].mxu0 %v2610
    %v2654 = vpop.f32.mrb[0].mxu0
    %v2655 = vadd.f32 0.0, %v2654
    %v2656 = vpop.f32.mrb[0].mxu0
    %v2657 = vpop.f32.mrb[0].mxu0
    %v2658 = vadd.f32 0.0, %v2657
    %v2659 = vpop.f32.mrb[0].mxu0
    %2660 = vdwg.mxu0
    %v2669 = vunpack.c.l.b16 %v2493
    %v2670 = vunpack.c.l.b16 %v2494
    %v2671 = vunpack.c.l.b16 %v2495
    %v2672 = vunpack.c.l.b16 %v2496
    %v2673 = vunpack.c.l.b16 %v2497
    %v2674 = vunpack.c.l.b16 %v2498
    %v2675 = vunpack.c.l.b16 %v2499
    %v2676 = vunpack.c.l.b16 %v2500
    %v2677 = vpack.c.b16 %v2670, %v2669
    %v2678 = vpack.c.b16 %v2672, %v2671
    %v2679 = vpack.c.b16 %v2674, %v2673
    %v2680 = vpack.c.b16 %v2676, %v2675
    %v2686 = vsel %vm296, %v2491, 0
    %v2689 = vsel %vm296, %v2492, 0
    %2691 = vmatprep.subr.bf16.mxu0 0
    %2692 = vmatpush1.bf16.msra.mxu0 %v2677
    %2693 = vmatprep.subr.bf16.mxu0 0
    %2694 = vmatpush1.bf16.msra.mxu0 %v2678
    %2695 = vmatprep.subr.bf16.mxu0 0
    %2696 = vmatpush1.bf16.msra.mxu0 %v2679
    %2697 = vmatprep.subr.bf16.mxu0 0
    %2698 = vmatpush1.bf16.msra.mxu0 %v2680
    %2699 = vmatprep.subr.bf16.mxu0 0
    %2700 = vmatpush1.bf16.msra.mxu0 0
    %2701 = vmatprep.subr.bf16.mxu0 0
    %2702 = vmatpush1.bf16.msra.mxu0 0
    %2703 = vmatprep.subr.bf16.mxu0 0
    %2704 = vmatpush1.bf16.msra.mxu0 0
    %2705 = vmatprep.subr.bf16.mxu0 0
    %2706 = vmatpush1.bf16.msra.mxu0 0
    %2707 = vmatprep.subr.bf16.mxu0 0
    %2708 = vmatpush1.bf16.msra.mxu0 0
    %2709 = vmatprep.subr.bf16.mxu0 0
    %2710 = vmatpush1.bf16.msra.mxu0 0
    %2711 = vmatprep.subr.bf16.mxu0 0
    %2712 = vmatpush1.bf16.msra.mxu0 0
    %2713 = vmatprep.subr.bf16.mxu0 0
    %2714 = vmatpush1.bf16.msra.mxu0 0
    %2715 = vmatprep.subr.bf16.mxu0 0
    %2716 = vmatpush1.bf16.msra.mxu0 0
    %2717 = vmatprep.subr.bf16.mxu0 0
    %2718 = vmatpush1.bf16.msra.mxu0 0
    %2719 = vmatprep.subr.bf16.mxu0 0
    %2720 = vmatpush1.bf16.msra.mxu0 0
    %2721 = vmatprep.subr.bf16.mxu0 0
    %2722 = vmatpush1.bf16.msra.mxu0 0
    %2723 = vmatprep.mubr.bf16.mxu0 0
    %2724 = vmatmul.mubr.bf16.gmra.mrb[0].mxu0 %v2686
    %v2725 = vpop.f32.mrb[0].mxu0
    %v2726 = vadd.f32 %v2647, %v2725
    %v2727 = vpop.f32.mrb[0].mxu0
    %v2728 = vpop.f32.mrb[0].mxu0
    %v2729 = vadd.f32 %v2650, %v2728
    %v2730 = vpop.f32.mrb[0].mxu0
    %2731 = vmatprep.mubr.bf16.mxu0 0
    %2732 = vmatmul.mubr.bf16.gmra.mrb[0].mxu0 %v2689
    %v2733 = vpop.f32.mrb[0].mxu0
    %v2734 = vadd.f32 %v2655, %v2733
    %v2735 = vpop.f32.mrb[0].mxu0
    %v2736 = vpop.f32.mrb[0].mxu0
    %v2737 = vadd.f32 %v2658, %v2736
    %v2738 = vpop.f32.mrb[0].mxu0
    %2739 = vdwg.mxu0
    %s2740 = scalar_lea.vmem %s18, 32
    %v2741 = vld [vmem:[%s2740] sm:$0xf]
    %v2742 = vld [vmem:[%s2740 + $0x4] sm:$0xf]
    %v2743 = vld [vmem:[%s2740 + $0x8] sm:$0xf]
    %v2744 = vld [vmem:[%s2740 + $0xc] sm:$0xf]
    %v2749 = vunpack.c.l.b16 %v2741
    %v2750 = vunpack.c.l.b16 %v2742
    %v2751 = vunpack.c.l.b16 %v2743
    %v2752 = vunpack.c.l.b16 %v2744
    %v2753 = vpack.c.b16 %v2750, %v2749
    %v2754 = vpack.c.b16 %v2752, %v2751
    %v2756 = vsel %vm554, %v2753, 0
    %v2759 = vsel %vm554, %v2754, 0
    %2761 = vmatprep.subr.bf16.mxu0 0
    %2762 = vmatpush1.bf16.msra.mxu0 %v2421
    %2763 = vmatprep.subr.bf16.mxu0 0
    %2764 = vmatpush1.bf16.msra.mxu0 0
    %2765 = vmatprep.subr.bf16.mxu0 0
    %2766 = vmatpush1.bf16.msra.mxu0 0
    %2767 = vmatprep.subr.bf16.mxu0 0
    %2768 = vmatpush1.bf16.msra.mxu0 0
    %2769 = vmatprep.subr.bf16.mxu0 0
    %2770 = vmatpush1.bf16.msra.mxu0 0
    %2771 = vmatprep.subr.bf16.mxu0 0
    %2772 = vmatpush1.bf16.msra.mxu0 0
    %2773 = vmatprep.subr.bf16.mxu0 0
    %2774 = vmatpush1.bf16.msra.mxu0 0
    %2775 = vmatprep.subr.bf16.mxu0 0
    %2776 = vmatpush1.bf16.msra.mxu0 0
    %2777 = vmatprep.subr.bf16.mxu0 0
    %2778 = vmatpush1.bf16.msra.mxu0 0
    %2779 = vmatprep.subr.bf16.mxu0 0
    %2780 = vmatpush1.bf16.msra.mxu0 0
    %2781 = vmatprep.subr.bf16.mxu0 0
    %2782 = vmatpush1.bf16.msra.mxu0 0
    %2783 = vmatprep.subr.bf16.mxu0 0
    %2784 = vmatpush1.bf16.msra.mxu0 0
    %2785 = vmatprep.subr.bf16.mxu0 0
    %2786 = vmatpush1.bf16.msra.mxu0 0
    %2787 = vmatprep.subr.bf16.mxu0 0
    %2788 = vmatpush1.bf16.msra.mxu0 0
    %2789 = vmatprep.subr.bf16.mxu0 0
    %2790 = vmatpush1.bf16.msra.mxu0 0
    %2791 = vmatprep.subr.bf16.mxu0 0
    %2792 = vmatpush1.bf16.msra.mxu0 0
    %2793 = vmatprep.mubr.bf16.mxu0 0
    %2794 = vmatmul.mubr.bf16.gmra.mrb[0].mxu0 %v2756
    %v2795 = vpop.f32.mrb[0].mxu0
    %v2796 = vadd.f32 0.0, %v2795
    %v2797 = vpop.f32.mrb[0].mxu0
    %v2798 = vpop.f32.mrb[0].mxu0
    %v2799 = vadd.f32 0.0, %v2798
    %v2800 = vpop.f32.mrb[0].mxu0
    %2801 = vmatprep.mubr.bf16.mxu0 0
    %2802 = vmatmul.mubr.bf16.gmra.mrb[0].mxu0 %v2759
    %v2803 = vpop.f32.mrb[0].mxu0
    %v2804 = vadd.f32 0.0, %v2803
    %v2805 = vpop.f32.mrb[0].mxu0
    %v2806 = vpop.f32.mrb[0].mxu0
    %v2807 = vadd.f32 0.0, %v2806
    %v2808 = vpop.f32.mrb[0].mxu0
    %2809 = vdwg.mxu0
    %v2810 = vpack.c.bf16 %v2799, %v2796
    %v2811 = vpack.c.bf16 %v2807, %v2804
    %s2812 = scalar_lea.vmem %s19, 64
    %v2813 = vld [vmem:[%s2812] sm:$0xf]
    %v2814 = vld [vmem:[%s2812 + $0x4] sm:$0xf]
    %v2815 = vld [vmem:[%s2812 + $0x8] sm:$0xf]
    %v2816 = vld [vmem:[%s2812 + $0xc] sm:$0xf]
    %v2817 = vld [vmem:[%s2812 + $0x10] sm:$0xf]
    %v2818 = vld [vmem:[%s2812 + $0x14] sm:$0xf]
    %v2819 = vld [vmem:[%s2812 + $0x18] sm:$0xf]
    %v2820 = vld [vmem:[%s2812 + $0x1c] sm:$0xf]
    %v2829 = vunpack.c.l.b16 %v2813
    %v2830 = vunpack.c.l.b16 %v2814
    %v2831 = vunpack.c.l.b16 %v2815
    %v2832 = vunpack.c.l.b16 %v2816
    %v2833 = vunpack.c.l.b16 %v2817
    %v2834 = vunpack.c.l.b16 %v2818
    %v2835 = vunpack.c.l.b16 %v2819
    %v2836 = vunpack.c.l.b16 %v2820
    %v2837 = vpack.c.b16 %v2830, %v2829
    %v2838 = vpack.c.b16 %v2832, %v2831
    %v2839 = vpack.c.b16 %v2834, %v2833
    %v2840 = vpack.c.b16 %v2836, %v2835
    %v2846 = vsel %vm296, %v2810, 0
    %v2849 = vsel %vm296, %v2811, 0
    %2851 = vmatprep.subr.bf16.mxu0 0
    %2852 = vmatpush1.bf16.msra.mxu0 %v2837
    %2853 = vmatprep.subr.bf16.mxu0 0
    %2854 = vmatpush1.bf16.msra.mxu0 %v2838
    %2855 = vmatprep.subr.bf16.mxu0 0
    %2856 = vmatpush1.bf16.msra.mxu0 %v2839
    %2857 = vmatprep.subr.bf16.mxu0 0
    %2858 = vmatpush1.bf16.msra.mxu0 %v2840
    %2859 = vmatprep.subr.bf16.mxu0 0
    %2860 = vmatpush1.bf16.msra.mxu0 0
    %2861 = vmatprep.subr.bf16.mxu0 0
    %2862 = vmatpush1.bf16.msra.mxu0 0
    %2863 = vmatprep.subr.bf16.mxu0 0
    %2864 = vmatpush1.bf16.msra.mxu0 0
    %2865 = vmatprep.subr.bf16.mxu0 0
    %2866 = vmatpush1.bf16.msra.mxu0 0
    %2867 = vmatprep.subr.bf16.mxu0 0
    %2868 = vmatpush1.bf16.msra.mxu0 0
    %2869 = vmatprep.subr.bf16.mxu0 0
    %2870 = vmatpush1.bf16.msra.mxu0 0
    %2871 = vmatprep.subr.bf16.mxu0 0
    %2872 = vmatpush1.bf16.msra.mxu0 0
    %2873 = vmatprep.subr.bf16.mxu0 0
    %2874 = vmatpush1.bf16.msra.mxu0 0
    %2875 = vmatprep.subr.bf16.mxu0 0
    %2876 = vmatpush1.bf16.msra.mxu0 0
    %2877 = vmatprep.subr.bf16.mxu0 0
    %2878 = vmatpush1.bf16.msra.mxu0 0
    %2879 = vmatprep.subr.bf16.mxu0 0
    %2880 = vmatpush1.bf16.msra.mxu0 0
    %2881 = vmatprep.subr.bf16.mxu0 0
    %2882 = vmatpush1.bf16.msra.mxu0 0
    %2883 = vmatprep.mubr.bf16.mxu0 0
    %2884 = vmatmul.mubr.bf16.gmra.mrb[0].mxu0 %v2846
    %v2885 = vpop.f32.mrb[0].mxu0
    %v2886 = vadd.f32 0.0, %v2885
    %v2887 = vpop.f32.mrb[0].mxu0
    %v2888 = vpop.f32.mrb[0].mxu0
    %v2889 = vadd.f32 0.0, %v2888
    %v2890 = vpop.f32.mrb[0].mxu0
    %2891 = vmatprep.mubr.bf16.mxu0 0
    %2892 = vmatmul.mubr.bf16.gmra.mrb[0].mxu0 %v2849
    %v2893 = vpop.f32.mrb[0].mxu0
    %v2894 = vadd.f32 0.0, %v2893
    %v2895 = vpop.f32.mrb[0].mxu0
    %v2896 = vpop.f32.mrb[0].mxu0
    %v2897 = vadd.f32 0.0, %v2896
    %v2898 = vpop.f32.mrb[0].mxu0
    %2899 = vdwg.mxu0
    %v2900 = vadd.f32 %v2726, %v2886
    %v2901 = vadd.f32 %v2729, %v2889
    %v2902 = vadd.f32 %v2734, %v2894
    %v2903 = vadd.f32 %v2737, %v2897
    %v2904 = vld [vmem:[#allocation10] sm:$0x1]
    %v2906 = vlaneseq
    %v2907 = vshrl.u32 %v2906, 7
    %v2908 = vsub.s32 0, %v2907
    %v2909 = vrot.slane %v2904, %v2908
    %v2911 = vadd.f32 %v2900, %v2909
    %v2912 = vadd.f32 %v2901, %v2909
    %v2913 = vadd.f32 %v2902, %v2909
    %v2914 = vadd.f32 %v2903, %v2909
    %v2915 = vxor.u32 %v2911, 2147483648
    %v2916 = vxor.u32 %v2912, 2147483648
    %v2917 = vxor.u32 %v2913, 2147483648
    %v2918 = vxor.u32 %v2914, 2147483648
    %v2919 = vmul.f32 %v2915, 1.442695
    %v2920 = vpow.pop %v2919
    %v2921 = vmul.f32 %v2916, 1.442695
    %v2922 = vpow.pop %v2921
    %v2923 = vmul.f32 %v2917, 1.442695
    %v2924 = vpow.pop %v2923
    %v2925 = vmul.f32 %v2918, 1.442695
    %v2926 = vpow.pop %v2925
    %v2927 = vadd.f32 %v2920, 1.0
    %v2928 = vadd.f32 %v2922, 1.0
    %v2929 = vadd.f32 %v2924, 1.0
    %v2930 = vadd.f32 %v2926, 1.0
    %v2931 = vrcp.pop %v2927
    %v2932 = vmul.f32 1.0, %v2931
    %v2933 = vrcp.pop %v2928
    %v2934 = vmul.f32 1.0, %v2933
    %v2935 = vrcp.pop %v2929
    %v2936 = vmul.f32 1.0, %v2935
    %v2937 = vrcp.pop %v2930
    %v2938 = vmul.f32 1.0, %v2937
    %2939 = vst.msk [vmem:[%s21] sm:$0xff] %vm296, %v2932
    %2940 = vst.msk [vmem:[%s21 + $0x8] sm:$0xff] %vm296, %v2934
    %2941 = vst.msk [vmem:[%s21 + $0x10] sm:$0xff] %vm296, %v2936
    %2942 = vst.msk [vmem:[%s21 + $0x18] sm:$0xff] %vm296, %v2938
    // Predicated region
    $region110: #{vae_forward.1} parent=1 // pred_check
      _
    $region111: #{vae_forward.1} parent=1 // pred_check_branch
      %2944 = sbr.rel (0) target = $region113
    $region112: #{vae_forward.1} parent=1 // pred_region
      _
    $region113: #{vae_forward.1} parent=1 // pred_fallthru
      _
    // Predicated region
    $region114: #{vae_forward.1} parent=1 // pred_check
      _
    $region115: #{vae_forward.1} parent=1 // pred_check_branch
      %2946 = sbr.rel (0) target = $region117
    $region116: #{vae_forward.1} parent=1 // pred_region
      _
    $region117: #{vae_forward.1} parent=1 // pred_fallthru
      _
    // Predicated region
    $region118: #{vae_forward.1} parent=1 // pred_check
      _
    $region119: #{vae_forward.1} parent=1 // pred_check_branch
      %2948 = sbr.rel (0) target = $region121
    $region120: #{vae_forward.1} parent=1 // pred_region
      _
    $region121: #{vae_forward.1} parent=1 // pred_fallthru
      _
    // Predicated region
    $region122: #{vae_forward.1} parent=1 // pred_check
      _
    $region123: #{vae_forward.1} parent=1 // pred_check_branch
      %2950 = sbr.rel (0) target = $region125
    $region124: #{vae_forward.1} parent=1 // pred_region
      _
    $region125: #{vae_forward.1} parent=1 // pred_fallthru
      _
    %2951 = vsyncpa [#allocation3], 1
    %2952 = vsyncpa [#allocation5], 1
    %2953 = vsyncpa [#allocation8], 1
    %2954 = vsyncpa [#allocation11], 1

</llo_original>
